<compile_context>
chip_gen: v7x
topology: tpu7x:2x2x1
jax: 0.10.0
libtpu: 0.0.40
codegen_flags: <defaults>
</compile_context>

<pallas_src>
import functools

import jax
import jax.numpy as jnp
from jax.experimental import pallas as pl
from jax.experimental.pallas import tpu as pltpu


# ----------------------------------------------------------------------------
# One-time parameter preprocessing: fold (upsample +) conv into a dense matrix
# ----------------------------------------------------------------------------
def _linearize_conv(w_oihw, b, h_in, w_in, *, stride, pad, upsample,
                    in_order, out_order):
    """Build M, bias so x_flat @ M + bias == flatten(conv(upsample(x)))."""
    cout, cin, _, _ = w_oihw.shape
    k_in = cin * h_in * w_in
    eye = jnp.eye(k_in, dtype=jnp.float32)
    if in_order == "nchw":
        basis = eye.reshape(k_in, cin, h_in, w_in)
    else:  # "nhwc"
        basis = eye.reshape(k_in, h_in, w_in, cin).transpose(0, 3, 1, 2)
    if upsample > 1:
        basis = jnp.repeat(jnp.repeat(basis, upsample, axis=2), upsample, axis=3)
    y = jax.lax.conv_general_dilated(
        basis, w_oihw, window_strides=(stride, stride),
        padding=[(pad, pad), (pad, pad)],
        dimension_numbers=("NCHW", "OIHW", "NCHW"))
    _, _, h_out, w_out = y.shape
    if out_order == "nhwc":
        m = y.transpose(0, 2, 3, 1).reshape(k_in, h_out * w_out * cout)
        bias = jnp.tile(b, h_out * w_out)
    else:  # "nchw"
        m = y.reshape(k_in, cout * h_out * w_out)
        bias = jnp.repeat(b, h_out * w_out)
    return m, bias, h_out


# ----------------------------------------------------------------------------
# Deterministic parameter init + packing
# ----------------------------------------------------------------------------
class KeyGen:
    def __init__(self, key):
        self.key = key

    def __call__(self):
        self.key, sub = jax.random.split(self.key)
        return sub


def _uniform(kg, shape, fan_in):
    lim = 1.0 / (float(fan_in) ** 0.5)
    return jax.random.uniform(kg(), shape, jnp.float32, -lim, lim)


def build_model(key, *, image_ch=3, image_hw=16, image_feat_dim=16, joint_dim=8,
                rnn_hidden_dims=(32, 32, 16), decoder_input_dim=32,
                taus=(2.0, 5.0, 70.0)):
    kg = KeyGen(key)
    Hio, Hf, Hs = rnn_hidden_dims
    H = Hio + Hf + Hs
    P = 128

    def dense(fi, fo):
        return _uniform(kg, (fi, fo), fi), _uniform(kg, (fo,), fi)

    def conv(cin, cout):
        return (_uniform(kg, (cout, cin, 3, 3), cin * 9),
                _uniform(kg, (cout,), cin * 9))

    raw = {}

    # ---- image encoder: 3 strided 3x3 convs (ch -> 8 -> 16 -> 32) + FC ----
    enc_chs = [image_ch, 8, 16, 32]
    hw = image_hw
    enc_M, enc_b = [], []
    in_order = "nchw"
    for i in range(3):
        w, b = conv(enc_chs[i], enc_chs[i + 1])
        raw[f"e{i+1}_w"], raw[f"e{i+1}_b"] = w, b
        m, be, hw = _linearize_conv(w, b, hw, hw, stride=2, pad=1, upsample=1,
                                    in_order=in_order, out_order="nhwc")
        enc_M.append(m)
        enc_b.append(be)
        in_order = "nhwc"
    feat_in = enc_chs[-1] * hw * hw
    assert feat_in == P, "packing assumes the encoder FC input width is 128"
    We, bfe = dense(feat_in, image_feat_dim)
    raw["We"], raw["bfe"] = We, bfe

    # ---- MTRNN raw weights (io <- input,io,fast ; fast <- io,fast,slow ;
    #      slow <- fast,slow) ----
    rnn_in_dim = image_feat_dim + joint_dim
    Wxi, _ = dense(rnn_in_dim, Hio)
    Wii, _ = dense(Hio, Hio)
    Wif, _ = dense(Hio, Hf)
    Wfi, _ = dense(Hf, Hio)
    Wff, _ = dense(Hf, Hf)
    Wfs, _ = dense(Hf, Hs)
    Wsf, _ = dense(Hs, Hf)
    Wss, _ = dense(Hs, Hs)
    raw.update(Wxi=Wxi, Wii=Wii, Wif=Wif, Wfi=Wfi, Wff=Wff, Wfs=Wfs,
               Wsf=Wsf, Wss=Wss)

    # ---- joint decoder / fn_for_image_decoder ----
    Wj, bj = dense(Hio, joint_dim)
    raw["Wj"], raw["bj"] = Wj, bj
    Wfd, bfd = dense(Hio + joint_dim, decoder_input_dim)
    raw["Wfd"], raw["bfd"] = Wfd, bfd

    # ---- image decoder: FC -> (hw,hw,32) -> 3x (2x nearest up + 3x3 conv) ----
    Wd_fc, bd_fc = dense(decoder_input_dim, 32 * hw * hw)
    raw["Wd_fc"], raw["bd_fc"] = Wd_fc, bd_fc
    dec_chs = [32, 16, 8, image_ch]
    dhw = hw
    dec_M, dec_b = [], []
    for i in range(3):
        w, b = conv(dec_chs[i], dec_chs[i + 1])
        raw[f"d{i+1}_w"], raw[f"d{i+1}_b"] = w, b
        out_order = "nhwc" if i < 2 else "nchw"
        m, be, dhw = _linearize_conv(w, b, dhw, dhw, stride=1, pad=1, upsample=2,
                                     in_order="nhwc", out_order=out_order)
        dec_M.append(m)
        dec_b.append(be)

    E1, E2, E3 = (m.shape[1] for m in enc_M)        # 512, 256, 128
    D1N, D2N, PIX = (m.shape[1] for m in dec_M)      # 256, 512, 768
    D0 = 32 * hw * hw                                # 128
    assert D0 == P
    assert PIX == image_ch * image_hw * image_hw

    # ---- packed encoder / decoder conv slabs (bf16, lane-dense) ----
    w_enc = jnp.zeros((PIX, E1 + E2 + E3), jnp.float32)
    w_enc = w_enc.at[:, :E1].set(enc_M[0])
    w_enc = w_enc.at[:E1, E1:E1 + E2].set(enc_M[1])
    w_enc = w_enc.at[:E2, E1 + E2:].set(enc_M[2])

    w_dec = jnp.zeros((D2N, D1N + D2N + PIX), jnp.float32)
    w_dec = w_dec.at[:D0, :D1N].set(dec_M[0])
    w_dec = w_dec.at[:D1N, D1N:D1N + D2N].set(dec_M[1])
    w_dec = w_dec.at[:D2N, D1N + D2N:].set(dec_M[2])

    # ---- packed small-weight slab [1024, 128]:
    #      rows 0:128 We, 128:512 stacked MTRNN, 512:640 Wj, 640:896 Wfd,
    #      896:1024 decoder FC.  Inputs are 128-lane clean-padded vectors. ----
    ws = jnp.zeros((8 * P, P), jnp.float32)
    ws = ws.at[0:feat_in, 0:image_feat_dim].set(We)
    r = P                                   # MTRNN block base
    ws = ws.at[r:r + image_feat_dim, 0:Hio].set(Wxi[:image_feat_dim])
    ws = ws.at[r + P:r + P + joint_dim, 0:Hio].set(Wxi[image_feat_dim:])
    hb = r + 2 * P
    ws = ws.at[hb:hb + Hio, 0:Hio].set(Wii)
    ws = ws.at[hb:hb + Hio, Hio:Hio + Hf].set(Wif)
    ws = ws.at[hb + Hio:hb + Hio + Hf, 0:Hio].set(Wfi)
    ws = ws.at[hb + Hio:hb + Hio + Hf, Hio:Hio + Hf].set(Wff)
    ws = ws.at[hb + Hio:hb + Hio + Hf, Hio + Hf:H].set(Wfs)
    ws = ws.at[hb + Hio + Hf:hb + H, Hio:Hio + Hf].set(Wsf)
    ws = ws.at[hb + Hio + Hf:hb + H, Hio + Hf:H].set(Wss)
    ws = ws.at[4 * P:4 * P + Hio, 0:joint_dim].set(Wj)
    ws = ws.at[5 * P:5 * P + Hio, 0:decoder_input_dim].set(Wfd[:Hio])
    ws = ws.at[6 * P:6 * P + joint_dim, 0:decoder_input_dim].set(Wfd[Hio:])
    ws = ws.at[7 * P:7 * P + decoder_input_dim, 0:D0].set(Wd_fc)

    # ---- one packed bias / constant vector (f32), 128-aligned segments ----
    tio, tf, ts = taus
    coef = jnp.concatenate([jnp.full((Hio,), 1.0 - 1.0 / tio, jnp.float32),
                            jnp.full((Hf,), 1.0 - 1.0 / tf, jnp.float32),
                            jnp.full((Hs,), 1.0 - 1.0 / ts, jnp.float32)])
    segs = [("be1", E1, enc_b[0]), ("be2", E2, enc_b[1]), ("be3", E3, enc_b[2]),
            ("bd1", D1N, dec_b[0]), ("bd2", D2N, dec_b[1]), ("bd3", PIX, dec_b[2]),
            ("bfe", P, bfe), ("brnn", P, jnp.zeros((H,), jnp.float32)),
            ("bj", P, bj), ("bfd", P, bfd), ("bdfc", P, bd_fc), ("coef", P, coef)]
    b_off, pieces, off = {}, [], 0
    for name, width, vals in segs:
        b_off[name] = off
        base = jnp.ones if name == "coef" else jnp.zeros
        buf = base((width,), jnp.float32).at[:vals.shape[0]].set(vals)
        pieces.append(buf)
        off += width
    b_all = jnp.concatenate(pieces).reshape(1, off)

    params = {"w_enc": w_enc.astype(jnp.bfloat16),
              "w_dec": w_dec.astype(jnp.bfloat16),
              "w_small": ws.astype(jnp.bfloat16),
              "b_all": b_all}
    cfg = dict(image_ch=image_ch, image_hw=image_hw,
               image_feat_dim=image_feat_dim, joint_dim=joint_dim,
               Hio=Hio, Hf=Hf, Hs=Hs, H=H,
               decoder_input_dim=decoder_input_dim, dec_hw0=hw,
               PIX=PIX, E1=E1, E2=E2, E3=E3, D0=D0, D1N=D1N, D2N=D2N,
               b_off=b_off, taus=taus)
    return params, raw, cfg


# ----------------------------------------------------------------------------
# Fused, time-rolled Pallas kernel
# ----------------------------------------------------------------------------
def _make_kernel(cfg):
    P = 128
    E1, E2, E3 = cfg["E1"], cfg["E2"], cfg["E3"]
    D0, D1N, D2N, PIX = cfg["D0"], cfg["D1N"], cfg["D2N"], cfg["PIX"]
    bo = cfg["b_off"]
    f32, bf16 = jnp.float32, jnp.bfloat16

    def kern(img_ref, joint_ref, state0_ref, wenc_ref, wdec_ref, wsml_ref,
             b_ref, img_o, aux_o, h_scr, u_scr):
        t = pl.program_id(0)

        @pl.when(t == 0)
        def _():
            h_scr[...] = state0_ref[:, 0:P]
            u_scr[...] = state0_ref[:, P:2 * P]

        def mm(a, w):
            return jnp.dot(a.astype(bf16), w.astype(bf16),
                           preferred_element_type=f32)

        def bias(name, width):
            return b_ref[:, bo[name]:bo[name] + width]

        def relu(v):
            return jnp.maximum(v, 0.0)

        # ---- image encoder: 3 pre-linearized strided convs + FC ----
        x = img_ref[0]                                              # [B, PIX] bf16
        a1 = relu(mm(x, wenc_ref[:, 0:E1]) + bias("be1", E1))
        a2 = relu(mm(a1, wenc_ref[0:E1, E1:E1 + E2]) + bias("be2", E2))
        a3 = relu(mm(a2, wenc_ref[0:E2, E1 + E2:E1 + E2 + E3]) + bias("be3", E3))
        featv = relu(mm(a3, wsml_ref[0:P, :]) + bias("bfe", P))     # [B,128], pad 0

        # ---- MTRNN cell: one stacked dot + fused leaky-integrator update ----
        jointv = joint_ref[0].astype(f32)                           # [B,128], pad 0
        h_prev = h_scr[...]
        u_prev = u_scr[...]
        rnn_in = jnp.concatenate([featv, jointv, h_prev], axis=-1)  # [B, 384]
        pre = mm(rnn_in, wsml_ref[P:4 * P, :]) + bias("brnn", P)
        ca = bias("coef", P)                                        # (1 - 1/tau)
        u_new = ca * u_prev + (1.0 - ca) * pre
        h_new = jnp.tanh(u_new)
        h_scr[...] = h_new
        u_scr[...] = u_new

        # ---- joint decoder ----
        njv = jnp.tanh(mm(h_new, wsml_ref[4 * P:5 * P, :]) + bias("bj", P))

        # ---- fn_for_image_decoder ([h_io | next_joint], one stacked dot) ----
        fd_in = jnp.concatenate([h_new, njv], axis=-1)              # [B, 256]
        dc = relu(mm(fd_in, wsml_ref[5 * P:7 * P, :]) + bias("bfd", P))

        # ---- image decoder: FC + 3 pre-linearized (2x upsample + conv) ----
        d0 = relu(mm(dc, wsml_ref[7 * P:8 * P, :]) + bias("bdfc", P))
        d1 = relu(mm(d0, wdec_ref[0:D0, 0:D1N]) + bias("bd1", D1N))
        d2 = relu(mm(d1, wdec_ref[0:D1N, D1N:D1N + D2N]) + bias("bd2", D2N))
        logits = (mm(d2, wdec_ref[0:D2N, D1N + D2N:D1N + D2N + PIX])
                  + bias("bd3", PIX))
        # sigmoid as a single EUP tanh: sigmoid(x) = 0.5*tanh(0.5*x) + 0.5
        img_o[0] = 0.5 * jnp.tanh(0.5 * logits) + 0.5

        # packed small outputs: [next_joint | h | u] lane-dense
        aux_o[0] = jnp.concatenate([njv, h_new, u_new], axis=-1)

    return kern


# ----------------------------------------------------------------------------
# Wrappers
# ----------------------------------------------------------------------------
def aemtrnn_rollout(params, images, joints, rnn_state=None, *, cfg):
    """images: [T,B,C,H,W], joints: [T,B,J].  Whole rollout in one pallas_call."""
    P = 128
    T, B = images.shape[0], images.shape[1]
    Hio, Hf, Hs, H = cfg["Hio"], cfg["Hf"], cfg["Hs"], cfg["H"]
    J, PIX = cfg["joint_dim"], cfg["PIX"]
    Bp = max(8, ((B + 7) // 8) * 8)     # fill the f32 sublane dimension

    imgs = images.reshape(T, B, PIX).astype(jnp.bfloat16)
    if Bp != B:
        imgs = jnp.pad(imgs, ((0, 0), (0, Bp - B), (0, 0)))
    jnts = jnp.zeros((T, Bp, P), jnp.bfloat16).at[:, :B, :J].set(
        joints.astype(jnp.bfloat16))

    state0 = jnp.zeros((Bp, 2 * P), jnp.float32)
    if rnn_state is not None:
        h_all = jnp.concatenate(rnn_state[:3], axis=-1)
        u_all = jnp.concatenate(rnn_state[3:], axis=-1)
        state0 = state0.at[:B, 0:H].set(h_all)
        state0 = state0.at[:B, P:P + H].set(u_all)

    flops = 2 * Bp * T * (PIX * cfg["E1"] + cfg["E1"] * cfg["E2"]
                          + cfg["E2"] * cfg["E3"]
                          + P * P + 3 * P * P + P * P + 2 * P * P + P * P
                          + cfg["D0"] * cfg["D1N"] + cfg["D1N"] * cfg["D2N"]
                          + cfg["D2N"] * PIX)
    bytes_acc = ((params["w_enc"].size + params["w_dec"].size
                  + params["w_small"].size) * 2 + params["b_all"].size * 4
                 + T * Bp * (PIX * 2 + P * 2 + PIX * 4 + 3 * P * 4))
    cost = pl.CostEstimate(flops=flops, transcendentals=T * Bp * (2 * P + PIX),
                           bytes_accessed=bytes_acc)

    imgs_out, aux = pl.pallas_call(
        _make_kernel(cfg),
        out_shape=(jax.ShapeDtypeStruct((T, Bp, PIX), jnp.float32),
                   jax.ShapeDtypeStruct((T, Bp, 3 * P), jnp.float32)),
        grid=(T,),
        in_specs=[
            pl.BlockSpec((1, Bp, PIX), lambda t: (t, 0, 0)),     # image[t]
            pl.BlockSpec((1, Bp, P), lambda t: (t, 0, 0)),       # joint[t]
            pl.BlockSpec((Bp, 2 * P), lambda t: (0, 0)),         # initial state
            pl.BlockSpec(params["w_enc"].shape, lambda t: (0, 0)),
            pl.BlockSpec(params["w_dec"].shape, lambda t: (0, 0)),
            pl.BlockSpec(params["w_small"].shape, lambda t: (0, 0)),
            pl.BlockSpec(params["b_all"].shape, lambda t: (0, 0)),
        ],
        out_specs=(
            pl.BlockSpec((1, Bp, PIX), lambda t: (t, 0, 0)),
            pl.BlockSpec((1, Bp, 3 * P), lambda t: (t, 0, 0)),
        ),
        scratch_shapes=[pltpu.VMEM((Bp, P), jnp.float32),        # h state
                        pltpu.VMEM((Bp, P), jnp.float32)],       # u state
        compiler_params=pltpu.CompilerParams(
            dimension_semantics=("arbitrary",)),                 # true recurrence
        cost_estimate=cost,
    )(imgs, jnts, state0, params["w_enc"], params["w_dec"],
      params["w_small"], params["b_all"])

    pred_images = imgs_out[:, :B].reshape((T, B) + images.shape[2:])
    next_joints = aux[:, :B, 0:J]
    h_all = aux[:, :B, P:P + H]
    u_all = aux[:, :B, 2 * P:2 * P + H]
    states = (h_all[..., :Hio], h_all[..., Hio:Hio + Hf], h_all[..., Hio + Hf:],
              u_all[..., :Hio], u_all[..., Hio:Hio + Hf], u_all[..., Hio + Hf:])
    return pred_images, next_joints, states


def aemtrnn_forward(params, image, joint, rnn_state=None, *, cfg):
    """Single step, same semantics as the PyTorch AEMTRNN.forward."""
    pred, nj, states = aemtrnn_rollout(params, image[None], joint[None],
                                       rnn_state, cfg=cfg)
    return pred[0], nj[0], tuple(s[0] for s in states)


# ----------------------------------------------------------------------------
# Pure-f32 reference with REAL convs / upsampling (validates the linearization,
# packing and MTRNN stacking used by the kernel).
# ----------------------------------------------------------------------------
def aemtrnn_rollout_ref(raw, images, joints, rnn_state=None, *, cfg):
    T, B = images.shape[0], images.shape[1]
    Hio, Hf, Hs = cfg["Hio"], cfg["Hf"], cfg["Hs"]
    tio, tf, ts = cfg["taus"]
    hw0 = cfg["dec_hw0"]

    def conv(x, w, b, stride):
        y = jax.lax.conv_general_dilated(
            x, w, (stride, stride), [(1, 1), (1, 1)],
            dimension_numbers=("NCHW", "OIHW", "NCHW"))
        return y + b[None, :, None, None]

    def up2(x):
        return jnp.repeat(jnp.repeat(x, 2, axis=2), 2, axis=3)

    def relu(v):
        return jnp.maximum(v, 0.0)

    if rnn_state is None:
        h_io = jnp.zeros((B, Hio)); h_f = jnp.zeros((B, Hf)); h_s = jnp.zeros((B, Hs))
        u_io = jnp.zeros((B, Hio)); u_f = jnp.zeros((B, Hf)); u_s = jnp.zeros((B, Hs))
    else:
        h_io, h_f, h_s, u_io, u_f, u_s = rnn_state

    imgs_out, joints_out = [], []
    for t in range(T):
        a = relu(conv(images[t], raw["e1_w"], raw["e1_b"], 2))
        a = relu(conv(a, raw["e2_w"], raw["e2_b"], 2))
        a = relu(conv(a, raw["e3_w"], raw["e3_b"], 2))
        af = a.transpose(0, 2, 3, 1).reshape(B, -1)
        feat = relu(af @ raw["We"] + raw["bfe"])
        rin = jnp.concatenate([feat, joints[t]], -1)
        pre_io = rin @ raw["Wxi"] + h_io @ raw["Wii"] + h_f @ raw["Wfi"]
        pre_f = h_io @ raw["Wif"] + h_f @ raw["Wff"] + h_s @ raw["Wsf"]
        pre_s = h_f @ raw["Wfs"] + h_s @ raw["Wss"]
        u_io = (1 - 1 / tio) * u_io + (1 / tio) * pre_io
        u_f = (1 - 1 / tf) * u_f + (1 / tf) * pre_f
        u_s = (1 - 1 / ts) * u_s + (1 / ts) * pre_s
        h_io, h_f, h_s = jnp.tanh(u_io), jnp.tanh(u_f), jnp.tanh(u_s)
        nj = jnp.tanh(h_io @ raw["Wj"] + raw["bj"])
        dc = relu(jnp.concatenate([h_io, nj], -1) @ raw["Wfd"] + raw["bfd"])
        d = relu(dc @ raw["Wd_fc"] + raw["bd_fc"])
        d = d.reshape(B, hw0, hw0, 32).transpose(0, 3, 1, 2)
        d = relu(conv(up2(d), raw["d1_w"], raw["d1_b"], 1))
        d = relu(conv(up2(d), raw["d2_w"], raw["d2_b"], 1))
        img = jax.nn.sigmoid(conv(up2(d), raw["d3_w"], raw["d3_b"], 1))
        imgs_out.append(img)
        joints_out.append(nj)
    return (jnp.stack(imgs_out), jnp.stack(joints_out),
            (h_io, h_f, h_s, u_io, u_f, u_s))


# ----------------------------------------------------------------------------
if __name__ == "__main__":
    rnn_hidden_dims = (32, 32, 16)
    B, T, C, HW, J = 2, 8, 3, 16, 8

    key = jax.random.PRNGKey(0)
    k_param, k_img, k_joint = jax.random.split(key, 3)

    params, raw, cfg = build_model(
        k_param, image_ch=C, image_hw=HW, image_feat_dim=16, joint_dim=J,
        rnn_hidden_dims=rnn_hidden_dims, decoder_input_dim=32,
        taus=(2.0, 5.0, 70.0))

    images = jax.random.normal(k_img, (T, B, C, HW, HW), jnp.float32)
    joints = jax.random.uniform(k_joint, (T, B, J), jnp.float32, -1.0, 1.0)

    rollout = jax.jit(functools.partial(aemtrnn_rollout, cfg=cfg))
    pred_imgs, next_joints, states = rollout(params, images, joints)
    jax.block_until_ready((pred_imgs, next_joints, states))

    # Shape checks.
    assert pred_imgs.shape == (T, B, C, HW, HW)
    assert next_joints.shape == (T, B, J)
    assert states[0].shape == (T, B, rnn_hidden_dims[0])
    assert states[5].shape == (T, B, rnn_hidden_dims[2])

    # Numerical check vs. a pure-f32 reference using real convs / upsampling
    # and the un-packed weights (validates linearization + packing; kernel
    # uses bf16 matmul inputs with f32 accumulation).
    ref_imgs, ref_joints, ref_final = jax.jit(
        functools.partial(aemtrnn_rollout_ref, cfg=cfg))(raw, images, joints)
    assert float(jnp.max(jnp.abs(pred_imgs - ref_imgs))) < 5e-2
    assert float(jnp.max(jnp.abs(next_joints - ref_joints))) < 5e-2
    assert float(jnp.max(jnp.abs(states[0][-1] - ref_final[0]))) < 5e-2
    assert float(jnp.max(jnp.abs(states[3][-1] - ref_final[3]))) < 5e-2

    # Single-step API (matches the PyTorch forward) + carried-state second step.
    fwd = jax.jit(functools.partial(aemtrnn_forward, cfg=cfg))
    img1, joint1, state1 = fwd(params, images[0], joints[0])
    jax.block_until_ready((img1, joint1, state1))
    assert img1.shape == (B, C, HW, HW) and joint1.shape == (B, J)
    img2, joint2, state2 = fwd(params, images[1], joints[1], state1)
    jax.block_until_ready((img2, joint2, state2))
    assert img2.shape == (B, C, HW, HW) and state2[0].shape == (B, rnn_hidden_dims[0])

    print("KERNEL_OK")
</pallas_src>

<mosaic_0001>
module attributes {stable_mosaic.version = 11 : i64} {
  func.func @kern(%arg0: i32, %arg1: memref<1x8x768xbf16, #tpu.memory_space<vmem>>, %arg2: memref<1x8x128xbf16, #tpu.memory_space<vmem>>, %arg3: memref<8x256xf32, #tpu.memory_space<vmem>>, %arg4: memref<768x896xbf16, #tpu.memory_space<vmem>>, %arg5: memref<512x1536xbf16, #tpu.memory_space<vmem>>, %arg6: memref<1024x128xbf16, #tpu.memory_space<vmem>>, %arg7: memref<1x3200xf32, #tpu.memory_space<vmem>>, %arg8: memref<1x8x768xf32, #tpu.memory_space<vmem>>, %arg9: memref<1x8x384xf32, #tpu.memory_space<vmem>>, %arg10: memref<8x128xf32, #tpu.memory_space<vmem>>, %arg11: memref<8x128xf32, #tpu.memory_space<vmem>>) attributes {dimension_semantics = [#tpu.dimension_semantics<arbitrary>], iteration_bounds = array<i64: 8>, scalar_prefetch = 0 : i64, scratch_operands = 2 : i64, tpu.core_type = #tpu.core_type<tc>, window_params = [{transform_indices = @transform_0, window_bounds = array<i64: 1, 8, 768>}, {transform_indices = @transform_1, window_bounds = array<i64: 1, 8, 128>}, {pipeline_mode = #tpu.pipeline_mode<synchronous>, transform_indices = @transform_2, window_bounds = array<i64: 8, 256>}, {pipeline_mode = #tpu.pipeline_mode<synchronous>, transform_indices = @transform_3, window_bounds = array<i64: 768, 896>}, {pipeline_mode = #tpu.pipeline_mode<synchronous>, transform_indices = @transform_4, window_bounds = array<i64: 512, 1536>}, {pipeline_mode = #tpu.pipeline_mode<synchronous>, transform_indices = @transform_5, window_bounds = array<i64: 1024, 128>}, {pipeline_mode = #tpu.pipeline_mode<synchronous>, transform_indices = @transform_6, window_bounds = array<i64: 1, 3200>}, {transform_indices = @transform_7, window_bounds = array<i64: 1, 8, 768>}, {transform_indices = @transform_8, window_bounds = array<i64: 1, 8, 384>}]} {
    %c0_i32 = arith.constant 0 : i32
    %0 = arith.cmpi eq, %arg0, %c0_i32 : i32
    %1 = arith.extui %0 : i1 to i32
    %c0_i32_0 = arith.constant 0 : i32
    %2 = arith.cmpi ne, %1, %c0_i32_0 : i32
    scf.if %2 {
      %c0_74 = arith.constant 0 : index
      %c0_75 = arith.constant 0 : index
      %119 = vector.load %arg3[%c0_74, %c0_75] : memref<8x256xf32, #tpu.memory_space<vmem>>, vector<8x128xf32>
      %c0_76 = arith.constant 0 : index
      %c0_77 = arith.constant 0 : index
      %120 = vector.load %arg10[%c0_76, %c0_77] : memref<8x128xf32, #tpu.memory_space<vmem>>, vector<8x128xf32>
      tpu.vector_store %arg10[%c0_76, %c0_77], %119 {strides = array<i32>} : memref<8x128xf32, #tpu.memory_space<vmem>>, vector<8x128xf32>,
      %c0_78 = arith.constant 0 : index
      %c128_79 = arith.constant 128 : index
      %121 = vector.load %arg3[%c0_78, %c128_79] : memref<8x256xf32, #tpu.memory_space<vmem>>, vector<8x128xf32>
      %c0_80 = arith.constant 0 : index
      %c0_81 = arith.constant 0 : index
      %122 = vector.load %arg11[%c0_80, %c0_81] : memref<8x128xf32, #tpu.memory_space<vmem>>, vector<8x128xf32>
      tpu.vector_store %arg11[%c0_80, %c0_81], %121 {strides = array<i32>} : memref<8x128xf32, #tpu.memory_space<vmem>>, vector<8x128xf32>,
    } else {
    }
    %c0 = arith.constant 0 : index
    %c0_1 = arith.constant 0 : index
    %c0_2 = arith.constant 0 : index
    %3 = vector.load %arg1[%c0, %c0_1, %c0_2] : memref<1x8x768xbf16, #tpu.memory_space<vmem>>, vector<1x8x768xbf16>
    %4 = vector.shape_cast %3 : vector<1x8x768xbf16> to vector<8x768xbf16>
    %c0_3 = arith.constant 0 : index
    %c0_4 = arith.constant 0 : index
    %5 = vector.load %arg4[%c0_3, %c0_4] : memref<768x896xbf16, #tpu.memory_space<vmem>>, vector<768x512xbf16>
    %cst = arith.constant dense<0.000000e+00> : vector<8x512xf32>
    %6 = tpu.matmul %4, %5, %cst {dimension_numbers = #tpu.dot_dimension_numbers<[1], [0], [0], [1], [0, 0, 1, 1], [], []>} : vector<8x768xbf16>, vector<768x512xbf16>, vector<8x512xf32> -> vector<8x512xf32>
    %c0_5 = arith.constant 0 : index
    %c0_6 = arith.constant 0 : index
    %7 = vector.load %arg7[%c0_5, %c0_6] : memref<1x3200xf32, #tpu.memory_space<vmem>>, vector<1x512xf32>
    %8 = vector.broadcast %7 : vector<1x512xf32> to vector<8x512xf32>
    %9 = arith.addf %6, %8 : vector<8x512xf32>
    %cst_7 = arith.constant 0.000000e+00 : f32
    %10 = vector.broadcast %cst_7 : f32 to vector<8x512xf32>
    %11 = arith.maximumf %9, %10 : vector<8x512xf32>
    %c0_8 = arith.constant 0 : index
    %c512 = arith.constant 512 : index
    %12 = vector.load %arg4[%c0_8, %c512] : memref<768x896xbf16, #tpu.memory_space<vmem>>, vector<512x256xbf16>
    %13 = arith.truncf %11 : vector<8x512xf32> to vector<8x512xbf16>
    %cst_9 = arith.constant dense<0.000000e+00> : vector<8x256xf32>
    %14 = tpu.matmul %13, %12, %cst_9 {dimension_numbers = #tpu.dot_dimension_numbers<[1], [0], [0], [1], [0, 0, 1, 1], [], []>} : vector<8x512xbf16>, vector<512x256xbf16>, vector<8x256xf32> -> vector<8x256xf32>
    %c0_10 = arith.constant 0 : index
    %c512_11 = arith.constant 512 : index
    %15 = vector.load %arg7[%c0_10, %c512_11] : memref<1x3200xf32, #tpu.memory_space<vmem>>, vector<1x256xf32>
    %16 = vector.broadcast %15 : vector<1x256xf32> to vector<8x256xf32>
    %17 = arith.addf %14, %16 : vector<8x256xf32>
    %cst_12 = arith.constant 0.000000e+00 : f32
    %18 = vector.broadcast %cst_12 : f32 to vector<8x256xf32>
    %19 = arith.maximumf %17, %18 : vector<8x256xf32>
    %c0_13 = arith.constant 0 : index
    %c768 = arith.constant 768 : index
    %20 = vector.load %arg4[%c0_13, %c768] : memref<768x896xbf16, #tpu.memory_space<vmem>>, vector<256x128xbf16>
    %21 = arith.truncf %19 : vector<8x256xf32> to vector<8x256xbf16>
    %cst_14 = arith.constant dense<0.000000e+00> : vector<8x128xf32>
    %22 = tpu.matmul %21, %20, %cst_14 {dimension_numbers = #tpu.dot_dimension_numbers<[1], [0], [0], [1], [0, 0, 1, 1], [], []>} : vector<8x256xbf16>, vector<256x128xbf16>, vector<8x128xf32> -> vector<8x128xf32>
    %c0_15 = arith.constant 0 : index
    %c768_16 = arith.constant 768 : index
    %23 = vector.load %arg7[%c0_15, %c768_16] : memref<1x3200xf32, #tpu.memory_space<vmem>>, vector<1x128xf32>
    %24 = vector.broadcast %23 : vector<1x128xf32> to vector<8x128xf32>
    %25 = arith.addf %22, %24 : vector<8x128xf32>
    %cst_17 = arith.constant 0.000000e+00 : f32
    %26 = vector.broadcast %cst_17 : f32 to vector<8x128xf32>
    %27 = arith.maximumf %25, %26 : vector<8x128xf32>
    %c0_18 = arith.constant 0 : index
    %c0_19 = arith.constant 0 : index
    %28 = vector.load %arg6[%c0_18, %c0_19] : memref<1024x128xbf16, #tpu.memory_space<vmem>>, vector<128x128xbf16>
    %29 = arith.truncf %27 : vector<8x128xf32> to vector<8x128xbf16>
    %cst_20 = arith.constant dense<0.000000e+00> : vector<8x128xf32>
    %30 = tpu.matmul %29, %28, %cst_20 {dimension_numbers = #tpu.dot_dimension_numbers<[1], [0], [0], [1], [0, 0, 1, 1], [], []>} : vector<8x128xbf16>, vector<128x128xbf16>, vector<8x128xf32> -> vector<8x128xf32>
    %c0_21 = arith.constant 0 : index
    %c2432 = arith.constant 2432 : index
    %31 = vector.load %arg7[%c0_21, %c2432] : memref<1x3200xf32, #tpu.memory_space<vmem>>, vector<1x128xf32>
    %32 = vector.broadcast %31 : vector<1x128xf32> to vector<8x128xf32>
    %33 = arith.addf %30, %32 : vector<8x128xf32>
    %cst_22 = arith.constant 0.000000e+00 : f32
    %34 = vector.broadcast %cst_22 : f32 to vector<8x128xf32>
    %35 = arith.maximumf %33, %34 : vector<8x128xf32>
    %c0_23 = arith.constant 0 : index
    %c0_24 = arith.constant 0 : index
    %c0_25 = arith.constant 0 : index
    %36 = vector.load %arg2[%c0_23, %c0_24, %c0_25] : memref<1x8x128xbf16, #tpu.memory_space<vmem>>, vector<1x8x128xbf16>
    %37 = vector.shape_cast %36 : vector<1x8x128xbf16> to vector<8x128xbf16>
    %38 = arith.extf %37 : vector<8x128xbf16> to vector<8x128xf32>
    %c0_26 = arith.constant 0 : index
    %c0_27 = arith.constant 0 : index
    %39 = vector.load %arg10[%c0_26, %c0_27] : memref<8x128xf32, #tpu.memory_space<vmem>>, vector<8x128xf32>
    %c0_28 = arith.constant 0 : index
    %c0_29 = arith.constant 0 : index
    %40 = vector.load %arg11[%c0_28, %c0_29] : memref<8x128xf32, #tpu.memory_space<vmem>>, vector<8x128xf32>
    %41 = tpu.concatenate %35, %38, %39 in 1 : vector<8x128xf32>, vector<8x128xf32>, vector<8x128xf32> -> vector<8x384xf32>
    %c128 = arith.constant 128 : index
    %c0_30 = arith.constant 0 : index
    %42 = vector.load %arg6[%c128, %c0_30] : memref<1024x128xbf16, #tpu.memory_space<vmem>>, vector<384x128xbf16>
    %43 = arith.truncf %41 : vector<8x384xf32> to vector<8x384xbf16>
    %cst_31 = arith.constant dense<0.000000e+00> : vector<8x128xf32>
    %44 = tpu.matmul %43, %42, %cst_31 {dimension_numbers = #tpu.dot_dimension_numbers<[1], [0], [0], [1], [0, 0, 1, 1], [], []>} : vector<8x384xbf16>, vector<384x128xbf16>, vector<8x128xf32> -> vector<8x128xf32>
    %c0_32 = arith.constant 0 : index
    %c2560 = arith.constant 2560 : index
    %45 = vector.load %arg7[%c0_32, %c2560] : memref<1x3200xf32, #tpu.memory_space<vmem>>, vector<1x128xf32>
    %46 = vector.broadcast %45 : vector<1x128xf32> to vector<8x128xf32>
    %47 = arith.addf %44, %46 : vector<8x128xf32>
    %c0_33 = arith.constant 0 : index
    %c3072 = arith.constant 3072 : index
    %48 = vector.load %arg7[%c0_33, %c3072] : memref<1x3200xf32, #tpu.memory_space<vmem>>, vector<1x128xf32>
    %49 = vector.broadcast %48 : vector<1x128xf32> to vector<8x128xf32>
    %50 = arith.mulf %49, %40 : vector<8x128xf32>
    %cst_34 = arith.constant 1.000000e+00 : f32
    %51 = vector.broadcast %cst_34 : f32 to vector<1x128xf32>
    %52 = arith.subf %51, %48 : vector<1x128xf32>
    %53 = vector.broadcast %52 : vector<1x128xf32> to vector<8x128xf32>
    %54 = arith.mulf %53, %47 : vector<8x128xf32>
    %55 = arith.addf %50, %54 : vector<8x128xf32>
    %56 = math.tanh %55 : vector<8x128xf32>
    %c0_35 = arith.constant 0 : index
    %c0_36 = arith.constant 0 : index
    %57 = vector.load %arg10[%c0_35, %c0_36] : memref<8x128xf32, #tpu.memory_space<vmem>>, vector<8x128xf32>
    tpu.vector_store %arg10[%c0_35, %c0_36], %56 {strides = array<i32>} : memref<8x128xf32, #tpu.memory_space<vmem>>, vector<8x128xf32>,
    %c0_37 = arith.constant 0 : index
    %c0_38 = arith.constant 0 : index
    %58 = vector.load %arg11[%c0_37, %c0_38] : memref<8x128xf32, #tpu.memory_space<vmem>>, vector<8x128xf32>
    tpu.vector_store %arg11[%c0_37, %c0_38], %55 {strides = array<i32>} : memref<8x128xf32, #tpu.memory_space<vmem>>, vector<8x128xf32>,
    %c512_39 = arith.constant 512 : index
    %c0_40 = arith.constant 0 : index
    %59 = vector.load %arg6[%c512_39, %c0_40] : memref<1024x128xbf16, #tpu.memory_space<vmem>>, vector<128x128xbf16>
    %60 = arith.truncf %56 : vector<8x128xf32> to vector<8x128xbf16>
    %cst_41 = arith.constant dense<0.000000e+00> : vector<8x128xf32>
    %61 = tpu.matmul %60, %59, %cst_41 {dimension_numbers = #tpu.dot_dimension_numbers<[1], [0], [0], [1], [0, 0, 1, 1], [], []>} : vector<8x128xbf16>, vector<128x128xbf16>, vector<8x128xf32> -> vector<8x128xf32>
    %c0_42 = arith.constant 0 : index
    %c2688 = arith.constant 2688 : index
    %62 = vector.load %arg7[%c0_42, %c2688] : memref<1x3200xf32, #tpu.memory_space<vmem>>, vector<1x128xf32>
    %63 = vector.broadcast %62 : vector<1x128xf32> to vector<8x128xf32>
    %64 = arith.addf %61, %63 : vector<8x128xf32>
    %65 = math.tanh %64 : vector<8x128xf32>
    %66 = tpu.concatenate %56, %65 in 1 : vector<8x128xf32>, vector<8x128xf32> -> vector<8x256xf32>
    %c640 = arith.constant 640 : index
    %c0_43 = arith.constant 0 : index
    %67 = vector.load %arg6[%c640, %c0_43] : memref<1024x128xbf16, #tpu.memory_space<vmem>>, vector<256x128xbf16>
    %68 = arith.truncf %66 : vector<8x256xf32> to vector<8x256xbf16>
    %cst_44 = arith.constant dense<0.000000e+00> : vector<8x128xf32>
    %69 = tpu.matmul %68, %67, %cst_44 {dimension_numbers = #tpu.dot_dimension_numbers<[1], [0], [0], [1], [0, 0, 1, 1], [], []>} : vector<8x256xbf16>, vector<256x128xbf16>, vector<8x128xf32> -> vector<8x128xf32>
    %c0_45 = arith.constant 0 : index
    %c2816 = arith.constant 2816 : index
    %70 = vector.load %arg7[%c0_45, %c2816] : memref<1x3200xf32, #tpu.memory_space<vmem>>, vector<1x128xf32>
    %71 = vector.broadcast %70 : vector<1x128xf32> to vector<8x128xf32>
    %72 = arith.addf %69, %71 : vector<8x128xf32>
    %cst_46 = arith.constant 0.000000e+00 : f32
    %73 = vector.broadcast %cst_46 : f32 to vector<8x128xf32>
    %74 = arith.maximumf %72, %73 : vector<8x128xf32>
    %c896 = arith.constant 896 : index
    %c0_47 = arith.constant 0 : index
    %75 = vector.load %arg6[%c896, %c0_47] : memref<1024x128xbf16, #tpu.memory_space<vmem>>, vector<128x128xbf16>
    %76 = arith.truncf %74 : vector<8x128xf32> to vector<8x128xbf16>
    %cst_48 = arith.constant dense<0.000000e+00> : vector<8x128xf32>
    %77 = tpu.matmul %76, %75, %cst_48 {dimension_numbers = #tpu.dot_dimension_numbers<[1], [0], [0], [1], [0, 0, 1, 1], [], []>} : vector<8x128xbf16>, vector<128x128xbf16>, vector<8x128xf32> -> vector<8x128xf32>
    %c0_49 = arith.constant 0 : index
    %c2944 = arith.constant 2944 : index
    %78 = vector.load %arg7[%c0_49, %c2944] : memref<1x3200xf32, #tpu.memory_space<vmem>>, vector<1x128xf32>
    %79 = vector.broadcast %78 : vector<1x128xf32> to vector<8x128xf32>
    %80 = arith.addf %77, %79 : vector<8x128xf32>
    %cst_50 = arith.constant 0.000000e+00 : f32
    %81 = vector.broadcast %cst_50 : f32 to vector<8x128xf32>
    %82 = arith.maximumf %80, %81 : vector<8x128xf32>
    %c0_51 = arith.constant 0 : index
    %c0_52 = arith.constant 0 : index
    %83 = vector.load %arg5[%c0_51, %c0_52] : memref<512x1536xbf16, #tpu.memory_space<vmem>>, vector<128x256xbf16>
    %84 = arith.truncf %82 : vector<8x128xf32> to vector<8x128xbf16>
    %cst_53 = arith.constant dense<0.000000e+00> : vector<8x256xf32>
    %85 = tpu.matmul %84, %83, %cst_53 {dimension_numbers = #tpu.dot_dimension_numbers<[1], [0], [0], [1], [0, 0, 1, 1], [], []>} : vector<8x128xbf16>, vector<128x256xbf16>, vector<8x256xf32> -> vector<8x256xf32>
    %c0_54 = arith.constant 0 : index
    %c896_55 = arith.constant 896 : index
    %86 = vector.load %arg7[%c0_54, %c896_55] : memref<1x3200xf32, #tpu.memory_space<vmem>>, vector<1x256xf32>
    %87 = vector.broadcast %86 : vector<1x256xf32> to vector<8x256xf32>
    %88 = arith.addf %85, %87 : vector<8x256xf32>
    %cst_56 = arith.constant 0.000000e+00 : f32
    %89 = vector.broadcast %cst_56 : f32 to vector<8x256xf32>
    %90 = arith.maximumf %88, %89 : vector<8x256xf32>
    %c0_57 = arith.constant 0 : index
    %c256 = arith.constant 256 : index
    %91 = vector.load %arg5[%c0_57, %c256] : memref<512x1536xbf16, #tpu.memory_space<vmem>>, vector<256x512xbf16>
    %92 = arith.truncf %90 : vector<8x256xf32> to vector<8x256xbf16>
    %cst_58 = arith.constant dense<0.000000e+00> : vector<8x512xf32>
    %93 = tpu.matmul %92, %91, %cst_58 {dimension_numbers = #tpu.dot_dimension_numbers<[1], [0], [0], [1], [0, 0, 1, 1], [], []>} : vector<8x256xbf16>, vector<256x512xbf16>, vector<8x512xf32> -> vector<8x512xf32>
    %c0_59 = arith.constant 0 : index
    %c1152 = arith.constant 1152 : index
    %94 = vector.load %arg7[%c0_59, %c1152] : memref<1x3200xf32, #tpu.memory_space<vmem>>, vector<1x512xf32>
    %95 = vector.broadcast %94 : vector<1x512xf32> to vector<8x512xf32>
    %96 = arith.addf %93, %95 : vector<8x512xf32>
    %cst_60 = arith.constant 0.000000e+00 : f32
    %97 = vector.broadcast %cst_60 : f32 to vector<8x512xf32>
    %98 = arith.maximumf %96, %97 : vector<8x512xf32>
    %c0_61 = arith.constant 0 : index
    %c768_62 = arith.constant 768 : index
    %99 = vector.load %arg5[%c0_61, %c768_62] : memref<512x1536xbf16, #tpu.memory_space<vmem>>, vector<512x768xbf16>
    %100 = arith.truncf %98 : vector<8x512xf32> to vector<8x512xbf16>
    %cst_63 = arith.constant dense<0.000000e+00> : vector<8x768xf32>
    %101 = tpu.matmul %100, %99, %cst_63 {dimension_numbers = #tpu.dot_dimension_numbers<[1], [0], [0], [1], [0, 0, 1, 1], [], []>} : vector<8x512xbf16>, vector<512x768xbf16>, vector<8x768xf32> -> vector<8x768xf32>
    %c0_64 = arith.constant 0 : index
    %c1664 = arith.constant 1664 : index
    %102 = vector.load %arg7[%c0_64, %c1664] : memref<1x3200xf32, #tpu.memory_space<vmem>>, vector<1x768xf32>
    %103 = vector.broadcast %102 : vector<1x768xf32> to vector<8x768xf32>
    %104 = arith.addf %101, %103 : vector<8x768xf32>
    %cst_65 = arith.constant 5.000000e-01 : f32
    %105 = vector.broadcast %cst_65 : f32 to vector<8x768xf32>
    %106 = arith.mulf %105, %104 : vector<8x768xf32>
    %107 = math.tanh %106 : vector<8x768xf32>
    %cst_66 = arith.constant 5.000000e-01 : f32
    %108 = vector.broadcast %cst_66 : f32 to vector<8x768xf32>
    %109 = arith.mulf %108, %107 : vector<8x768xf32>
    %cst_67 = arith.constant 5.000000e-01 : f32
    %110 = vector.broadcast %cst_67 : f32 to vector<8x768xf32>
    %111 = arith.addf %109, %110 : vector<8x768xf32>
    %c0_68 = arith.constant 0 : index
    %c0_69 = arith.constant 0 : index
    %c0_70 = arith.constant 0 : index
    %112 = vector.load %arg8[%c0_68, %c0_69, %c0_70] : memref<1x8x768xf32, #tpu.memory_space<vmem>>, vector<1x8x768xf32>
    %113 = vector.shape_cast %112 : vector<1x8x768xf32> to vector<8x768xf32>
    %114 = vector.shape_cast %111 : vector<8x768xf32> to vector<1x8x768xf32>
    tpu.vector_store %arg8[%c0_68, %c0_69, %c0_70], %114 {strides = array<i32>} : memref<1x8x768xf32, #tpu.memory_space<vmem>>, vector<1x8x768xf32>,
    %115 = tpu.concatenate %65, %56, %55 in 1 : vector<8x128xf32>, vector<8x128xf32>, vector<8x128xf32> -> vector<8x384xf32>
    %c0_71 = arith.constant 0 : index
    %c0_72 = arith.constant 0 : index
    %c0_73 = arith.constant 0 : index
    %116 = vector.load %arg9[%c0_71, %c0_72, %c0_73] : memref<1x8x384xf32, #tpu.memory_space<vmem>>, vector<1x8x384xf32>
    %117 = vector.shape_cast %116 : vector<1x8x384xf32> to vector<8x384xf32>
    %118 = vector.shape_cast %115 : vector<8x384xf32> to vector<1x8x384xf32>
    tpu.vector_store %arg9[%c0_71, %c0_72, %c0_73], %118 {strides = array<i32>} : memref<1x8x384xf32, #tpu.memory_space<vmem>>, vector<1x8x384xf32>,
    return
  }
  func.func @transform_0(%arg0: i32) -> (i32, i32, i32) {
    %c0_i32 = arith.constant 0 : i32
    %c0_i32_0 = arith.constant 0 : i32
    %c0_i32_1 = arith.constant 0 : i32
    return %arg0, %c0_i32, %c0_i32_0 : i32, i32, i32
  }
  func.func @transform_1(%arg0: i32) -> (i32, i32, i32) {
    %c0_i32 = arith.constant 0 : i32
    %c0_i32_0 = arith.constant 0 : i32
    %c0_i32_1 = arith.constant 0 : i32
    return %arg0, %c0_i32, %c0_i32_0 : i32, i32, i32
  }
  func.func @transform_2(%arg0: i32) -> (i32, i32) {
    %c0_i32 = arith.constant 0 : i32
    %c0_i32_0 = arith.constant 0 : i32
    %c0_i32_1 = arith.constant 0 : i32
    return %c0_i32, %c0_i32_0 : i32, i32
  }
  func.func @transform_3(%arg0: i32) -> (i32, i32) {
    %c0_i32 = arith.constant 0 : i32
    %c0_i32_0 = arith.constant 0 : i32
    %c0_i32_1 = arith.constant 0 : i32
    return %c0_i32, %c0_i32_0 : i32, i32
  }
  func.func @transform_4(%arg0: i32) -> (i32, i32) {
    %c0_i32 = arith.constant 0 : i32
    %c0_i32_0 = arith.constant 0 : i32
    %c0_i32_1 = arith.constant 0 : i32
    return %c0_i32, %c0_i32_0 : i32, i32
  }
  func.func @transform_5(%arg0: i32) -> (i32, i32) {
    %c0_i32 = arith.constant 0 : i32
    %c0_i32_0 = arith.constant 0 : i32
    %c0_i32_1 = arith.constant 0 : i32
    return %c0_i32, %c0_i32_0 : i32, i32
  }
  func.func @transform_6(%arg0: i32) -> (i32, i32) {
    %c0_i32 = arith.constant 0 : i32
    %c0_i32_0 = arith.constant 0 : i32
    %c0_i32_1 = arith.constant 0 : i32
    return %c0_i32, %c0_i32_0 : i32, i32
  }
  func.func @transform_7(%arg0: i32) -> (i32, i32, i32) {
    %c0_i32 = arith.constant 0 : i32
    %c0_i32_0 = arith.constant 0 : i32
    %c0_i32_1 = arith.constant 0 : i32
    return %arg0, %c0_i32, %c0_i32_0 : i32, i32, i32
  }
  func.func @transform_8(%arg0: i32) -> (i32, i32, i32) {
    %c0_i32 = arith.constant 0 : i32
    %c0_i32_0 = arith.constant 0 : i32
    %c0_i32_1 = arith.constant 0 : i32
    return %arg0, %c0_i32, %c0_i32_0 : i32, i32, i32
  }
}

</mosaic_0001>

<llo_original>
// kernel: aemtrnn_rollout.1
$region0: #{aemtrnn_rollout.1}
  #allocation0 [shape = 'u32[]', space=smem, size = 0x4, offset = 0x4, fixed_abs, tag = 'smem constant byte address 0x4 - core index']
  #allocation1 [shape = 'u32[144,128]{1,0:T(1,128)}', space=vmem, size = 0x12000, scoped, tag = 'internal scratch']
  #allocation2 [shape = 'f32[8,128]{1,0:T(8,128)}', space=vmem, size = 0x1000, scoped, tag = 'scratch operand']
  #allocation3 [shape = 'f32[8,128]{1,0:T(8,128)}', space=vmem, size = 0x1000, scoped, tag = 'scratch operand']
  %s0 = inlined_call_operand.vmem [shape: bf16[8,8,768], index: 0, kind: input, shape index: {}]
  %s1 = inlined_call_operand.vmem [shape: bf16[8,8,128], index: 1, kind: input, shape index: {}]
  %s2 = inlined_call_operand.vmem [shape: f32[8,256], index: 2, kind: input, shape index: {}]
  %s3 = inlined_call_operand.hbm [shape: bf16[768,896], index: 3, kind: input, shape index: {}]
  %s4 = inlined_call_operand.hbm [shape: bf16[512,1536], index: 4, kind: input, shape index: {}]
  %s5 = inlined_call_operand.hbm [shape: bf16[1024,128], index: 5, kind: input, shape index: {}]
  %s6 = inlined_call_operand.hbm [shape: f32[1,3200], index: 6, kind: input, shape index: {}]
  %s7 = inlined_call_operand.vmem [shape: f32[8,8,768], index: 7, kind: output, shape index: {0}]
  %s8 = inlined_call_operand.vmem [shape: f32[8,8,384], index: 8, kind: output, shape index: {1}]
  %9 = xla_tuple %s7, %s8
  %s10 = sld [smem:[#allocation0]]
  $region89: #{aemtrnn_rollout.1} parent=0
    _
  %s12 = ssub.s32 1, %s10
  %s13 = scalar_select 0, %s12, %s10
  $region1: #{aemtrnn_rollout.1} parent=0
    #allocation4 [shape = 'u8[1376256]{0}', space=vmem, size = 0x150000, scoped, tag = 'input window, operand 3, single buffered']
    #allocation5 [shape = 's32[2]{0}', space=sflag, size = 0x8, scoped, tag = 'scoped memory for aemtrnn_rollout.1']
    #allocation6 [shape = 'u8[1572864]{0}', space=vmem, size = 0x180000, scoped, tag = 'input window, operand 4, single buffered']
    #allocation7 [shape = 's32[1]{0}', space=sflag, size = 0x4, scoped, tag = 'scoped memory for aemtrnn_rollout.1']
    #allocation8 [shape = 'u8[262144]{0}', space=vmem, size = 0x40000, scoped, tag = 'input window, operand 5, single buffered']
    #allocation9 [shape = 'u8[12800]{0}', space=vmem, size = 0x3400, scoped, tag = 'input window, operand 6, single buffered']
    #allocation10 [shape = 's32[1]{0}', space=sflag, size = 0x4, scoped, tag = 'scoped memory for aemtrnn_rollout.1']
    %14 = vsyncpa [#allocation5], 0
    %15 = vsyncpa [#allocation7], 0
    %16 = vsyncpa [#allocation10], 0
    loop: start=0, step=1, limit=10
    $region2: #{aemtrnn_rollout.1} parent=1 // loop_pre_header
      _
    $region3: #{aemtrnn_rollout.1} parent=1 // loop_header
      %s18 = sphi 0, %s22
      %p19 = scmp.ge.s32.totalorder %s18, 10
      %s28 = sphi 0, %s30
      %s31 = sphi 0, %s28
      %s32 = sphi 0, %s31
      %s48 = sphi 0, %s32
      %s54 = sphi 0, %s56
      %s57 = sphi 0, %s54
      %s58 = sphi 0, %s57
      %s74 = sphi 0, %s58
      %s78 = sphi 0, %s78
      %s80 = sphi 0, %s78
      %s81 = sphi 0, %s80
      %s95 = sphi 0, %s81
      %s99 = sphi 0, %s99
      %s101 = sphi 0, %s99
      %s102 = sphi 0, %s101
      %s116 = sphi 0, %s102
      %s120 = sphi 0, %s120
      %s122 = sphi 0, %s120
      %s123 = sphi 0, %s122
      %s137 = sphi 0, %s123
      %s141 = sphi 0, %s141
      %s143 = sphi 0, %s141
      %s144 = sphi 0, %s143
      %s158 = sphi 0, %s144
      %s162 = sphi 0, %s162
      %s164 = sphi 0, %s162
      %s165 = sphi 0, %s164
      %s179 = sphi 0, %s165
      %s185 = sphi 0, %s187
      %s188 = sphi 0, %s185
      %s189 = sphi 0, %s188
      %s205 = sphi 0, %s189
      %s211 = sphi 0, %s213
      %s214 = sphi 0, %s211
      %s215 = sphi 0, %s214
      %s231 = sphi 0, %s215
    $region4: #{aemtrnn_rollout.1} parent=1 // loop_header_branch
      %21 = sbr.rel (%p19) target = $region8
    $region5: #{aemtrnn_rollout.1} parent=1 // loop_body
      %s23 = ssub.s32 %s18, 1
      %s24 = ssub.s32 %s18, 2
      %s25 = sadd.s32 %s18, 1
      %s26 = ssub.s32 %s18, %s25
      %p27 = scmp.eq.s32.totalorder %s26, 0
      %s29 = sadd.s32 %s28, 1
      %s30 = scalar_select %p27, %s28, %s29
      %p33 = pneg %p27
      %p34 = scmp.eq.s32.totalorder %s18, 7
      %p35 = por %p33, %p34
      %p36 = scmp.ne.s32.totalorder %s28, %s31
      %p37 = scmp.eq.s32.totalorder %s18, 0
      %p38 = por %p36, %p37
      %p39 = scmp.ne.s32.totalorder %s28, %s31
      %p40 = scmp.eq.s32.totalorder %s23, 7
      %p41 = por %p39, %p40
      %p42 = scmp.ne.s32.totalorder %s31, %s32
      %p43 = scmp.eq.s32.totalorder %s23, 0
      %p44 = por %p42, %p43
      %p45 = scmp.ne.s32.totalorder %s31, %s32
      %p46 = scmp.eq.s32.totalorder %s24, 7
      %p47 = por %p45, %p46
      %p49 = scmp.ne.s32.totalorder %s32, %s48
      %p50 = scmp.eq.s32.totalorder %s24, 0
      %p51 = por %p49, %p50
      %s52 = ssub.s32 %s18, %s25
      %p53 = scmp.eq.s32.totalorder %s52, 0
      %s55 = sadd.s32 %s54, 1
      %s56 = scalar_select %p53, %s54, %s55
      %p59 = pneg %p53
      %p60 = scmp.eq.s32.totalorder %s18, 7
      %p61 = por %p59, %p60
      %p62 = scmp.ne.s32.totalorder %s54, %s57
      %p63 = scmp.eq.s32.totalorder %s18, 0
      %p64 = por %p62, %p63
      %p65 = scmp.ne.s32.totalorder %s54, %s57
      %p66 = scmp.eq.s32.totalorder %s23, 7
      %p67 = por %p65, %p66
      %p68 = scmp.ne.s32.totalorder %s57, %s58
      %p69 = scmp.eq.s32.totalorder %s23, 0
      %p70 = por %p68, %p69
      %p71 = scmp.ne.s32.totalorder %s57, %s58
      %p72 = scmp.eq.s32.totalorder %s24, 7
      %p73 = por %p71, %p72
      %p75 = scmp.ne.s32.totalorder %s58, %s74
      %p76 = scmp.eq.s32.totalorder %s24, 0
      %p77 = por %p75, %p76
      %s79 = sadd.s32 %s78, 1
      %p82 = scmp.eq.s32.totalorder %s18, 7
      %p83 = scmp.ne.s32.totalorder %s78, %s80
      %p84 = scmp.eq.s32.totalorder %s18, 0
      %p85 = por %p83, %p84
      %p86 = scmp.ne.s32.totalorder %s78, %s80
      %p87 = scmp.eq.s32.totalorder %s23, 7
      %p88 = por %p86, %p87
      %p89 = scmp.ne.s32.totalorder %s80, %s81
      %p90 = scmp.eq.s32.totalorder %s23, 0
      %p91 = por %p89, %p90
      %p92 = scmp.ne.s32.totalorder %s80, %s81
      %p93 = scmp.eq.s32.totalorder %s24, 7
      %p94 = por %p92, %p93
      %p96 = scmp.ne.s32.totalorder %s81, %s95
      %p97 = scmp.eq.s32.totalorder %s24, 0
      %p98 = por %p96, %p97
      %s100 = sadd.s32 %s99, 1
      %p103 = scmp.eq.s32.totalorder %s18, 7
      %p104 = scmp.ne.s32.totalorder %s99, %s101
      %p105 = scmp.eq.s32.totalorder %s18, 0
      %p106 = por %p104, %p105
      %p107 = scmp.ne.s32.totalorder %s99, %s101
      %p108 = scmp.eq.s32.totalorder %s23, 7
      %p109 = por %p107, %p108
      %p110 = scmp.ne.s32.totalorder %s101, %s102
      %p111 = scmp.eq.s32.totalorder %s23, 0
      %p112 = por %p110, %p111
      %p113 = scmp.ne.s32.totalorder %s101, %s102
      %p114 = scmp.eq.s32.totalorder %s24, 7
      %p115 = por %p113, %p114
      %p117 = scmp.ne.s32.totalorder %s102, %s116
      %p118 = scmp.eq.s32.totalorder %s24, 0
      %p119 = por %p117, %p118
      %s121 = sadd.s32 %s120, 1
      %p124 = scmp.eq.s32.totalorder %s18, 7
      %p125 = scmp.ne.s32.totalorder %s120, %s122
      %p126 = scmp.eq.s32.totalorder %s18, 0
      %p127 = por %p125, %p126
      %p128 = scmp.ne.s32.totalorder %s120, %s122
      %p129 = scmp.eq.s32.totalorder %s23, 7
      %p130 = por %p128, %p129
      %p131 = scmp.ne.s32.totalorder %s122, %s123
      %p132 = scmp.eq.s32.totalorder %s23, 0
      %p133 = por %p131, %p132
      %p134 = scmp.ne.s32.totalorder %s122, %s123
      %p135 = scmp.eq.s32.totalorder %s24, 7
      %p136 = por %p134, %p135
      %p138 = scmp.ne.s32.totalorder %s123, %s137
      %p139 = scmp.eq.s32.totalorder %s24, 0
      %p140 = por %p138, %p139
      %s142 = sadd.s32 %s141, 1
      %p145 = scmp.eq.s32.totalorder %s18, 7
      %p146 = scmp.ne.s32.totalorder %s141, %s143
      %p147 = scmp.eq.s32.totalorder %s18, 0
      %p148 = por %p146, %p147
      %p149 = scmp.ne.s32.totalorder %s141, %s143
      %p150 = scmp.eq.s32.totalorder %s23, 7
      %p151 = por %p149, %p150
      %p152 = scmp.ne.s32.totalorder %s143, %s144
      %p153 = scmp.eq.s32.totalorder %s23, 0
      %p154 = por %p152, %p153
      %p155 = scmp.ne.s32.totalorder %s143, %s144
      %p156 = scmp.eq.s32.totalorder %s24, 7
      %p157 = por %p155, %p156
      %p159 = scmp.ne.s32.totalorder %s144, %s158
      %p160 = scmp.eq.s32.totalorder %s24, 0
      %p161 = por %p159, %p160
      %s163 = sadd.s32 %s162, 1
      %p166 = scmp.eq.s32.totalorder %s18, 7
      %p167 = scmp.ne.s32.totalorder %s162, %s164
      %p168 = scmp.eq.s32.totalorder %s18, 0
      %p169 = por %p167, %p168
      %p170 = scmp.ne.s32.totalorder %s162, %s164
      %p171 = scmp.eq.s32.totalorder %s23, 7
      %p172 = por %p170, %p171
      %p173 = scmp.ne.s32.totalorder %s164, %s165
      %p174 = scmp.eq.s32.totalorder %s23, 0
      %p175 = por %p173, %p174
      %p176 = scmp.ne.s32.totalorder %s164, %s165
      %p177 = scmp.eq.s32.totalorder %s24, 7
      %p178 = por %p176, %p177
      %p180 = scmp.ne.s32.totalorder %s165, %s179
      %p181 = scmp.eq.s32.totalorder %s24, 0
      %p182 = por %p180, %p181
      %s183 = ssub.s32 %s18, %s25
      %p184 = scmp.eq.s32.totalorder %s183, 0
      %s186 = sadd.s32 %s185, 1
      %s187 = scalar_select %p184, %s185, %s186
      %p190 = pneg %p184
      %p191 = scmp.eq.s32.totalorder %s18, 7
      %p192 = por %p190, %p191
      %p193 = scmp.ne.s32.totalorder %s185, %s188
      %p194 = scmp.eq.s32.totalorder %s18, 0
      %p195 = por %p193, %p194
      %p196 = scmp.ne.s32.totalorder %s185, %s188
      %p197 = scmp.eq.s32.totalorder %s23, 7
      %p198 = por %p196, %p197
      %p199 = scmp.ne.s32.totalorder %s188, %s189
      %p200 = scmp.eq.s32.totalorder %s23, 0
      %p201 = por %p199, %p200
      %p202 = scmp.ne.s32.totalorder %s188, %s189
      %p203 = scmp.eq.s32.totalorder %s24, 7
      %p204 = por %p202, %p203
      %p206 = scmp.ne.s32.totalorder %s189, %s205
      %p207 = scmp.eq.s32.totalorder %s24, 0
      %p208 = por %p206, %p207
      %s209 = ssub.s32 %s18, %s25
      %p210 = scmp.eq.s32.totalorder %s209, 0
      %s212 = sadd.s32 %s211, 1
      %s213 = scalar_select %p210, %s211, %s212
      %p216 = pneg %p210
      %p217 = scmp.eq.s32.totalorder %s18, 7
      %p218 = por %p216, %p217
      %p219 = scmp.ne.s32.totalorder %s211, %s214
      %p220 = scmp.eq.s32.totalorder %s18, 0
      %p221 = por %p219, %p220
      %p222 = scmp.ne.s32.totalorder %s211, %s214
      %p223 = scmp.eq.s32.totalorder %s23, 7
      %p224 = por %p222, %p223
      %p225 = scmp.ne.s32.totalorder %s214, %s215
      %p226 = scmp.eq.s32.totalorder %s23, 0
      %p227 = por %p225, %p226
      %p228 = scmp.ne.s32.totalorder %s214, %s215
      %p229 = scmp.eq.s32.totalorder %s24, 7
      %p230 = por %p228, %p229
      %p232 = scmp.ne.s32.totalorder %s215, %s231
      %p233 = scmp.eq.s32.totalorder %s24, 0
      %p234 = por %p232, %p233
      %p235 = scmp.le.s32.totalorder 1, %s18
      %p236 = scmp.lt.s32.totalorder %s18, 9
      %p237 = pnand %p235, %p236
      %p238 = pneg %p237
      // Predicated region
      $region9: #{aemtrnn_rollout.1} parent=5 // pred_check
        _
      $region10: #{aemtrnn_rollout.1} parent=5 // pred_check_branch
        %240 = sbr.rel (%p237) target = $region12
      $region11: #{aemtrnn_rollout.1} parent=5 // pred_region
        %s241 = ssub.s32 %s18, 1
        // Predicated region
        $region13: #{aemtrnn_rollout.1} parent=11 // pred_check
          %p242 = pneg %p91
        $region14: #{aemtrnn_rollout.1} parent=11 // pred_check_branch
          %244 = sbr.rel (%p242) target = $region16
        $region15: #{aemtrnn_rollout.1} parent=11 // pred_region
          _
        $region16: #{aemtrnn_rollout.1} parent=11 // pred_fallthru
          _
        // Predicated region
        $region17: #{aemtrnn_rollout.1} parent=11 // pred_check
          %p245 = pneg %p112
        $region18: #{aemtrnn_rollout.1} parent=11 // pred_check_branch
          %247 = sbr.rel (%p245) target = $region20
        $region19: #{aemtrnn_rollout.1} parent=11 // pred_region
          %s249 = ssub.s32 43008, 43008
          %250 = vsyncadd [#allocation5], %s249
          %s251 = sshll.u32 [#allocation4], 4
          %s252 = int_to_ptr.vmem [resolvable:$true] %s251
          %257 = dma.hbm_to_vmem [thread:$0]  %s3, 43008, %s252, [#allocation5], 448, 448, 28
        $region20: #{aemtrnn_rollout.1} parent=11 // pred_fallthru
          _
        // Predicated region
        $region21: #{aemtrnn_rollout.1} parent=11 // pred_check
          %p258 = pneg %p133
        $region22: #{aemtrnn_rollout.1} parent=11 // pred_check_branch
          %260 = sbr.rel (%p258) target = $region24
        $region23: #{aemtrnn_rollout.1} parent=11 // pred_region
          %s262 = ssub.s32 49152, 49152
          %263 = vsyncadd [#allocation7], %s262
          %s264 = sshll.u32 [#allocation6], 4
          %s265 = int_to_ptr.vmem [resolvable:$true] %s264
          %270 = dma.hbm_to_vmem [thread:$0]  %s4, 49152, %s265, [#allocation7], 768, 768, 48
        $region24: #{aemtrnn_rollout.1} parent=11 // pred_fallthru
          _
        // Predicated region
        $region25: #{aemtrnn_rollout.1} parent=11 // pred_check
          %p271 = pneg %p154
        $region26: #{aemtrnn_rollout.1} parent=11 // pred_check_branch
          %273 = sbr.rel (%p271) target = $region28
        $region27: #{aemtrnn_rollout.1} parent=11 // pred_region
          %s275 = ssub.s32 8192, 8192
          %276 = vsyncadd [#allocation7], %s275
          %s277 = sshll.u32 [#allocation8], 4
          %s278 = int_to_ptr.vmem [resolvable:$true] %s277
          %283 = dma.hbm_to_vmem [thread:$0]  %s5, 8192, %s278, [#allocation7], 64, 64, 4
        $region28: #{aemtrnn_rollout.1} parent=11 // pred_fallthru
          _
        // Predicated region
        $region29: #{aemtrnn_rollout.1} parent=11 // pred_check
          %p284 = pneg %p175
        $region30: #{aemtrnn_rollout.1} parent=11 // pred_check_branch
          %286 = sbr.rel (%p284) target = $region32
        $region31: #{aemtrnn_rollout.1} parent=11 // pred_region
          %s288 = ssub.s32 400, 400
          %289 = vsyncadd [#allocation10], %s288
          %s291 = sshll.u32 [#allocation9], 4
          %s292 = int_to_ptr.vmem [resolvable:$true] %s291
          %294 = dma.hbm_to_vmem [thread:$0]  %s6, 400, %s292, [#allocation10]
        $region32: #{aemtrnn_rollout.1} parent=11 // pred_fallthru
          _
      $region12: #{aemtrnn_rollout.1} parent=5 // pred_fallthru
        _
      %p295 = scmp.lt.s32.totalorder %s18, 8
      // Predicated region
      $region33: #{aemtrnn_rollout.1} parent=5 // pred_check
        %p296 = pneg %p295
      $region34: #{aemtrnn_rollout.1} parent=5 // pred_check_branch
        %298 = sbr.rel (%p296) target = $region36
      $region35: #{aemtrnn_rollout.1} parent=5 // pred_region
        // Predicated region
        $region37: #{aemtrnn_rollout.1} parent=35 // pred_check
          %p299 = pneg %p38
        $region38: #{aemtrnn_rollout.1} parent=35 // pred_check_branch
          %301 = sbr.rel (%p299) target = $region40
        $region39: #{aemtrnn_rollout.1} parent=35 // pred_region
          %p302 = scmp.lt.s32.totalorder %s18, 7
          %s303 = scalar_select %p302, %s18, 7
          %s304 = smul.addr %s303, 6
          %s305 = smul.addr %s304, 4
          %s306 = scalar_lea.vmem %s0, %s305
        $region40: #{aemtrnn_rollout.1} parent=35 // pred_fallthru
          _
        // Predicated region
        $region41: #{aemtrnn_rollout.1} parent=35 // pred_check
          %p307 = pneg %p64
        $region42: #{aemtrnn_rollout.1} parent=35 // pred_check_branch
          %309 = sbr.rel (%p307) target = $region44
        $region43: #{aemtrnn_rollout.1} parent=35 // pred_region
          %p310 = scmp.lt.s32.totalorder %s18, 7
          %s311 = scalar_select %p310, %s18, 7
          %s312 = smul.addr %s311, 4
          %s313 = scalar_lea.vmem %s1, %s312
        $region44: #{aemtrnn_rollout.1} parent=35 // pred_fallthru
          _
      $region36: #{aemtrnn_rollout.1} parent=5 // pred_fallthru
        _
      %p314 = scmp.le.s32.totalorder 1, %s18
      %p315 = scmp.lt.s32.totalorder %s18, 9
      %p316 = pnand %p314, %p315
      %p317 = pneg %p316
      // Predicated region
      $region45: #{aemtrnn_rollout.1} parent=5 // pred_check
        _
      $region46: #{aemtrnn_rollout.1} parent=5 // pred_check_branch
        %319 = sbr.rel (%p316) target = $region48
      $region47: #{aemtrnn_rollout.1} parent=5 // pred_region
        %s320 = ssub.s32 %s18, 1
        // Predicated region
        $region49: #{aemtrnn_rollout.1} parent=47 // pred_check
          %p321 = pneg %p112
        $region50: #{aemtrnn_rollout.1} parent=47 // pred_check_branch
          %323 = sbr.rel (%p321) target = $region52
        $region51: #{aemtrnn_rollout.1} parent=47 // pred_region
          %324 = dma.done [#allocation5], 43008
        $region52: #{aemtrnn_rollout.1} parent=47 // pred_fallthru
          _
        // Predicated region
        $region53: #{aemtrnn_rollout.1} parent=47 // pred_check
          %p325 = pneg %p133
        $region54: #{aemtrnn_rollout.1} parent=47 // pred_check_branch
          %327 = sbr.rel (%p325) target = $region56
        $region55: #{aemtrnn_rollout.1} parent=47 // pred_region
          %328 = dma.done [#allocation7], 49152
        $region56: #{aemtrnn_rollout.1} parent=47 // pred_fallthru
          _
        // Predicated region
        $region57: #{aemtrnn_rollout.1} parent=47 // pred_check
          %p329 = pneg %p154
        $region58: #{aemtrnn_rollout.1} parent=47 // pred_check_branch
          %331 = sbr.rel (%p329) target = $region60
        $region59: #{aemtrnn_rollout.1} parent=47 // pred_region
          %332 = dma.done [#allocation7], 8192
        $region60: #{aemtrnn_rollout.1} parent=47 // pred_fallthru
          _
        // Predicated region
        $region61: #{aemtrnn_rollout.1} parent=47 // pred_check
          %p333 = pneg %p175
        $region62: #{aemtrnn_rollout.1} parent=47 // pred_check_branch
          %335 = sbr.rel (%p333) target = $region64
        $region63: #{aemtrnn_rollout.1} parent=47 // pred_region
          %336 = dma.done [#allocation10], 400
        $region64: #{aemtrnn_rollout.1} parent=47 // pred_fallthru
          _
        %p337 = scmp.lt.s32.totalorder %s23, 7
        %s338 = scalar_select %p337, %s23, 7
        %s339 = smul.addr %s338, 6
        %s340 = smul.addr %s339, 4
        %s341 = scalar_lea.vmem %s0, %s340
        %p342 = pneg %p44
        %p343 = pneg %p41
        %p344 = scmp.lt.s32.totalorder %s23, 7
        %s345 = scalar_select %p344, %s23, 7
        %s346 = smul.addr %s345, 4
        %s347 = scalar_lea.vmem %s1, %s346
        %p348 = pneg %p70
        %p349 = pneg %p67
        %p350 = pneg %p91
        %p351 = pneg %p88
        %p352 = pneg %p112
        %p353 = pneg %p109
        %p354 = pneg %p133
        %p355 = pneg %p130
        %p356 = pneg %p154
        %p357 = pneg %p151
        %p358 = pneg %p175
        %p359 = pneg %p172
        %p360 = pneg %p201
        %p361 = pneg %p198
        %p362 = scmp.lt.s32.totalorder %s23, 7
        %s363 = scalar_select %p362, %s23, 7
        %s364 = smul.addr %s363, 6
        %s365 = smul.addr %s364, 8
        %s366 = scalar_lea.vmem %s7, %s365
        %p367 = pneg %p227
        %p368 = pneg %p224
        %p369 = scmp.lt.s32.totalorder %s23, 7
        %s370 = scalar_select %p369, %s23, 7
        %s371 = smul.addr %s370, 3
        %s372 = smul.addr %s371, 8
        %s373 = scalar_lea.vmem %s8, %s372
        %p374 = scmp.lt.s32.totalorder %s23, 7
        %s375 = scalar_select %p374, %s23, 7
        %s376 = smul.addr %s375, 6
        %s377 = smul.addr %s376, 4
        %s378 = scalar_lea.vmem %s0, %s377
        %p379 = scmp.lt.s32.totalorder %s23, 7
        %s380 = scalar_select %p379, %s23, 7
        %s381 = smul.addr %s380, 4
        %s382 = scalar_lea.vmem %s1, %s381
        %p383 = scmp.lt.s32.totalorder %s23, 7
        %s384 = scalar_select %p383, %s23, 7
        %s385 = smul.addr %s384, 6
        %s386 = smul.addr %s385, 8
        %s387 = scalar_lea.vmem %s7, %s386
        %p388 = scmp.lt.s32.totalorder %s23, 7
        %s389 = scalar_select %p388, %s23, 7
        %s390 = smul.addr %s389, 3
        %s391 = smul.addr %s390, 8
        %s392 = scalar_lea.vmem %s8, %s391
        %p394 = scmp.eq.s32.totalorder %s23, 0
        // Predicated region
        $region65: #{aemtrnn_rollout.1} parent=47 // pred_check
          %p395 = pneg %p394
        $region66: #{aemtrnn_rollout.1} parent=47 // pred_check_branch
          %397 = sbr.rel (%p395) target = $region68
        $region67: #{aemtrnn_rollout.1} parent=47 // pred_region
          %v398 = vld [vmem:[%s2] sm:$0xff]
          %399 = vst [vmem:[#allocation2] sm:$0xff] %v398
          %v400 = vld [vmem:[%s2 + $0x8] sm:$0xff]
          %401 = vst [vmem:[#allocation3] sm:$0xff] %v400
        $region68: #{aemtrnn_rollout.1} parent=47 // pred_fallthru
          _
        %v402 = vld [vmem:[%s378] sm:$0xff]
        %v403 = vld [vmem:[%s378 + $0x8] sm:$0xff]
        %v404 = vld [vmem:[%s378 + $0x10] sm:$0xff]
        %v405 = vld [vmem:[#allocation4] sm:$0xff]
        %v406 = vld [vmem:[#allocation4 + $0x8] sm:$0xff]
        %v407 = vld [vmem:[#allocation4 + $0x1c] sm:$0xff]
        %v408 = vld [vmem:[#allocation4 + $0x24] sm:$0xff]
        %v409 = vld [vmem:[#allocation4 + $0x38] sm:$0xff]
        %v410 = vld [vmem:[#allocation4 + $0x40] sm:$0xff]
        %v411 = vld [vmem:[#allocation4 + $0x54] sm:$0xff]
        %v412 = vld [vmem:[#allocation4 + $0x5c] sm:$0xff]
        %v413 = vld [vmem:[#allocation4 + $0x70] sm:$0xff]
        %v414 = vld [vmem:[#allocation4 + $0x78] sm:$0xff]
        %v415 = vld [vmem:[#allocation4 + $0x8c] sm:$0xff]
        %v416 = vld [vmem:[#allocation4 + $0x94] sm:$0xff]
        %v417 = vld [vmem:[#allocation4 + $0xa8] sm:$0xff]
        %v418 = vld [vmem:[#allocation4 + $0xb0] sm:$0xff]
        %v419 = vld [vmem:[#allocation4 + $0xc4] sm:$0xff]
        %v420 = vld [vmem:[#allocation4 + $0xcc] sm:$0xff]
        %v421 = vld [vmem:[#allocation4 + $0xe0] sm:$0xff]
        %v422 = vld [vmem:[#allocation4 + $0xe8] sm:$0xff]
        %v423 = vld [vmem:[#allocation4 + $0xfc] sm:$0xff]
        %v424 = vld [vmem:[#allocation4 + $0x104] sm:$0xff]
        %v425 = vld [vmem:[#allocation4 + $0x118] sm:$0xff]
        %v426 = vld [vmem:[#allocation4 + $0x120] sm:$0xff]
        %v427 = vld [vmem:[#allocation4 + $0x134] sm:$0xff]
        %v428 = vld [vmem:[#allocation4 + $0x13c] sm:$0xff]
        %v429 = vld [vmem:[#allocation4 + $0x150] sm:$0xff]
        %v430 = vld [vmem:[#allocation4 + $0x158] sm:$0xff]
        %v431 = vld [vmem:[#allocation4 + $0x16c] sm:$0xff]
        %v432 = vld [vmem:[#allocation4 + $0x174] sm:$0xff]
        %v433 = vld [vmem:[#allocation4 + $0x188] sm:$0xff]
        %v434 = vld [vmem:[#allocation4 + $0x190] sm:$0xff]
        %v435 = vld [vmem:[#allocation4 + $0x1a4] sm:$0xff]
        %v436 = vld [vmem:[#allocation4 + $0x1ac] sm:$0xff]
        %v437 = vld [vmem:[#allocation4 + $0x1c0] sm:$0xff]
        %v438 = vld [vmem:[#allocation4 + $0x1c8] sm:$0xff]
        %v439 = vld [vmem:[#allocation4 + $0x1dc] sm:$0xff]
        %v440 = vld [vmem:[#allocation4 + $0x1e4] sm:$0xff]
        %v441 = vld [vmem:[#allocation4 + $0x1f8] sm:$0xff]
        %v442 = vld [vmem:[#allocation4 + $0x200] sm:$0xff]
        %v443 = vld [vmem:[#allocation4 + $0x214] sm:$0xff]
        %v444 = vld [vmem:[#allocation4 + $0x21c] sm:$0xff]
        %v445 = vld [vmem:[#allocation4 + $0x230] sm:$0xff]
        %v446 = vld [vmem:[#allocation4 + $0x238] sm:$0xff]
        %v447 = vld [vmem:[#allocation4 + $0x24c] sm:$0xff]
        %v448 = vld [vmem:[#allocation4 + $0x254] sm:$0xff]
        %v449 = vld [vmem:[#allocation4 + $0x268] sm:$0xff]
        %v450 = vld [vmem:[#allocation4 + $0x270] sm:$0xff]
        %v451 = vld [vmem:[#allocation4 + $0x284] sm:$0xff]
        %v452 = vld [vmem:[#allocation4 + $0x28c] sm:$0xff]
        %v453 = vld [vmem:[#allocation4 + $0x2a0] sm:$0xff]
        %v454 = vld [vmem:[#allocation4 + $0x2a8] sm:$0xff]
        %v455 = vld [vmem:[#allocation4 + $0x2bc] sm:$0xff]
        %v456 = vld [vmem:[#allocation4 + $0x2c4] sm:$0xff]
        %v457 = vld [vmem:[#allocation4 + $0x2d8] sm:$0xff]
        %v458 = vld [vmem:[#allocation4 + $0x2e0] sm:$0xff]
        %v459 = vld [vmem:[#allocation4 + $0x2f4] sm:$0xff]
        %v460 = vld [vmem:[#allocation4 + $0x2fc] sm:$0xff]
        %v461 = vld [vmem:[#allocation4 + $0x310] sm:$0xff]
        %v462 = vld [vmem:[#allocation4 + $0x318] sm:$0xff]
        %v463 = vld [vmem:[#allocation4 + $0x32c] sm:$0xff]
        %v464 = vld [vmem:[#allocation4 + $0x334] sm:$0xff]
        %v465 = vld [vmem:[#allocation4 + $0x348] sm:$0xff]
        %v466 = vld [vmem:[#allocation4 + $0x350] sm:$0xff]
        %v467 = vld [vmem:[#allocation4 + $0x364] sm:$0xff]
        %v468 = vld [vmem:[#allocation4 + $0x36c] sm:$0xff]
        %v469 = vld [vmem:[#allocation4 + $0x380] sm:$0xff]
        %v470 = vld [vmem:[#allocation4 + $0x388] sm:$0xff]
        %v471 = vld [vmem:[#allocation4 + $0x39c] sm:$0xff]
        %v472 = vld [vmem:[#allocation4 + $0x3a4] sm:$0xff]
        %v473 = vld [vmem:[#allocation4 + $0x3b8] sm:$0xff]
        %v474 = vld [vmem:[#allocation4 + $0x3c0] sm:$0xff]
        %v475 = vld [vmem:[#allocation4 + $0x3d4] sm:$0xff]
        %v476 = vld [vmem:[#allocation4 + $0x3dc] sm:$0xff]
        %v477 = vld [vmem:[#allocation4 + $0x3f0] sm:$0xff]
        %v478 = vld [vmem:[#allocation4 + $0x3f8] sm:$0xff]
        %v479 = vld [vmem:[#allocation4 + $0x40c] sm:$0xff]
        %v480 = vld [vmem:[#allocation4 + $0x414] sm:$0xff]
        %v481 = vld [vmem:[#allocation4 + $0x428] sm:$0xff]
        %v482 = vld [vmem:[#allocation4 + $0x430] sm:$0xff]
        %v483 = vld [vmem:[#allocation4 + $0x444] sm:$0xff]
        %v484 = vld [vmem:[#allocation4 + $0x44c] sm:$0xff]
        %v485 = vld [vmem:[#allocation4 + $0x460] sm:$0xff]
        %v486 = vld [vmem:[#allocation4 + $0x468] sm:$0xff]
        %v487 = vld [vmem:[#allocation4 + $0x47c] sm:$0xff]
        %v488 = vld [vmem:[#allocation4 + $0x484] sm:$0xff]
        %v489 = vld [vmem:[#allocation4 + $0x498] sm:$0xff]
        %v490 = vld [vmem:[#allocation4 + $0x4a0] sm:$0xff]
        %v491 = vld [vmem:[#allocation4 + $0x4b4] sm:$0xff]
        %v492 = vld [vmem:[#allocation4 + $0x4bc] sm:$0xff]
        %v493 = vld [vmem:[#allocation4 + $0x4d0] sm:$0xff]
        %v494 = vld [vmem:[#allocation4 + $0x4d8] sm:$0xff]
        %v495 = vld [vmem:[#allocation4 + $0x4ec] sm:$0xff]
        %v496 = vld [vmem:[#allocation4 + $0x4f4] sm:$0xff]
        %v497 = vld [vmem:[#allocation4 + $0x508] sm:$0xff]
        %v498 = vld [vmem:[#allocation4 + $0x510] sm:$0xff]
        %v499 = vld [vmem:[#allocation4 + $0x524] sm:$0xff]
        %v500 = vld [vmem:[#allocation4 + $0x52c] sm:$0xff]
        %v501 = vld [vmem:[#allocation4 + $0x540] sm:$0xff]
        %v502 = vld [vmem:[#allocation4 + $0x548] sm:$0xff]
        %v503 = vld [vmem:[#allocation4 + $0x55c] sm:$0xff]
        %v504 = vld [vmem:[#allocation4 + $0x564] sm:$0xff]
        %v505 = vld [vmem:[#allocation4 + $0x578] sm:$0xff]
        %v506 = vld [vmem:[#allocation4 + $0x580] sm:$0xff]
        %v507 = vld [vmem:[#allocation4 + $0x594] sm:$0xff]
        %v508 = vld [vmem:[#allocation4 + $0x59c] sm:$0xff]
        %v509 = vld [vmem:[#allocation4 + $0x5b0] sm:$0xff]
        %v510 = vld [vmem:[#allocation4 + $0x5b8] sm:$0xff]
        %v511 = vld [vmem:[#allocation4 + $0x5cc] sm:$0xff]
        %v512 = vld [vmem:[#allocation4 + $0x5d4] sm:$0xff]
        %v513 = vld [vmem:[#allocation4 + $0x5e8] sm:$0xff]
        %v514 = vld [vmem:[#allocation4 + $0x5f0] sm:$0xff]
        %v515 = vld [vmem:[#allocation4 + $0x604] sm:$0xff]
        %v516 = vld [vmem:[#allocation4 + $0x60c] sm:$0xff]
        %v517 = vld [vmem:[#allocation4 + $0x620] sm:$0xff]
        %v518 = vld [vmem:[#allocation4 + $0x628] sm:$0xff]
        %v519 = vld [vmem:[#allocation4 + $0x63c] sm:$0xff]
        %v520 = vld [vmem:[#allocation4 + $0x644] sm:$0xff]
        %v521 = vld [vmem:[#allocation4 + $0x658] sm:$0xff]
        %v522 = vld [vmem:[#allocation4 + $0x660] sm:$0xff]
        %v523 = vld [vmem:[#allocation4 + $0x674] sm:$0xff]
        %v524 = vld [vmem:[#allocation4 + $0x67c] sm:$0xff]
        %v525 = vld [vmem:[#allocation4 + $0x690] sm:$0xff]
        %v526 = vld [vmem:[#allocation4 + $0x698] sm:$0xff]
        %v527 = vld [vmem:[#allocation4 + $0x6ac] sm:$0xff]
        %v528 = vld [vmem:[#allocation4 + $0x6b4] sm:$0xff]
        %v529 = vld [vmem:[#allocation4 + $0x6c8] sm:$0xff]
        %v530 = vld [vmem:[#allocation4 + $0x6d0] sm:$0xff]
        %v531 = vld [vmem:[#allocation4 + $0x6e4] sm:$0xff]
        %v532 = vld [vmem:[#allocation4 + $0x6ec] sm:$0xff]
        %v533 = vld [vmem:[#allocation4 + $0x700] sm:$0xff]
        %v534 = vld [vmem:[#allocation4 + $0x708] sm:$0xff]
        %v535 = vld [vmem:[#allocation4 + $0x71c] sm:$0xff]
        %v536 = vld [vmem:[#allocation4 + $0x724] sm:$0xff]
        %v537 = vld [vmem:[#allocation4 + $0x738] sm:$0xff]
        %v538 = vld [vmem:[#allocation4 + $0x740] sm:$0xff]
        %v539 = vld [vmem:[#allocation4 + $0x754] sm:$0xff]
        %v540 = vld [vmem:[#allocation4 + $0x75c] sm:$0xff]
        %v541 = vld [vmem:[#allocation4 + $0x770] sm:$0xff]
        %v542 = vld [vmem:[#allocation4 + $0x778] sm:$0xff]
        %v543 = vld [vmem:[#allocation4 + $0x78c] sm:$0xff]
        %v544 = vld [vmem:[#allocation4 + $0x794] sm:$0xff]
        %v545 = vld [vmem:[#allocation4 + $0x7a8] sm:$0xff]
        %v546 = vld [vmem:[#allocation4 + $0x7b0] sm:$0xff]
        %v547 = vld [vmem:[#allocation4 + $0x7c4] sm:$0xff]
        %v548 = vld [vmem:[#allocation4 + $0x7cc] sm:$0xff]
        %v549 = vld [vmem:[#allocation4 + $0x7e0] sm:$0xff]
        %v550 = vld [vmem:[#allocation4 + $0x7e8] sm:$0xff]
        %v551 = vld [vmem:[#allocation4 + $0x7fc] sm:$0xff]
        %v552 = vld [vmem:[#allocation4 + $0x804] sm:$0xff]
        %v553 = vld [vmem:[#allocation4 + $0x818] sm:$0xff]
        %v554 = vld [vmem:[#allocation4 + $0x820] sm:$0xff]
        %v555 = vld [vmem:[#allocation4 + $0x834] sm:$0xff]
        %v556 = vld [vmem:[#allocation4 + $0x83c] sm:$0xff]
        %v557 = vld [vmem:[#allocation4 + $0x850] sm:$0xff]
        %v558 = vld [vmem:[#allocation4 + $0x858] sm:$0xff]
        %v559 = vld [vmem:[#allocation4 + $0x86c] sm:$0xff]
        %v560 = vld [vmem:[#allocation4 + $0x874] sm:$0xff]
        %v561 = vld [vmem:[#allocation4 + $0x888] sm:$0xff]
        %v562 = vld [vmem:[#allocation4 + $0x890] sm:$0xff]
        %v563 = vld [vmem:[#allocation4 + $0x8a4] sm:$0xff]
        %v564 = vld [vmem:[#allocation4 + $0x8ac] sm:$0xff]
        %v565 = vld [vmem:[#allocation4 + $0x8c0] sm:$0xff]
        %v566 = vld [vmem:[#allocation4 + $0x8c8] sm:$0xff]
        %v567 = vld [vmem:[#allocation4 + $0x8dc] sm:$0xff]
        %v568 = vld [vmem:[#allocation4 + $0x8e4] sm:$0xff]
        %v569 = vld [vmem:[#allocation4 + $0x8f8] sm:$0xff]
        %v570 = vld [vmem:[#allocation4 + $0x900] sm:$0xff]
        %v571 = vld [vmem:[#allocation4 + $0x914] sm:$0xff]
        %v572 = vld [vmem:[#allocation4 + $0x91c] sm:$0xff]
        %v573 = vld [vmem:[#allocation4 + $0x930] sm:$0xff]
        %v574 = vld [vmem:[#allocation4 + $0x938] sm:$0xff]
        %v575 = vld [vmem:[#allocation4 + $0x94c] sm:$0xff]
        %v576 = vld [vmem:[#allocation4 + $0x954] sm:$0xff]
        %v577 = vld [vmem:[#allocation4 + $0x968] sm:$0xff]
        %v578 = vld [vmem:[#allocation4 + $0x970] sm:$0xff]
        %v579 = vld [vmem:[#allocation4 + $0x984] sm:$0xff]
        %v580 = vld [vmem:[#allocation4 + $0x98c] sm:$0xff]
        %v581 = vld [vmem:[#allocation4 + $0x9a0] sm:$0xff]
        %v582 = vld [vmem:[#allocation4 + $0x9a8] sm:$0xff]
        %v583 = vld [vmem:[#allocation4 + $0x9bc] sm:$0xff]
        %v584 = vld [vmem:[#allocation4 + $0x9c4] sm:$0xff]
        %v585 = vld [vmem:[#allocation4 + $0x9d8] sm:$0xff]
        %v586 = vld [vmem:[#allocation4 + $0x9e0] sm:$0xff]
        %v587 = vld [vmem:[#allocation4 + $0x9f4] sm:$0xff]
        %v588 = vld [vmem:[#allocation4 + $0x9fc] sm:$0xff]
        %v589 = vld [vmem:[#allocation4 + $0xa10] sm:$0xff]
        %v590 = vld [vmem:[#allocation4 + $0xa18] sm:$0xff]
        %v591 = vld [vmem:[#allocation4 + $0xa2c] sm:$0xff]
        %v592 = vld [vmem:[#allocation4 + $0xa34] sm:$0xff]
        %v593 = vld [vmem:[#allocation4 + $0xa48] sm:$0xff]
        %v594 = vld [vmem:[#allocation4 + $0xa50] sm:$0xff]
        %v595 = vld [vmem:[#allocation4 + $0xa64] sm:$0xff]
        %v596 = vld [vmem:[#allocation4 + $0xa6c] sm:$0xff]
        %v597 = vld [vmem:[#allocation9] sm:$0xf]
        %v599 = vlaneseq
        %v600 = vshrl.u32 %v599, 7
        %v601 = vsub.s32 0, %v600
        %v602 = vrot.slane %v597, %v601
        %v603 = vlaneseq
        %v604 = vshrl.u32 %v603, 7
        %v605 = vsub.s32 1, %v604
        %v606 = vrot.slane %v597, %v605
        %v607 = vlaneseq
        %v608 = vshrl.u32 %v607, 7
        %v609 = vsub.s32 2, %v608
        %v610 = vrot.slane %v597, %v609
        %v611 = vlaneseq
        %v612 = vshrl.u32 %v611, 7
        %v613 = vsub.s32 3, %v612
        %v614 = vrot.slane %v597, %v613
        %v622 = vunpack.c.l.b16 %v402
        %v623 = vunpack.c.h.b16 %v402
        %v624 = vunpack.c.l.b16 %v403
        %v625 = vunpack.c.h.b16 %v403
        %v626 = vunpack.c.l.b16 %v404
        %v627 = vunpack.c.h.b16 %v404
        %v628 = vpack.c.b16 %v622, %v622
        %v629 = vpack.c.b16 %v623, %v623
        %v630 = vpack.c.b16 %v624, %v624
        %v631 = vpack.c.b16 %v625, %v625
        %v632 = vpack.c.b16 %v626, %v626
        %v633 = vpack.c.b16 %v627, %v627
        %v832 = vunpack.c.l.b16 %v405
        %v833 = vunpack.c.h.b16 %v405
        %v834 = vunpack.c.l.b16 %v406
        %v835 = vunpack.c.h.b16 %v406
        %v836 = vunpack.c.l.b16 %v407
        %v837 = vunpack.c.h.b16 %v407
        %v838 = vunpack.c.l.b16 %v408
        %v839 = vunpack.c.h.b16 %v408
        %v840 = vunpack.c.l.b16 %v409
        %v841 = vunpack.c.h.b16 %v409
        %v842 = vunpack.c.l.b16 %v410
        %v843 = vunpack.c.h.b16 %v410
        %v844 = vunpack.c.l.b16 %v411
        %v845 = vunpack.c.h.b16 %v411
        %v846 = vunpack.c.l.b16 %v412
        %v847 = vunpack.c.h.b16 %v412
        %v848 = vunpack.c.l.b16 %v413
        %v849 = vunpack.c.h.b16 %v413
        %v850 = vunpack.c.l.b16 %v414
        %v851 = vunpack.c.h.b16 %v414
        %v852 = vunpack.c.l.b16 %v415
        %v853 = vunpack.c.h.b16 %v415
        %v854 = vunpack.c.l.b16 %v416
        %v855 = vunpack.c.h.b16 %v416
        %v856 = vunpack.c.l.b16 %v417
        %v857 = vunpack.c.h.b16 %v417
        %v858 = vunpack.c.l.b16 %v418
        %v859 = vunpack.c.h.b16 %v418
        %v860 = vunpack.c.l.b16 %v419
        %v861 = vunpack.c.h.b16 %v419
        %v862 = vunpack.c.l.b16 %v420
        %v863 = vunpack.c.h.b16 %v420
        %v864 = vunpack.c.l.b16 %v421
        %v865 = vunpack.c.h.b16 %v421
        %v866 = vunpack.c.l.b16 %v422
        %v867 = vunpack.c.h.b16 %v422
        %v868 = vunpack.c.l.b16 %v423
        %v869 = vunpack.c.h.b16 %v423
        %v870 = vunpack.c.l.b16 %v424
        %v871 = vunpack.c.h.b16 %v424
        %v872 = vunpack.c.l.b16 %v425
        %v873 = vunpack.c.h.b16 %v425
        %v874 = vunpack.c.l.b16 %v426
        %v875 = vunpack.c.h.b16 %v426
        %v876 = vunpack.c.l.b16 %v427
        %v877 = vunpack.c.h.b16 %v427
        %v878 = vunpack.c.l.b16 %v428
        %v879 = vunpack.c.h.b16 %v428
        %v880 = vunpack.c.l.b16 %v429
        %v881 = vunpack.c.h.b16 %v429
        %v882 = vunpack.c.l.b16 %v430
        %v883 = vunpack.c.h.b16 %v430
        %v884 = vunpack.c.l.b16 %v431
        %v885 = vunpack.c.h.b16 %v431
        %v886 = vunpack.c.l.b16 %v432
        %v887 = vunpack.c.h.b16 %v432
        %v888 = vunpack.c.l.b16 %v433
        %v889 = vunpack.c.h.b16 %v433
        %v890 = vunpack.c.l.b16 %v434
        %v891 = vunpack.c.h.b16 %v434
        %v892 = vunpack.c.l.b16 %v435
        %v893 = vunpack.c.h.b16 %v435
        %v894 = vunpack.c.l.b16 %v436
        %v895 = vunpack.c.h.b16 %v436
        %v896 = vunpack.c.l.b16 %v437
        %v897 = vunpack.c.h.b16 %v437
        %v898 = vunpack.c.l.b16 %v438
        %v899 = vunpack.c.h.b16 %v438
        %v900 = vunpack.c.l.b16 %v439
        %v901 = vunpack.c.h.b16 %v439
        %v902 = vunpack.c.l.b16 %v440
        %v903 = vunpack.c.h.b16 %v440
        %v904 = vunpack.c.l.b16 %v441
        %v905 = vunpack.c.h.b16 %v441
        %v906 = vunpack.c.l.b16 %v442
        %v907 = vunpack.c.h.b16 %v442
        %v908 = vunpack.c.l.b16 %v443
        %v909 = vunpack.c.h.b16 %v443
        %v910 = vunpack.c.l.b16 %v444
        %v911 = vunpack.c.h.b16 %v444
        %v912 = vunpack.c.l.b16 %v445
        %v913 = vunpack.c.h.b16 %v445
        %v914 = vunpack.c.l.b16 %v446
        %v915 = vunpack.c.h.b16 %v446
        %v916 = vunpack.c.l.b16 %v447
        %v917 = vunpack.c.h.b16 %v447
        %v918 = vunpack.c.l.b16 %v448
        %v919 = vunpack.c.h.b16 %v448
        %v920 = vunpack.c.l.b16 %v449
        %v921 = vunpack.c.h.b16 %v449
        %v922 = vunpack.c.l.b16 %v450
        %v923 = vunpack.c.h.b16 %v450
        %v924 = vunpack.c.l.b16 %v451
        %v925 = vunpack.c.h.b16 %v451
        %v926 = vunpack.c.l.b16 %v452
        %v927 = vunpack.c.h.b16 %v452
        %v928 = vunpack.c.l.b16 %v453
        %v929 = vunpack.c.h.b16 %v453
        %v930 = vunpack.c.l.b16 %v454
        %v931 = vunpack.c.h.b16 %v454
        %v932 = vunpack.c.l.b16 %v455
        %v933 = vunpack.c.h.b16 %v455
        %v934 = vunpack.c.l.b16 %v456
        %v935 = vunpack.c.h.b16 %v456
        %v936 = vunpack.c.l.b16 %v457
        %v937 = vunpack.c.h.b16 %v457
        %v938 = vunpack.c.l.b16 %v458
        %v939 = vunpack.c.h.b16 %v458
        %v940 = vunpack.c.l.b16 %v459
        %v941 = vunpack.c.h.b16 %v459
        %v942 = vunpack.c.l.b16 %v460
        %v943 = vunpack.c.h.b16 %v460
        %v944 = vunpack.c.l.b16 %v461
        %v945 = vunpack.c.h.b16 %v461
        %v946 = vunpack.c.l.b16 %v462
        %v947 = vunpack.c.h.b16 %v462
        %v948 = vunpack.c.l.b16 %v463
        %v949 = vunpack.c.h.b16 %v463
        %v950 = vunpack.c.l.b16 %v464
        %v951 = vunpack.c.h.b16 %v464
        %v952 = vunpack.c.l.b16 %v465
        %v953 = vunpack.c.h.b16 %v465
        %v954 = vunpack.c.l.b16 %v466
        %v955 = vunpack.c.h.b16 %v466
        %v956 = vunpack.c.l.b16 %v467
        %v957 = vunpack.c.h.b16 %v467
        %v958 = vunpack.c.l.b16 %v468
        %v959 = vunpack.c.h.b16 %v468
        %v960 = vunpack.c.l.b16 %v469
        %v961 = vunpack.c.h.b16 %v469
        %v962 = vunpack.c.l.b16 %v470
        %v963 = vunpack.c.h.b16 %v470
        %v964 = vunpack.c.l.b16 %v471
        %v965 = vunpack.c.h.b16 %v471
        %v966 = vunpack.c.l.b16 %v472
        %v967 = vunpack.c.h.b16 %v472
        %v968 = vunpack.c.l.b16 %v473
        %v969 = vunpack.c.h.b16 %v473
        %v970 = vunpack.c.l.b16 %v474
        %v971 = vunpack.c.h.b16 %v474
        %v972 = vunpack.c.l.b16 %v475
        %v973 = vunpack.c.h.b16 %v475
        %v974 = vunpack.c.l.b16 %v476
        %v975 = vunpack.c.h.b16 %v476
        %v976 = vunpack.c.l.b16 %v477
        %v977 = vunpack.c.h.b16 %v477
        %v978 = vunpack.c.l.b16 %v478
        %v979 = vunpack.c.h.b16 %v478
        %v980 = vunpack.c.l.b16 %v479
        %v981 = vunpack.c.h.b16 %v479
        %v982 = vunpack.c.l.b16 %v480
        %v983 = vunpack.c.h.b16 %v480
        %v984 = vunpack.c.l.b16 %v481
        %v985 = vunpack.c.h.b16 %v481
        %v986 = vunpack.c.l.b16 %v482
        %v987 = vunpack.c.h.b16 %v482
        %v988 = vunpack.c.l.b16 %v483
        %v989 = vunpack.c.h.b16 %v483
        %v990 = vunpack.c.l.b16 %v484
        %v991 = vunpack.c.h.b16 %v484
        %v992 = vunpack.c.l.b16 %v485
        %v993 = vunpack.c.h.b16 %v485
        %v994 = vunpack.c.l.b16 %v486
        %v995 = vunpack.c.h.b16 %v486
        %v996 = vunpack.c.l.b16 %v487
        %v997 = vunpack.c.h.b16 %v487
        %v998 = vunpack.c.l.b16 %v488
        %v999 = vunpack.c.h.b16 %v488
        %v1000 = vunpack.c.l.b16 %v489
        %v1001 = vunpack.c.h.b16 %v489
        %v1002 = vunpack.c.l.b16 %v490
        %v1003 = vunpack.c.h.b16 %v490
        %v1004 = vunpack.c.l.b16 %v491
        %v1005 = vunpack.c.h.b16 %v491
        %v1006 = vunpack.c.l.b16 %v492
        %v1007 = vunpack.c.h.b16 %v492
        %v1008 = vunpack.c.l.b16 %v493
        %v1009 = vunpack.c.h.b16 %v493
        %v1010 = vunpack.c.l.b16 %v494
        %v1011 = vunpack.c.h.b16 %v494
        %v1012 = vunpack.c.l.b16 %v495
        %v1013 = vunpack.c.h.b16 %v495
        %v1014 = vunpack.c.l.b16 %v496
        %v1015 = vunpack.c.h.b16 %v496
        %v1016 = vunpack.c.l.b16 %v497
        %v1017 = vunpack.c.h.b16 %v497
        %v1018 = vunpack.c.l.b16 %v498
        %v1019 = vunpack.c.h.b16 %v498
        %v1020 = vunpack.c.l.b16 %v499
        %v1021 = vunpack.c.h.b16 %v499
        %v1022 = vunpack.c.l.b16 %v500
        %v1023 = vunpack.c.h.b16 %v500
        %v1024 = vunpack.c.l.b16 %v501
        %v1025 = vunpack.c.h.b16 %v501
        %v1026 = vunpack.c.l.b16 %v502
        %v1027 = vunpack.c.h.b16 %v502
        %v1028 = vunpack.c.l.b16 %v503
        %v1029 = vunpack.c.h.b16 %v503
        %v1030 = vunpack.c.l.b16 %v504
        %v1031 = vunpack.c.h.b16 %v504
        %v1032 = vunpack.c.l.b16 %v505
        %v1033 = vunpack.c.h.b16 %v505
        %v1034 = vunpack.c.l.b16 %v506
        %v1035 = vunpack.c.h.b16 %v506
        %v1036 = vunpack.c.l.b16 %v507
        %v1037 = vunpack.c.h.b16 %v507
        %v1038 = vunpack.c.l.b16 %v508
        %v1039 = vunpack.c.h.b16 %v508
        %v1040 = vunpack.c.l.b16 %v509
        %v1041 = vunpack.c.h.b16 %v509
        %v1042 = vunpack.c.l.b16 %v510
        %v1043 = vunpack.c.h.b16 %v510
        %v1044 = vunpack.c.l.b16 %v511
        %v1045 = vunpack.c.h.b16 %v511
        %v1046 = vunpack.c.l.b16 %v512
        %v1047 = vunpack.c.h.b16 %v512
        %v1048 = vunpack.c.l.b16 %v513
        %v1049 = vunpack.c.h.b16 %v513
        %v1050 = vunpack.c.l.b16 %v514
        %v1051 = vunpack.c.h.b16 %v514
        %v1052 = vunpack.c.l.b16 %v515
        %v1053 = vunpack.c.h.b16 %v515
        %v1054 = vunpack.c.l.b16 %v516
        %v1055 = vunpack.c.h.b16 %v516
        %v1056 = vunpack.c.l.b16 %v517
        %v1057 = vunpack.c.h.b16 %v517
        %v1058 = vunpack.c.l.b16 %v518
        %v1059 = vunpack.c.h.b16 %v518
        %v1060 = vunpack.c.l.b16 %v519
        %v1061 = vunpack.c.h.b16 %v519
        %v1062 = vunpack.c.l.b16 %v520
        %v1063 = vunpack.c.h.b16 %v520
        %v1064 = vunpack.c.l.b16 %v521
        %v1065 = vunpack.c.h.b16 %v521
        %v1066 = vunpack.c.l.b16 %v522
        %v1067 = vunpack.c.h.b16 %v522
        %v1068 = vunpack.c.l.b16 %v523
        %v1069 = vunpack.c.h.b16 %v523
        %v1070 = vunpack.c.l.b16 %v524
        %v1071 = vunpack.c.h.b16 %v524
        %v1072 = vunpack.c.l.b16 %v525
        %v1073 = vunpack.c.h.b16 %v525
        %v1074 = vunpack.c.l.b16 %v526
        %v1075 = vunpack.c.h.b16 %v526
        %v1076 = vunpack.c.l.b16 %v527
        %v1077 = vunpack.c.h.b16 %v527
        %v1078 = vunpack.c.l.b16 %v528
        %v1079 = vunpack.c.h.b16 %v528
        %v1080 = vunpack.c.l.b16 %v529
        %v1081 = vunpack.c.h.b16 %v529
        %v1082 = vunpack.c.l.b16 %v530
        %v1083 = vunpack.c.h.b16 %v530
        %v1084 = vunpack.c.l.b16 %v531
        %v1085 = vunpack.c.h.b16 %v531
        %v1086 = vunpack.c.l.b16 %v532
        %v1087 = vunpack.c.h.b16 %v532
        %v1088 = vunpack.c.l.b16 %v533
        %v1089 = vunpack.c.h.b16 %v533
        %v1090 = vunpack.c.l.b16 %v534
        %v1091 = vunpack.c.h.b16 %v534
        %v1092 = vunpack.c.l.b16 %v535
        %v1093 = vunpack.c.h.b16 %v535
        %v1094 = vunpack.c.l.b16 %v536
        %v1095 = vunpack.c.h.b16 %v536
        %v1096 = vunpack.c.l.b16 %v537
        %v1097 = vunpack.c.h.b16 %v537
        %v1098 = vunpack.c.l.b16 %v538
        %v1099 = vunpack.c.h.b16 %v538
        %v1100 = vunpack.c.l.b16 %v539
        %v1101 = vunpack.c.h.b16 %v539
        %v1102 = vunpack.c.l.b16 %v540
        %v1103 = vunpack.c.h.b16 %v540
        %v1104 = vunpack.c.l.b16 %v541
        %v1105 = vunpack.c.h.b16 %v541
        %v1106 = vunpack.c.l.b16 %v542
        %v1107 = vunpack.c.h.b16 %v542
        %v1108 = vunpack.c.l.b16 %v543
        %v1109 = vunpack.c.h.b16 %v543
        %v1110 = vunpack.c.l.b16 %v544
        %v1111 = vunpack.c.h.b16 %v544
        %v1112 = vunpack.c.l.b16 %v545
        %v1113 = vunpack.c.h.b16 %v545
        %v1114 = vunpack.c.l.b16 %v546
        %v1115 = vunpack.c.h.b16 %v546
        %v1116 = vunpack.c.l.b16 %v547
        %v1117 = vunpack.c.h.b16 %v547
        %v1118 = vunpack.c.l.b16 %v548
        %v1119 = vunpack.c.h.b16 %v548
        %v1120 = vunpack.c.l.b16 %v549
        %v1121 = vunpack.c.h.b16 %v549
        %v1122 = vunpack.c.l.b16 %v550
        %v1123 = vunpack.c.h.b16 %v550
        %v1124 = vunpack.c.l.b16 %v551
        %v1125 = vunpack.c.h.b16 %v551
        %v1126 = vunpack.c.l.b16 %v552
        %v1127 = vunpack.c.h.b16 %v552
        %v1128 = vunpack.c.l.b16 %v553
        %v1129 = vunpack.c.h.b16 %v553
        %v1130 = vunpack.c.l.b16 %v554
        %v1131 = vunpack.c.h.b16 %v554
        %v1132 = vunpack.c.l.b16 %v555
        %v1133 = vunpack.c.h.b16 %v555
        %v1134 = vunpack.c.l.b16 %v556
        %v1135 = vunpack.c.h.b16 %v556
        %v1136 = vunpack.c.l.b16 %v557
        %v1137 = vunpack.c.h.b16 %v557
        %v1138 = vunpack.c.l.b16 %v558
        %v1139 = vunpack.c.h.b16 %v558
        %v1140 = vunpack.c.l.b16 %v559
        %v1141 = vunpack.c.h.b16 %v559
        %v1142 = vunpack.c.l.b16 %v560
        %v1143 = vunpack.c.h.b16 %v560
        %v1144 = vunpack.c.l.b16 %v561
        %v1145 = vunpack.c.h.b16 %v561
        %v1146 = vunpack.c.l.b16 %v562
        %v1147 = vunpack.c.h.b16 %v562
        %v1148 = vunpack.c.l.b16 %v563
        %v1149 = vunpack.c.h.b16 %v563
        %v1150 = vunpack.c.l.b16 %v564
        %v1151 = vunpack.c.h.b16 %v564
        %v1152 = vunpack.c.l.b16 %v565
        %v1153 = vunpack.c.h.b16 %v565
        %v1154 = vunpack.c.l.b16 %v566
        %v1155 = vunpack.c.h.b16 %v566
        %v1156 = vunpack.c.l.b16 %v567
        %v1157 = vunpack.c.h.b16 %v567
        %v1158 = vunpack.c.l.b16 %v568
        %v1159 = vunpack.c.h.b16 %v568
        %v1160 = vunpack.c.l.b16 %v569
        %v1161 = vunpack.c.h.b16 %v569
        %v1162 = vunpack.c.l.b16 %v570
        %v1163 = vunpack.c.h.b16 %v570
        %v1164 = vunpack.c.l.b16 %v571
        %v1165 = vunpack.c.h.b16 %v571
        %v1166 = vunpack.c.l.b16 %v572
        %v1167 = vunpack.c.h.b16 %v572
        %v1168 = vunpack.c.l.b16 %v573
        %v1169 = vunpack.c.h.b16 %v573
        %v1170 = vunpack.c.l.b16 %v574
        %v1171 = vunpack.c.h.b16 %v574
        %v1172 = vunpack.c.l.b16 %v575
        %v1173 = vunpack.c.h.b16 %v575
        %v1174 = vunpack.c.l.b16 %v576
        %v1175 = vunpack.c.h.b16 %v576
        %v1176 = vunpack.c.l.b16 %v577
        %v1177 = vunpack.c.h.b16 %v577
        %v1178 = vunpack.c.l.b16 %v578
        %v1179 = vunpack.c.h.b16 %v578
        %v1180 = vunpack.c.l.b16 %v579
        %v1181 = vunpack.c.h.b16 %v579
        %v1182 = vunpack.c.l.b16 %v580
        %v1183 = vunpack.c.h.b16 %v580
        %v1184 = vunpack.c.l.b16 %v581
        %v1185 = vunpack.c.h.b16 %v581
        %v1186 = vunpack.c.l.b16 %v582
        %v1187 = vunpack.c.h.b16 %v582
        %v1188 = vunpack.c.l.b16 %v583
        %v1189 = vunpack.c.h.b16 %v583
        %v1190 = vunpack.c.l.b16 %v584
        %v1191 = vunpack.c.h.b16 %v584
        %v1192 = vunpack.c.l.b16 %v585
        %v1193 = vunpack.c.h.b16 %v585
        %v1194 = vunpack.c.l.b16 %v586
        %v1195 = vunpack.c.h.b16 %v586
        %v1196 = vunpack.c.l.b16 %v587
        %v1197 = vunpack.c.h.b16 %v587
        %v1198 = vunpack.c.l.b16 %v588
        %v1199 = vunpack.c.h.b16 %v588
        %v1200 = vunpack.c.l.b16 %v589
        %v1201 = vunpack.c.h.b16 %v589
        %v1202 = vunpack.c.l.b16 %v590
        %v1203 = vunpack.c.h.b16 %v590
        %v1204 = vunpack.c.l.b16 %v591
        %v1205 = vunpack.c.h.b16 %v591
        %v1206 = vunpack.c.l.b16 %v592
        %v1207 = vunpack.c.h.b16 %v592
        %v1208 = vunpack.c.l.b16 %v593
        %v1209 = vunpack.c.h.b16 %v593
        %v1210 = vunpack.c.l.b16 %v594
        %v1211 = vunpack.c.h.b16 %v594
        %v1212 = vunpack.c.l.b16 %v595
        %v1213 = vunpack.c.h.b16 %v595
        %v1214 = vunpack.c.l.b16 %v596
        %v1215 = vunpack.c.h.b16 %v596
        %v1216 = vpack.c.b16 %v836, %v832
        %v1217 = vpack.c.b16 %v837, %v833
        %v1218 = vpack.c.b16 %v838, %v834
        %v1219 = vpack.c.b16 %v839, %v835
        %v1220 = vpack.c.b16 %v844, %v840
        %v1221 = vpack.c.b16 %v845, %v841
        %v1222 = vpack.c.b16 %v846, %v842
        %v1223 = vpack.c.b16 %v847, %v843
        %v1224 = vpack.c.b16 %v852, %v848
        %v1225 = vpack.c.b16 %v853, %v849
        %v1226 = vpack.c.b16 %v854, %v850
        %v1227 = vpack.c.b16 %v855, %v851
        %v1228 = vpack.c.b16 %v860, %v856
        %v1229 = vpack.c.b16 %v861, %v857
        %v1230 = vpack.c.b16 %v862, %v858
        %v1231 = vpack.c.b16 %v863, %v859
        %v1232 = vpack.c.b16 %v868, %v864
        %v1233 = vpack.c.b16 %v869, %v865
        %v1234 = vpack.c.b16 %v870, %v866
        %v1235 = vpack.c.b16 %v871, %v867
        %v1236 = vpack.c.b16 %v876, %v872
        %v1237 = vpack.c.b16 %v877, %v873
        %v1238 = vpack.c.b16 %v878, %v874
        %v1239 = vpack.c.b16 %v879, %v875
        %v1240 = vpack.c.b16 %v884, %v880
        %v1241 = vpack.c.b16 %v885, %v881
        %v1242 = vpack.c.b16 %v886, %v882
        %v1243 = vpack.c.b16 %v887, %v883
        %v1244 = vpack.c.b16 %v892, %v888
        %v1245 = vpack.c.b16 %v893, %v889
        %v1246 = vpack.c.b16 %v894, %v890
        %v1247 = vpack.c.b16 %v895, %v891
        %v1248 = vpack.c.b16 %v900, %v896
        %v1249 = vpack.c.b16 %v901, %v897
        %v1250 = vpack.c.b16 %v902, %v898
        %v1251 = vpack.c.b16 %v903, %v899
        %v1252 = vpack.c.b16 %v908, %v904
        %v1253 = vpack.c.b16 %v909, %v905
        %v1254 = vpack.c.b16 %v910, %v906
        %v1255 = vpack.c.b16 %v911, %v907
        %v1256 = vpack.c.b16 %v916, %v912
        %v1257 = vpack.c.b16 %v917, %v913
        %v1258 = vpack.c.b16 %v918, %v914
        %v1259 = vpack.c.b16 %v919, %v915
        %v1260 = vpack.c.b16 %v924, %v920
        %v1261 = vpack.c.b16 %v925, %v921
        %v1262 = vpack.c.b16 %v926, %v922
        %v1263 = vpack.c.b16 %v927, %v923
        %v1264 = vpack.c.b16 %v932, %v928
        %v1265 = vpack.c.b16 %v933, %v929
        %v1266 = vpack.c.b16 %v934, %v930
        %v1267 = vpack.c.b16 %v935, %v931
        %v1268 = vpack.c.b16 %v940, %v936
        %v1269 = vpack.c.b16 %v941, %v937
        %v1270 = vpack.c.b16 %v942, %v938
        %v1271 = vpack.c.b16 %v943, %v939
        %v1272 = vpack.c.b16 %v948, %v944
        %v1273 = vpack.c.b16 %v949, %v945
        %v1274 = vpack.c.b16 %v950, %v946
        %v1275 = vpack.c.b16 %v951, %v947
        %v1276 = vpack.c.b16 %v956, %v952
        %v1277 = vpack.c.b16 %v957, %v953
        %v1278 = vpack.c.b16 %v958, %v954
        %v1279 = vpack.c.b16 %v959, %v955
        %v1280 = vpack.c.b16 %v964, %v960
        %v1281 = vpack.c.b16 %v965, %v961
        %v1282 = vpack.c.b16 %v966, %v962
        %v1283 = vpack.c.b16 %v967, %v963
        %v1284 = vpack.c.b16 %v972, %v968
        %v1285 = vpack.c.b16 %v973, %v969
        %v1286 = vpack.c.b16 %v974, %v970
        %v1287 = vpack.c.b16 %v975, %v971
        %v1288 = vpack.c.b16 %v980, %v976
        %v1289 = vpack.c.b16 %v981, %v977
        %v1290 = vpack.c.b16 %v982, %v978
        %v1291 = vpack.c.b16 %v983, %v979
        %v1292 = vpack.c.b16 %v988, %v984
        %v1293 = vpack.c.b16 %v989, %v985
        %v1294 = vpack.c.b16 %v990, %v986
        %v1295 = vpack.c.b16 %v991, %v987
        %v1296 = vpack.c.b16 %v996, %v992
        %v1297 = vpack.c.b16 %v997, %v993
        %v1298 = vpack.c.b16 %v998, %v994
        %v1299 = vpack.c.b16 %v999, %v995
        %v1300 = vpack.c.b16 %v1004, %v1000
        %v1301 = vpack.c.b16 %v1005, %v1001
        %v1302 = vpack.c.b16 %v1006, %v1002
        %v1303 = vpack.c.b16 %v1007, %v1003
        %v1304 = vpack.c.b16 %v1012, %v1008
        %v1305 = vpack.c.b16 %v1013, %v1009
        %v1306 = vpack.c.b16 %v1014, %v1010
        %v1307 = vpack.c.b16 %v1015, %v1011
        %v1308 = vpack.c.b16 %v1020, %v1016
        %v1309 = vpack.c.b16 %v1021, %v1017
        %v1310 = vpack.c.b16 %v1022, %v1018
        %v1311 = vpack.c.b16 %v1023, %v1019
        %v1312 = vpack.c.b16 %v1028, %v1024
        %v1313 = vpack.c.b16 %v1029, %v1025
        %v1314 = vpack.c.b16 %v1030, %v1026
        %v1315 = vpack.c.b16 %v1031, %v1027
        %v1316 = vpack.c.b16 %v1036, %v1032
        %v1317 = vpack.c.b16 %v1037, %v1033
        %v1318 = vpack.c.b16 %v1038, %v1034
        %v1319 = vpack.c.b16 %v1039, %v1035
        %v1320 = vpack.c.b16 %v1044, %v1040
        %v1321 = vpack.c.b16 %v1045, %v1041
        %v1322 = vpack.c.b16 %v1046, %v1042
        %v1323 = vpack.c.b16 %v1047, %v1043
        %v1324 = vpack.c.b16 %v1052, %v1048
        %v1325 = vpack.c.b16 %v1053, %v1049
        %v1326 = vpack.c.b16 %v1054, %v1050
        %v1327 = vpack.c.b16 %v1055, %v1051
        %v1328 = vpack.c.b16 %v1060, %v1056
        %v1329 = vpack.c.b16 %v1061, %v1057
        %v1330 = vpack.c.b16 %v1062, %v1058
        %v1331 = vpack.c.b16 %v1063, %v1059
        %v1332 = vpack.c.b16 %v1068, %v1064
        %v1333 = vpack.c.b16 %v1069, %v1065
        %v1334 = vpack.c.b16 %v1070, %v1066
        %v1335 = vpack.c.b16 %v1071, %v1067
        %v1336 = vpack.c.b16 %v1076, %v1072
        %v1337 = vpack.c.b16 %v1077, %v1073
        %v1338 = vpack.c.b16 %v1078, %v1074
        %v1339 = vpack.c.b16 %v1079, %v1075
        %v1340 = vpack.c.b16 %v1084, %v1080
        %v1341 = vpack.c.b16 %v1085, %v1081
        %v1342 = vpack.c.b16 %v1086, %v1082
        %v1343 = vpack.c.b16 %v1087, %v1083
        %v1344 = vpack.c.b16 %v1092, %v1088
        %v1345 = vpack.c.b16 %v1093, %v1089
        %v1346 = vpack.c.b16 %v1094, %v1090
        %v1347 = vpack.c.b16 %v1095, %v1091
        %v1348 = vpack.c.b16 %v1100, %v1096
        %v1349 = vpack.c.b16 %v1101, %v1097
        %v1350 = vpack.c.b16 %v1102, %v1098
        %v1351 = vpack.c.b16 %v1103, %v1099
        %v1352 = vpack.c.b16 %v1108, %v1104
        %v1353 = vpack.c.b16 %v1109, %v1105
        %v1354 = vpack.c.b16 %v1110, %v1106
        %v1355 = vpack.c.b16 %v1111, %v1107
        %v1356 = vpack.c.b16 %v1116, %v1112
        %v1357 = vpack.c.b16 %v1117, %v1113
        %v1358 = vpack.c.b16 %v1118, %v1114
        %v1359 = vpack.c.b16 %v1119, %v1115
        %v1360 = vpack.c.b16 %v1124, %v1120
        %v1361 = vpack.c.b16 %v1125, %v1121
        %v1362 = vpack.c.b16 %v1126, %v1122
        %v1363 = vpack.c.b16 %v1127, %v1123
        %v1364 = vpack.c.b16 %v1132, %v1128
        %v1365 = vpack.c.b16 %v1133, %v1129
        %v1366 = vpack.c.b16 %v1134, %v1130
        %v1367 = vpack.c.b16 %v1135, %v1131
        %v1368 = vpack.c.b16 %v1140, %v1136
        %v1369 = vpack.c.b16 %v1141, %v1137
        %v1370 = vpack.c.b16 %v1142, %v1138
        %v1371 = vpack.c.b16 %v1143, %v1139
        %v1372 = vpack.c.b16 %v1148, %v1144
        %v1373 = vpack.c.b16 %v1149, %v1145
        %v1374 = vpack.c.b16 %v1150, %v1146
        %v1375 = vpack.c.b16 %v1151, %v1147
        %v1376 = vpack.c.b16 %v1156, %v1152
        %v1377 = vpack.c.b16 %v1157, %v1153
        %v1378 = vpack.c.b16 %v1158, %v1154
        %v1379 = vpack.c.b16 %v1159, %v1155
        %v1380 = vpack.c.b16 %v1164, %v1160
        %v1381 = vpack.c.b16 %v1165, %v1161
        %v1382 = vpack.c.b16 %v1166, %v1162
        %v1383 = vpack.c.b16 %v1167, %v1163
        %v1384 = vpack.c.b16 %v1172, %v1168
        %v1385 = vpack.c.b16 %v1173, %v1169
        %v1386 = vpack.c.b16 %v1174, %v1170
        %v1387 = vpack.c.b16 %v1175, %v1171
        %v1388 = vpack.c.b16 %v1180, %v1176
        %v1389 = vpack.c.b16 %v1181, %v1177
        %v1390 = vpack.c.b16 %v1182, %v1178
        %v1391 = vpack.c.b16 %v1183, %v1179
        %v1392 = vpack.c.b16 %v1188, %v1184
        %v1393 = vpack.c.b16 %v1189, %v1185
        %v1394 = vpack.c.b16 %v1190, %v1186
        %v1395 = vpack.c.b16 %v1191, %v1187
        %v1396 = vpack.c.b16 %v1196, %v1192
        %v1397 = vpack.c.b16 %v1197, %v1193
        %v1398 = vpack.c.b16 %v1198, %v1194
        %v1399 = vpack.c.b16 %v1199, %v1195
        %v1400 = vpack.c.b16 %v1204, %v1200
        %v1401 = vpack.c.b16 %v1205, %v1201
        %v1402 = vpack.c.b16 %v1206, %v1202
        %v1403 = vpack.c.b16 %v1207, %v1203
        %v1404 = vpack.c.b16 %v1212, %v1208
        %v1405 = vpack.c.b16 %v1213, %v1209
        %v1406 = vpack.c.b16 %v1214, %v1210
        %v1407 = vpack.c.b16 %v1215, %v1211
        %1600 = vmatprep.subr.bf16.mxu0 %v1217
        %1601 = vmatpush1.bf16.msra.mxu0 %v1216
        %1602 = vmatprep.subr.bf16.mxu0 %v1221
        %1603 = vmatpush1.bf16.msra.mxu0 %v1220
        %1604 = vmatprep.subr.bf16.mxu0 %v1225
        %1605 = vmatpush1.bf16.msra.mxu0 %v1224
        %1606 = vmatprep.subr.bf16.mxu0 %v1229
        %1607 = vmatpush1.bf16.msra.mxu0 %v1228
        %1608 = vmatprep.subr.bf16.mxu0 %v1233
        %1609 = vmatpush1.bf16.msra.mxu0 %v1232
        %1610 = vmatprep.subr.bf16.mxu0 %v1237
        %1611 = vmatpush1.bf16.msra.mxu0 %v1236
        %1612 = vmatprep.subr.bf16.mxu0 %v1241
        %1613 = vmatpush1.bf16.msra.mxu0 %v1240
        %1614 = vmatprep.subr.bf16.mxu0 %v1245
        %1615 = vmatpush1.bf16.msra.mxu0 %v1244
        %1616 = vmatprep.subr.bf16.mxu0 %v1249
        %1617 = vmatpush1.bf16.msra.mxu0 %v1248
        %1618 = vmatprep.subr.bf16.mxu0 %v1253
        %1619 = vmatpush1.bf16.msra.mxu0 %v1252
        %1620 = vmatprep.subr.bf16.mxu0 %v1257
        %1621 = vmatpush1.bf16.msra.mxu0 %v1256
        %1622 = vmatprep.subr.bf16.mxu0 %v1261
        %1623 = vmatpush1.bf16.msra.mxu0 %v1260
        %1624 = vmatprep.subr.bf16.mxu0 %v1265
        %1625 = vmatpush1.bf16.msra.mxu0 %v1264
        %1626 = vmatprep.subr.bf16.mxu0 %v1269
        %1627 = vmatpush1.bf16.msra.mxu0 %v1268
        %1628 = vmatprep.subr.bf16.mxu0 %v1273
        %1629 = vmatpush1.bf16.msra.mxu0 %v1272
        %1630 = vmatprep.subr.bf16.mxu0 %v1277
        %1631 = vmatpush1.bf16.msra.mxu0 %v1276
        %1632 = vmatprep.mubr.bf16.mxu0 %v629
        %1633 = vmatmul.mubr.bf16.gmra.mrb[0].mxu0 %v628
        %v1634 = vpop.f32.mrb[0].mxu0
        %v1635 = vadd.f32 %v602, %v1634
        %v1636 = vpop.f32.mrb[0].mxu0
        %v1637 = vadd.f32 %v606, %v1636
        %v1638 = vpop.f32.mrb[0].mxu0
        %v1639 = vpop.f32.mrb[0].mxu0
        %1640 = vdwg.mxu0
        %1641 = vmatprep.subr.bf16.mxu0 %v1281
        %1642 = vmatpush1.bf16.msra.mxu0 %v1280
        %1643 = vmatprep.subr.bf16.mxu0 %v1285
        %1644 = vmatpush1.bf16.msra.mxu0 %v1284
        %1645 = vmatprep.subr.bf16.mxu0 %v1289
        %1646 = vmatpush1.bf16.msra.mxu0 %v1288
        %1647 = vmatprep.subr.bf16.mxu0 %v1293
        %1648 = vmatpush1.bf16.msra.mxu0 %v1292
        %1649 = vmatprep.subr.bf16.mxu0 %v1297
        %1650 = vmatpush1.bf16.msra.mxu0 %v1296
        %1651 = vmatprep.subr.bf16.mxu0 %v1301
        %1652 = vmatpush1.bf16.msra.mxu0 %v1300
        %1653 = vmatprep.subr.bf16.mxu0 %v1305
        %1654 = vmatpush1.bf16.msra.mxu0 %v1304
        %1655 = vmatprep.subr.bf16.mxu0 %v1309
        %1656 = vmatpush1.bf16.msra.mxu0 %v1308
        %1657 = vmatprep.subr.bf16.mxu0 %v1313
        %1658 = vmatpush1.bf16.msra.mxu0 %v1312
        %1659 = vmatprep.subr.bf16.mxu0 %v1317
        %1660 = vmatpush1.bf16.msra.mxu0 %v1316
        %1661 = vmatprep.subr.bf16.mxu0 %v1321
        %1662 = vmatpush1.bf16.msra.mxu0 %v1320
        %1663 = vmatprep.subr.bf16.mxu0 %v1325
        %1664 = vmatpush1.bf16.msra.mxu0 %v1324
        %1665 = vmatprep.subr.bf16.mxu0 %v1329
        %1666 = vmatpush1.bf16.msra.mxu0 %v1328
        %1667 = vmatprep.subr.bf16.mxu0 %v1333
        %1668 = vmatpush1.bf16.msra.mxu0 %v1332
        %1669 = vmatprep.subr.bf16.mxu0 %v1337
        %1670 = vmatpush1.bf16.msra.mxu0 %v1336
        %1671 = vmatprep.subr.bf16.mxu0 %v1341
        %1672 = vmatpush1.bf16.msra.mxu0 %v1340
        %1673 = vmatprep.mubr.bf16.mxu0 %v631
        %1674 = vmatmul.mubr.bf16.gmra.mrb[0].mxu0 %v630
        %v1675 = vpop.f32.mrb[0].mxu0
        %v1676 = vadd.f32 %v1635, %v1675
        %v1677 = vpop.f32.mrb[0].mxu0
        %v1678 = vadd.f32 %v1637, %v1677
        %v1679 = vpop.f32.mrb[0].mxu0
        %v1680 = vpop.f32.mrb[0].mxu0
        %1681 = vdwg.mxu0
        %1682 = vmatprep.subr.bf16.mxu0 %v1345
        %1683 = vmatpush1.bf16.msra.mxu0 %v1344
        %1684 = vmatprep.subr.bf16.mxu0 %v1349
        %1685 = vmatpush1.bf16.msra.mxu0 %v1348
        %1686 = vmatprep.subr.bf16.mxu0 %v1353
        %1687 = vmatpush1.bf16.msra.mxu0 %v1352
        %1688 = vmatprep.subr.bf16.mxu0 %v1357
        %1689 = vmatpush1.bf16.msra.mxu0 %v1356
        %1690 = vmatprep.subr.bf16.mxu0 %v1361
        %1691 = vmatpush1.bf16.msra.mxu0 %v1360
        %1692 = vmatprep.subr.bf16.mxu0 %v1365
        %1693 = vmatpush1.bf16.msra.mxu0 %v1364
        %1694 = vmatprep.subr.bf16.mxu0 %v1369
        %1695 = vmatpush1.bf16.msra.mxu0 %v1368
        %1696 = vmatprep.subr.bf16.mxu0 %v1373
        %1697 = vmatpush1.bf16.msra.mxu0 %v1372
        %1698 = vmatprep.subr.bf16.mxu0 %v1377
        %1699 = vmatpush1.bf16.msra.mxu0 %v1376
        %1700 = vmatprep.subr.bf16.mxu0 %v1381
        %1701 = vmatpush1.bf16.msra.mxu0 %v1380
        %1702 = vmatprep.subr.bf16.mxu0 %v1385
        %1703 = vmatpush1.bf16.msra.mxu0 %v1384
        %1704 = vmatprep.subr.bf16.mxu0 %v1389
        %1705 = vmatpush1.bf16.msra.mxu0 %v1388
        %1706 = vmatprep.subr.bf16.mxu0 %v1393
        %1707 = vmatpush1.bf16.msra.mxu0 %v1392
        %1708 = vmatprep.subr.bf16.mxu0 %v1397
        %1709 = vmatpush1.bf16.msra.mxu0 %v1396
        %1710 = vmatprep.subr.bf16.mxu0 %v1401
        %1711 = vmatpush1.bf16.msra.mxu0 %v1400
        %1712 = vmatprep.subr.bf16.mxu0 %v1405
        %1713 = vmatpush1.bf16.msra.mxu0 %v1404
        %1714 = vmatprep.mubr.bf16.mxu0 %v633
        %1715 = vmatmul.mubr.bf16.gmra.mrb[0].mxu0 %v632
        %v1716 = vpop.f32.mrb[0].mxu0
        %v1717 = vadd.f32 %v1676, %v1716
        %v1718 = vpop.f32.mrb[0].mxu0
        %v1719 = vadd.f32 %v1678, %v1718
        %v1720 = vpop.f32.mrb[0].mxu0
        %v1721 = vpop.f32.mrb[0].mxu0
        %1722 = vdwg.mxu0
        %1723 = vmatprep.subr.bf16.mxu0 %v1219
        %1724 = vmatpush1.bf16.msra.mxu0 %v1218
        %1725 = vmatprep.subr.bf16.mxu0 %v1223
        %1726 = vmatpush1.bf16.msra.mxu0 %v1222
        %1727 = vmatprep.subr.bf16.mxu0 %v1227
        %1728 = vmatpush1.bf16.msra.mxu0 %v1226
        %1729 = vmatprep.subr.bf16.mxu0 %v1231
        %1730 = vmatpush1.bf16.msra.mxu0 %v1230
        %1731 = vmatprep.subr.bf16.mxu0 %v1235
        %1732 = vmatpush1.bf16.msra.mxu0 %v1234
        %1733 = vmatprep.subr.bf16.mxu0 %v1239
        %1734 = vmatpush1.bf16.msra.mxu0 %v1238
        %1735 = vmatprep.subr.bf16.mxu0 %v1243
        %1736 = vmatpush1.bf16.msra.mxu0 %v1242
        %1737 = vmatprep.subr.bf16.mxu0 %v1247
        %1738 = vmatpush1.bf16.msra.mxu0 %v1246
        %1739 = vmatprep.subr.bf16.mxu0 %v1251
        %1740 = vmatpush1.bf16.msra.mxu0 %v1250
        %1741 = vmatprep.subr.bf16.mxu0 %v1255
        %1742 = vmatpush1.bf16.msra.mxu0 %v1254
        %1743 = vmatprep.subr.bf16.mxu0 %v1259
        %1744 = vmatpush1.bf16.msra.mxu0 %v1258
        %1745 = vmatprep.subr.bf16.mxu0 %v1263
        %1746 = vmatpush1.bf16.msra.mxu0 %v1262
        %1747 = vmatprep.subr.bf16.mxu0 %v1267
        %1748 = vmatpush1.bf16.msra.mxu0 %v1266
        %1749 = vmatprep.subr.bf16.mxu0 %v1271
        %1750 = vmatpush1.bf16.msra.mxu0 %v1270
        %1751 = vmatprep.subr.bf16.mxu0 %v1275
        %1752 = vmatpush1.bf16.msra.mxu0 %v1274
        %1753 = vmatprep.subr.bf16.mxu0 %v1279
        %1754 = vmatpush1.bf16.msra.mxu0 %v1278
        %1755 = vmatprep.mubr.bf16.mxu0 %v629
        %1756 = vmatmul.mubr.bf16.gmra.mrb[0].mxu0 %v628
        %v1757 = vpop.f32.mrb[0].mxu0
        %v1758 = vadd.f32 %v610, %v1757
        %v1759 = vpop.f32.mrb[0].mxu0
        %v1760 = vadd.f32 %v614, %v1759
        %v1761 = vpop.f32.mrb[0].mxu0
        %v1762 = vpop.f32.mrb[0].mxu0
        %1763 = vdwg.mxu0
        %1764 = vmatprep.subr.bf16.mxu0 %v1283
        %1765 = vmatpush1.bf16.msra.mxu0 %v1282
        %1766 = vmatprep.subr.bf16.mxu0 %v1287
        %1767 = vmatpush1.bf16.msra.mxu0 %v1286
        %1768 = vmatprep.subr.bf16.mxu0 %v1291
        %1769 = vmatpush1.bf16.msra.mxu0 %v1290
        %1770 = vmatprep.subr.bf16.mxu0 %v1295
        %1771 = vmatpush1.bf16.msra.mxu0 %v1294
        %1772 = vmatprep.subr.bf16.mxu0 %v1299
        %1773 = vmatpush1.bf16.msra.mxu0 %v1298
        %1774 = vmatprep.subr.bf16.mxu0 %v1303
        %1775 = vmatpush1.bf16.msra.mxu0 %v1302
        %1776 = vmatprep.subr.bf16.mxu0 %v1307
        %1777 = vmatpush1.bf16.msra.mxu0 %v1306
        %1778 = vmatprep.subr.bf16.mxu0 %v1311
        %1779 = vmatpush1.bf16.msra.mxu0 %v1310
        %1780 = vmatprep.subr.bf16.mxu0 %v1315
        %1781 = vmatpush1.bf16.msra.mxu0 %v1314
        %1782 = vmatprep.subr.bf16.mxu0 %v1319
        %1783 = vmatpush1.bf16.msra.mxu0 %v1318
        %1784 = vmatprep.subr.bf16.mxu0 %v1323
        %1785 = vmatpush1.bf16.msra.mxu0 %v1322
        %1786 = vmatprep.subr.bf16.mxu0 %v1327
        %1787 = vmatpush1.bf16.msra.mxu0 %v1326
        %1788 = vmatprep.subr.bf16.mxu0 %v1331
        %1789 = vmatpush1.bf16.msra.mxu0 %v1330
        %1790 = vmatprep.subr.bf16.mxu0 %v1335
        %1791 = vmatpush1.bf16.msra.mxu0 %v1334
        %1792 = vmatprep.subr.bf16.mxu0 %v1339
        %1793 = vmatpush1.bf16.msra.mxu0 %v1338
        %1794 = vmatprep.subr.bf16.mxu0 %v1343
        %1795 = vmatpush1.bf16.msra.mxu0 %v1342
        %1796 = vmatprep.mubr.bf16.mxu0 %v631
        %1797 = vmatmul.mubr.bf16.gmra.mrb[0].mxu0 %v630
        %v1798 = vpop.f32.mrb[0].mxu0
        %v1799 = vadd.f32 %v1758, %v1798
        %v1800 = vpop.f32.mrb[0].mxu0
        %v1801 = vadd.f32 %v1760, %v1800
        %v1802 = vpop.f32.mrb[0].mxu0
        %v1803 = vpop.f32.mrb[0].mxu0
        %1804 = vdwg.mxu0
        %1805 = vmatprep.subr.bf16.mxu0 %v1347
        %1806 = vmatpush1.bf16.msra.mxu0 %v1346
        %1807 = vmatprep.subr.bf16.mxu0 %v1351
        %1808 = vmatpush1.bf16.msra.mxu0 %v1350
        %1809 = vmatprep.subr.bf16.mxu0 %v1355
        %1810 = vmatpush1.bf16.msra.mxu0 %v1354
        %1811 = vmatprep.subr.bf16.mxu0 %v1359
        %1812 = vmatpush1.bf16.msra.mxu0 %v1358
        %1813 = vmatprep.subr.bf16.mxu0 %v1363
        %1814 = vmatpush1.bf16.msra.mxu0 %v1362
        %1815 = vmatprep.subr.bf16.mxu0 %v1367
        %1816 = vmatpush1.bf16.msra.mxu0 %v1366
        %1817 = vmatprep.subr.bf16.mxu0 %v1371
        %1818 = vmatpush1.bf16.msra.mxu0 %v1370
        %1819 = vmatprep.subr.bf16.mxu0 %v1375
        %1820 = vmatpush1.bf16.msra.mxu0 %v1374
        %1821 = vmatprep.subr.bf16.mxu0 %v1379
        %1822 = vmatpush1.bf16.msra.mxu0 %v1378
        %1823 = vmatprep.subr.bf16.mxu0 %v1383
        %1824 = vmatpush1.bf16.msra.mxu0 %v1382
        %1825 = vmatprep.subr.bf16.mxu0 %v1387
        %1826 = vmatpush1.bf16.msra.mxu0 %v1386
        %1827 = vmatprep.subr.bf16.mxu0 %v1391
        %1828 = vmatpush1.bf16.msra.mxu0 %v1390
        %1829 = vmatprep.subr.bf16.mxu0 %v1395
        %1830 = vmatpush1.bf16.msra.mxu0 %v1394
        %1831 = vmatprep.subr.bf16.mxu0 %v1399
        %1832 = vmatpush1.bf16.msra.mxu0 %v1398
        %1833 = vmatprep.subr.bf16.mxu0 %v1403
        %1834 = vmatpush1.bf16.msra.mxu0 %v1402
        %1835 = vmatprep.subr.bf16.mxu0 %v1407
        %1836 = vmatpush1.bf16.msra.mxu0 %v1406
        %1837 = vmatprep.mubr.bf16.mxu0 %v633
        %1838 = vmatmul.mubr.bf16.gmra.mrb[0].mxu0 %v632
        %v1839 = vpop.f32.mrb[0].mxu0
        %v1840 = vadd.f32 %v1799, %v1839
        %v1841 = vpop.f32.mrb[0].mxu0
        %v1842 = vadd.f32 %v1801, %v1841
        %v1843 = vpop.f32.mrb[0].mxu0
        %v1844 = vpop.f32.mrb[0].mxu0
        %1845 = vdwg.mxu0
        %v1846 = vmax.f32 %v1717, 0.0
        %v1847 = vmax.f32 %v1719, 0.0
        %v1848 = vmax.f32 %v1840, 0.0
        %v1849 = vmax.f32 %v1842, 0.0
        %v1850 = vld [vmem:[#allocation4 + $0x10] sm:$0xff]
        %v1851 = vld [vmem:[#allocation4 + $0x2c] sm:$0xff]
        %v1852 = vld [vmem:[#allocation4 + $0x48] sm:$0xff]
        %v1853 = vld [vmem:[#allocation4 + $0x64] sm:$0xff]
        %v1854 = vld [vmem:[#allocation4 + $0x80] sm:$0xff]
        %v1855 = vld [vmem:[#allocation4 + $0x9c] sm:$0xff]
        %v1856 = vld [vmem:[#allocation4 + $0xb8] sm:$0xff]
        %v1857 = vld [vmem:[#allocation4 + $0xd4] sm:$0xff]
        %v1858 = vld [vmem:[#allocation4 + $0xf0] sm:$0xff]
        %v1859 = vld [vmem:[#allocation4 + $0x10c] sm:$0xff]
        %v1860 = vld [vmem:[#allocation4 + $0x128] sm:$0xff]
        %v1861 = vld [vmem:[#allocation4 + $0x144] sm:$0xff]
        %v1862 = vld [vmem:[#allocation4 + $0x160] sm:$0xff]
        %v1863 = vld [vmem:[#allocation4 + $0x17c] sm:$0xff]
        %v1864 = vld [vmem:[#allocation4 + $0x198] sm:$0xff]
        %v1865 = vld [vmem:[#allocation4 + $0x1b4] sm:$0xff]
        %v1866 = vld [vmem:[#allocation4 + $0x1d0] sm:$0xff]
        %v1867 = vld [vmem:[#allocation4 + $0x1ec] sm:$0xff]
        %v1868 = vld [vmem:[#allocation4 + $0x208] sm:$0xff]
        %v1869 = vld [vmem:[#allocation4 + $0x224] sm:$0xff]
        %v1870 = vld [vmem:[#allocation4 + $0x240] sm:$0xff]
        %v1871 = vld [vmem:[#allocation4 + $0x25c] sm:$0xff]
        %v1872 = vld [vmem:[#allocation4 + $0x278] sm:$0xff]
        %v1873 = vld [vmem:[#allocation4 + $0x294] sm:$0xff]
        %v1874 = vld [vmem:[#allocation4 + $0x2b0] sm:$0xff]
        %v1875 = vld [vmem:[#allocation4 + $0x2cc] sm:$0xff]
        %v1876 = vld [vmem:[#allocation4 + $0x2e8] sm:$0xff]
        %v1877 = vld [vmem:[#allocation4 + $0x304] sm:$0xff]
        %v1878 = vld [vmem:[#allocation4 + $0x320] sm:$0xff]
        %v1879 = vld [vmem:[#allocation4 + $0x33c] sm:$0xff]
        %v1880 = vld [vmem:[#allocation4 + $0x358] sm:$0xff]
        %v1881 = vld [vmem:[#allocation4 + $0x374] sm:$0xff]
        %v1882 = vld [vmem:[#allocation4 + $0x390] sm:$0xff]
        %v1883 = vld [vmem:[#allocation4 + $0x3ac] sm:$0xff]
        %v1884 = vld [vmem:[#allocation4 + $0x3c8] sm:$0xff]
        %v1885 = vld [vmem:[#allocation4 + $0x3e4] sm:$0xff]
        %v1886 = vld [vmem:[#allocation4 + $0x400] sm:$0xff]
        %v1887 = vld [vmem:[#allocation4 + $0x41c] sm:$0xff]
        %v1888 = vld [vmem:[#allocation4 + $0x438] sm:$0xff]
        %v1889 = vld [vmem:[#allocation4 + $0x454] sm:$0xff]
        %v1890 = vld [vmem:[#allocation4 + $0x470] sm:$0xff]
        %v1891 = vld [vmem:[#allocation4 + $0x48c] sm:$0xff]
        %v1892 = vld [vmem:[#allocation4 + $0x4a8] sm:$0xff]
        %v1893 = vld [vmem:[#allocation4 + $0x4c4] sm:$0xff]
        %v1894 = vld [vmem:[#allocation4 + $0x4e0] sm:$0xff]
        %v1895 = vld [vmem:[#allocation4 + $0x4fc] sm:$0xff]
        %v1896 = vld [vmem:[#allocation4 + $0x518] sm:$0xff]
        %v1897 = vld [vmem:[#allocation4 + $0x534] sm:$0xff]
        %v1898 = vld [vmem:[#allocation4 + $0x550] sm:$0xff]
        %v1899 = vld [vmem:[#allocation4 + $0x56c] sm:$0xff]
        %v1900 = vld [vmem:[#allocation4 + $0x588] sm:$0xff]
        %v1901 = vld [vmem:[#allocation4 + $0x5a4] sm:$0xff]
        %v1902 = vld [vmem:[#allocation4 + $0x5c0] sm:$0xff]
        %v1903 = vld [vmem:[#allocation4 + $0x5dc] sm:$0xff]
        %v1904 = vld [vmem:[#allocation4 + $0x5f8] sm:$0xff]
        %v1905 = vld [vmem:[#allocation4 + $0x614] sm:$0xff]
        %v1906 = vld [vmem:[#allocation4 + $0x630] sm:$0xff]
        %v1907 = vld [vmem:[#allocation4 + $0x64c] sm:$0xff]
        %v1908 = vld [vmem:[#allocation4 + $0x668] sm:$0xff]
        %v1909 = vld [vmem:[#allocation4 + $0x684] sm:$0xff]
        %v1910 = vld [vmem:[#allocation4 + $0x6a0] sm:$0xff]
        %v1911 = vld [vmem:[#allocation4 + $0x6bc] sm:$0xff]
        %v1912 = vld [vmem:[#allocation4 + $0x6d8] sm:$0xff]
        %v1913 = vld [vmem:[#allocation4 + $0x6f4] sm:$0xff]
        %v1914 = vpack.c.bf16 %v1846, %v1846
        %v1915 = vpack.c.bf16 %v1847, %v1847
        %v1916 = vpack.c.bf16 %v1848, %v1848
        %v1917 = vpack.c.bf16 %v1849, %v1849
        %v1918 = vld [vmem:[#allocation9 + $0x4] sm:$0x3]
        %v1920 = vlaneseq
        %v1921 = vshrl.u32 %v1920, 7
        %v1922 = vsub.s32 0, %v1921
        %v1923 = vrot.slane %v1918, %v1922
        %v1924 = vlaneseq
        %v1925 = vshrl.u32 %v1924, 7
        %v1926 = vsub.s32 1, %v1925
        %v1927 = vrot.slane %v1918, %v1926
        %v1994 = vunpack.c.l.b16 %v1850
        %v1995 = vunpack.c.h.b16 %v1850
        %v1996 = vunpack.c.l.b16 %v1851
        %v1997 = vunpack.c.h.b16 %v1851
        %v1998 = vunpack.c.l.b16 %v1852
        %v1999 = vunpack.c.h.b16 %v1852
        %v2000 = vunpack.c.l.b16 %v1853
        %v2001 = vunpack.c.h.b16 %v1853
        %v2002 = vunpack.c.l.b16 %v1854
        %v2003 = vunpack.c.h.b16 %v1854
        %v2004 = vunpack.c.l.b16 %v1855
        %v2005 = vunpack.c.h.b16 %v1855
        %v2006 = vunpack.c.l.b16 %v1856
        %v2007 = vunpack.c.h.b16 %v1856
        %v2008 = vunpack.c.l.b16 %v1857
        %v2009 = vunpack.c.h.b16 %v1857
        %v2010 = vunpack.c.l.b16 %v1858
        %v2011 = vunpack.c.h.b16 %v1858
        %v2012 = vunpack.c.l.b16 %v1859
        %v2013 = vunpack.c.h.b16 %v1859
        %v2014 = vunpack.c.l.b16 %v1860
        %v2015 = vunpack.c.h.b16 %v1860
        %v2016 = vunpack.c.l.b16 %v1861
        %v2017 = vunpack.c.h.b16 %v1861
        %v2018 = vunpack.c.l.b16 %v1862
        %v2019 = vunpack.c.h.b16 %v1862
        %v2020 = vunpack.c.l.b16 %v1863
        %v2021 = vunpack.c.h.b16 %v1863
        %v2022 = vunpack.c.l.b16 %v1864
        %v2023 = vunpack.c.h.b16 %v1864
        %v2024 = vunpack.c.l.b16 %v1865
        %v2025 = vunpack.c.h.b16 %v1865
        %v2026 = vunpack.c.l.b16 %v1866
        %v2027 = vunpack.c.h.b16 %v1866
        %v2028 = vunpack.c.l.b16 %v1867
        %v2029 = vunpack.c.h.b16 %v1867
        %v2030 = vunpack.c.l.b16 %v1868
        %v2031 = vunpack.c.h.b16 %v1868
        %v2032 = vunpack.c.l.b16 %v1869
        %v2033 = vunpack.c.h.b16 %v1869
        %v2034 = vunpack.c.l.b16 %v1870
        %v2035 = vunpack.c.h.b16 %v1870
        %v2036 = vunpack.c.l.b16 %v1871
        %v2037 = vunpack.c.h.b16 %v1871
        %v2038 = vunpack.c.l.b16 %v1872
        %v2039 = vunpack.c.h.b16 %v1872
        %v2040 = vunpack.c.l.b16 %v1873
        %v2041 = vunpack.c.h.b16 %v1873
        %v2042 = vunpack.c.l.b16 %v1874
        %v2043 = vunpack.c.h.b16 %v1874
        %v2044 = vunpack.c.l.b16 %v1875
        %v2045 = vunpack.c.h.b16 %v1875
        %v2046 = vunpack.c.l.b16 %v1876
        %v2047 = vunpack.c.h.b16 %v1876
        %v2048 = vunpack.c.l.b16 %v1877
        %v2049 = vunpack.c.h.b16 %v1877
        %v2050 = vunpack.c.l.b16 %v1878
        %v2051 = vunpack.c.h.b16 %v1878
        %v2052 = vunpack.c.l.b16 %v1879
        %v2053 = vunpack.c.h.b16 %v1879
        %v2054 = vunpack.c.l.b16 %v1880
        %v2055 = vunpack.c.h.b16 %v1880
        %v2056 = vunpack.c.l.b16 %v1881
        %v2057 = vunpack.c.h.b16 %v1881
        %v2058 = vunpack.c.l.b16 %v1882
        %v2059 = vunpack.c.h.b16 %v1882
        %v2060 = vunpack.c.l.b16 %v1883
        %v2061 = vunpack.c.h.b16 %v1883
        %v2062 = vunpack.c.l.b16 %v1884
        %v2063 = vunpack.c.h.b16 %v1884
        %v2064 = vunpack.c.l.b16 %v1885
        %v2065 = vunpack.c.h.b16 %v1885
        %v2066 = vunpack.c.l.b16 %v1886
        %v2067 = vunpack.c.h.b16 %v1886
        %v2068 = vunpack.c.l.b16 %v1887
        %v2069 = vunpack.c.h.b16 %v1887
        %v2070 = vunpack.c.l.b16 %v1888
        %v2071 = vunpack.c.h.b16 %v1888
        %v2072 = vunpack.c.l.b16 %v1889
        %v2073 = vunpack.c.h.b16 %v1889
        %v2074 = vunpack.c.l.b16 %v1890
        %v2075 = vunpack.c.h.b16 %v1890
        %v2076 = vunpack.c.l.b16 %v1891
        %v2077 = vunpack.c.h.b16 %v1891
        %v2078 = vunpack.c.l.b16 %v1892
        %v2079 = vunpack.c.h.b16 %v1892
        %v2080 = vunpack.c.l.b16 %v1893
        %v2081 = vunpack.c.h.b16 %v1893
        %v2082 = vunpack.c.l.b16 %v1894
        %v2083 = vunpack.c.h.b16 %v1894
        %v2084 = vunpack.c.l.b16 %v1895
        %v2085 = vunpack.c.h.b16 %v1895
        %v2086 = vunpack.c.l.b16 %v1896
        %v2087 = vunpack.c.h.b16 %v1896
        %v2088 = vunpack.c.l.b16 %v1897
        %v2089 = vunpack.c.h.b16 %v1897
        %v2090 = vunpack.c.l.b16 %v1898
        %v2091 = vunpack.c.h.b16 %v1898
        %v2092 = vunpack.c.l.b16 %v1899
        %v2093 = vunpack.c.h.b16 %v1899
        %v2094 = vunpack.c.l.b16 %v1900
        %v2095 = vunpack.c.h.b16 %v1900
        %v2096 = vunpack.c.l.b16 %v1901
        %v2097 = vunpack.c.h.b16 %v1901
        %v2098 = vunpack.c.l.b16 %v1902
        %v2099 = vunpack.c.h.b16 %v1902
        %v2100 = vunpack.c.l.b16 %v1903
        %v2101 = vunpack.c.h.b16 %v1903
        %v2102 = vunpack.c.l.b16 %v1904
        %v2103 = vunpack.c.h.b16 %v1904
        %v2104 = vunpack.c.l.b16 %v1905
        %v2105 = vunpack.c.h.b16 %v1905
        %v2106 = vunpack.c.l.b16 %v1906
        %v2107 = vunpack.c.h.b16 %v1906
        %v2108 = vunpack.c.l.b16 %v1907
        %v2109 = vunpack.c.h.b16 %v1907
        %v2110 = vunpack.c.l.b16 %v1908
        %v2111 = vunpack.c.h.b16 %v1908
        %v2112 = vunpack.c.l.b16 %v1909
        %v2113 = vunpack.c.h.b16 %v1909
        %v2114 = vunpack.c.l.b16 %v1910
        %v2115 = vunpack.c.h.b16 %v1910
        %v2116 = vunpack.c.l.b16 %v1911
        %v2117 = vunpack.c.h.b16 %v1911
        %v2118 = vunpack.c.l.b16 %v1912
        %v2119 = vunpack.c.h.b16 %v1912
        %v2120 = vunpack.c.l.b16 %v1913
        %v2121 = vunpack.c.h.b16 %v1913
        %v2122 = vpack.c.b16 %v1996, %v1994
        %v2123 = vpack.c.b16 %v1997, %v1995
        %v2124 = vpack.c.b16 %v2000, %v1998
        %v2125 = vpack.c.b16 %v2001, %v1999
        %v2126 = vpack.c.b16 %v2004, %v2002
        %v2127 = vpack.c.b16 %v2005, %v2003
        %v2128 = vpack.c.b16 %v2008, %v2006
        %v2129 = vpack.c.b16 %v2009, %v2007
        %v2130 = vpack.c.b16 %v2012, %v2010
        %v2131 = vpack.c.b16 %v2013, %v2011
        %v2132 = vpack.c.b16 %v2016, %v2014
        %v2133 = vpack.c.b16 %v2017, %v2015
        %v2134 = vpack.c.b16 %v2020, %v2018
        %v2135 = vpack.c.b16 %v2021, %v2019
        %v2136 = vpack.c.b16 %v2024, %v2022
        %v2137 = vpack.c.b16 %v2025, %v2023
        %v2138 = vpack.c.b16 %v2028, %v2026
        %v2139 = vpack.c.b16 %v2029, %v2027
        %v2140 = vpack.c.b16 %v2032, %v2030
        %v2141 = vpack.c.b16 %v2033, %v2031
        %v2142 = vpack.c.b16 %v2036, %v2034
        %v2143 = vpack.c.b16 %v2037, %v2035
        %v2144 = vpack.c.b16 %v2040, %v2038
        %v2145 = vpack.c.b16 %v2041, %v2039
        %v2146 = vpack.c.b16 %v2044, %v2042
        %v2147 = vpack.c.b16 %v2045, %v2043
        %v2148 = vpack.c.b16 %v2048, %v2046
        %v2149 = vpack.c.b16 %v2049, %v2047
        %v2150 = vpack.c.b16 %v2052, %v2050
        %v2151 = vpack.c.b16 %v2053, %v2051
        %v2152 = vpack.c.b16 %v2056, %v2054
        %v2153 = vpack.c.b16 %v2057, %v2055
        %v2154 = vpack.c.b16 %v2060, %v2058
        %v2155 = vpack.c.b16 %v2061, %v2059
        %v2156 = vpack.c.b16 %v2064, %v2062
        %v2157 = vpack.c.b16 %v2065, %v2063
        %v2158 = vpack.c.b16 %v2068, %v2066
        %v2159 = vpack.c.b16 %v2069, %v2067
        %v2160 = vpack.c.b16 %v2072, %v2070
        %v2161 = vpack.c.b16 %v2073, %v2071
        %v2162 = vpack.c.b16 %v2076, %v2074
        %v2163 = vpack.c.b16 %v2077, %v2075
        %v2164 = vpack.c.b16 %v2080, %v2078
        %v2165 = vpack.c.b16 %v2081, %v2079
        %v2166 = vpack.c.b16 %v2084, %v2082
        %v2167 = vpack.c.b16 %v2085, %v2083
        %v2168 = vpack.c.b16 %v2088, %v2086
        %v2169 = vpack.c.b16 %v2089, %v2087
        %v2170 = vpack.c.b16 %v2092, %v2090
        %v2171 = vpack.c.b16 %v2093, %v2091
        %v2172 = vpack.c.b16 %v2096, %v2094
        %v2173 = vpack.c.b16 %v2097, %v2095
        %v2174 = vpack.c.b16 %v2100, %v2098
        %v2175 = vpack.c.b16 %v2101, %v2099
        %v2176 = vpack.c.b16 %v2104, %v2102
        %v2177 = vpack.c.b16 %v2105, %v2103
        %v2178 = vpack.c.b16 %v2108, %v2106
        %v2179 = vpack.c.b16 %v2109, %v2107
        %v2180 = vpack.c.b16 %v2112, %v2110
        %v2181 = vpack.c.b16 %v2113, %v2111
        %v2182 = vpack.c.b16 %v2116, %v2114
        %v2183 = vpack.c.b16 %v2117, %v2115
        %v2184 = vpack.c.b16 %v2120, %v2118
        %v2185 = vpack.c.b16 %v2121, %v2119
        %2250 = vmatprep.subr.bf16.mxu0 %v2123
        %2251 = vmatpush1.bf16.msra.mxu0 %v2122
        %2252 = vmatprep.subr.bf16.mxu0 %v2125
        %2253 = vmatpush1.bf16.msra.mxu0 %v2124
        %2254 = vmatprep.subr.bf16.mxu0 %v2127
        %2255 = vmatpush1.bf16.msra.mxu0 %v2126
        %2256 = vmatprep.subr.bf16.mxu0 %v2129
        %2257 = vmatpush1.bf16.msra.mxu0 %v2128
        %2258 = vmatprep.subr.bf16.mxu0 %v2131
        %2259 = vmatpush1.bf16.msra.mxu0 %v2130
        %2260 = vmatprep.subr.bf16.mxu0 %v2133
        %2261 = vmatpush1.bf16.msra.mxu0 %v2132
        %2262 = vmatprep.subr.bf16.mxu0 %v2135
        %2263 = vmatpush1.bf16.msra.mxu0 %v2134
        %2264 = vmatprep.subr.bf16.mxu0 %v2137
        %2265 = vmatpush1.bf16.msra.mxu0 %v2136
        %2266 = vmatprep.subr.bf16.mxu0 %v2139
        %2267 = vmatpush1.bf16.msra.mxu0 %v2138
        %2268 = vmatprep.subr.bf16.mxu0 %v2141
        %2269 = vmatpush1.bf16.msra.mxu0 %v2140
        %2270 = vmatprep.subr.bf16.mxu0 %v2143
        %2271 = vmatpush1.bf16.msra.mxu0 %v2142
        %2272 = vmatprep.subr.bf16.mxu0 %v2145
        %2273 = vmatpush1.bf16.msra.mxu0 %v2144
        %2274 = vmatprep.subr.bf16.mxu0 %v2147
        %2275 = vmatpush1.bf16.msra.mxu0 %v2146
        %2276 = vmatprep.subr.bf16.mxu0 %v2149
        %2277 = vmatpush1.bf16.msra.mxu0 %v2148
        %2278 = vmatprep.subr.bf16.mxu0 %v2151
        %2279 = vmatpush1.bf16.msra.mxu0 %v2150
        %2280 = vmatprep.subr.bf16.mxu0 %v2153
        %2281 = vmatpush1.bf16.msra.mxu0 %v2152
        %2282 = vmatprep.mubr.bf16.mxu0 %v1915
        %2283 = vmatmul.mubr.bf16.gmra.mrb[0].mxu0 %v1914
        %v2284 = vpop.f32.mrb[0].mxu0
        %v2285 = vadd.f32 %v1923, %v2284
        %v2286 = vpop.f32.mrb[0].mxu0
        %v2287 = vadd.f32 %v1927, %v2286
        %v2288 = vpop.f32.mrb[0].mxu0
        %v2289 = vpop.f32.mrb[0].mxu0
        %2290 = vdwg.mxu0
        %2291 = vmatprep.subr.bf16.mxu0 %v2155
        %2292 = vmatpush1.bf16.msra.mxu0 %v2154
        %2293 = vmatprep.subr.bf16.mxu0 %v2157
        %2294 = vmatpush1.bf16.msra.mxu0 %v2156
        %2295 = vmatprep.subr.bf16.mxu0 %v2159
        %2296 = vmatpush1.bf16.msra.mxu0 %v2158
        %2297 = vmatprep.subr.bf16.mxu0 %v2161
        %2298 = vmatpush1.bf16.msra.mxu0 %v2160
        %2299 = vmatprep.subr.bf16.mxu0 %v2163
        %2300 = vmatpush1.bf16.msra.mxu0 %v2162
        %2301 = vmatprep.subr.bf16.mxu0 %v2165
        %2302 = vmatpush1.bf16.msra.mxu0 %v2164
        %2303 = vmatprep.subr.bf16.mxu0 %v2167
        %2304 = vmatpush1.bf16.msra.mxu0 %v2166
        %2305 = vmatprep.subr.bf16.mxu0 %v2169
        %2306 = vmatpush1.bf16.msra.mxu0 %v2168
        %2307 = vmatprep.subr.bf16.mxu0 %v2171
        %2308 = vmatpush1.bf16.msra.mxu0 %v2170
        %2309 = vmatprep.subr.bf16.mxu0 %v2173
        %2310 = vmatpush1.bf16.msra.mxu0 %v2172
        %2311 = vmatprep.subr.bf16.mxu0 %v2175
        %2312 = vmatpush1.bf16.msra.mxu0 %v2174
        %2313 = vmatprep.subr.bf16.mxu0 %v2177
        %2314 = vmatpush1.bf16.msra.mxu0 %v2176
        %2315 = vmatprep.subr.bf16.mxu0 %v2179
        %2316 = vmatpush1.bf16.msra.mxu0 %v2178
        %2317 = vmatprep.subr.bf16.mxu0 %v2181
        %2318 = vmatpush1.bf16.msra.mxu0 %v2180
        %2319 = vmatprep.subr.bf16.mxu0 %v2183
        %2320 = vmatpush1.bf16.msra.mxu0 %v2182
        %2321 = vmatprep.subr.bf16.mxu0 %v2185
        %2322 = vmatpush1.bf16.msra.mxu0 %v2184
        %2323 = vmatprep.mubr.bf16.mxu0 %v1917
        %2324 = vmatmul.mubr.bf16.gmra.mrb[0].mxu0 %v1916
        %v2325 = vpop.f32.mrb[0].mxu0
        %v2326 = vadd.f32 %v2285, %v2325
        %v2327 = vpop.f32.mrb[0].mxu0
        %v2328 = vadd.f32 %v2287, %v2327
        %v2329 = vpop.f32.mrb[0].mxu0
        %v2330 = vpop.f32.mrb[0].mxu0
        %2331 = vdwg.mxu0
        %v2332 = vmax.f32 %v2326, 0.0
        %v2333 = vmax.f32 %v2328, 0.0
        %v2334 = vld [vmem:[#allocation4 + $0x18] sm:$0xf]
        %v2335 = vld [vmem:[#allocation4 + $0x34] sm:$0xf]
        %v2336 = vld [vmem:[#allocation4 + $0x50] sm:$0xf]
        %v2337 = vld [vmem:[#allocation4 + $0x6c] sm:$0xf]
        %v2338 = vld [vmem:[#allocation4 + $0x88] sm:$0xf]
        %v2339 = vld [vmem:[#allocation4 + $0xa4] sm:$0xf]
        %v2340 = vld [vmem:[#allocation4 + $0xc0] sm:$0xf]
        %v2341 = vld [vmem:[#allocation4 + $0xdc] sm:$0xf]
        %v2342 = vld [vmem:[#allocation4 + $0xf8] sm:$0xf]
        %v2343 = vld [vmem:[#allocation4 + $0x114] sm:$0xf]
        %v2344 = vld [vmem:[#allocation4 + $0x130] sm:$0xf]
        %v2345 = vld [vmem:[#allocation4 + $0x14c] sm:$0xf]
        %v2346 = vld [vmem:[#allocation4 + $0x168] sm:$0xf]
        %v2347 = vld [vmem:[#allocation4 + $0x184] sm:$0xf]
        %v2348 = vld [vmem:[#allocation4 + $0x1a0] sm:$0xf]
        %v2349 = vld [vmem:[#allocation4 + $0x1bc] sm:$0xf]
        %v2350 = vld [vmem:[#allocation4 + $0x1d8] sm:$0xf]
        %v2351 = vld [vmem:[#allocation4 + $0x1f4] sm:$0xf]
        %v2352 = vld [vmem:[#allocation4 + $0x210] sm:$0xf]
        %v2353 = vld [vmem:[#allocation4 + $0x22c] sm:$0xf]
        %v2354 = vld [vmem:[#allocation4 + $0x248] sm:$0xf]
        %v2355 = vld [vmem:[#allocation4 + $0x264] sm:$0xf]
        %v2356 = vld [vmem:[#allocation4 + $0x280] sm:$0xf]
        %v2357 = vld [vmem:[#allocation4 + $0x29c] sm:$0xf]
        %v2358 = vld [vmem:[#allocation4 + $0x2b8] sm:$0xf]
        %v2359 = vld [vmem:[#allocation4 + $0x2d4] sm:$0xf]
        %v2360 = vld [vmem:[#allocation4 + $0x2f0] sm:$0xf]
        %v2361 = vld [vmem:[#allocation4 + $0x30c] sm:$0xf]
        %v2362 = vld [vmem:[#allocation4 + $0x328] sm:$0xf]
        %v2363 = vld [vmem:[#allocation4 + $0x344] sm:$0xf]
        %v2364 = vld [vmem:[#allocation4 + $0x360] sm:$0xf]
        %v2365 = vld [vmem:[#allocation4 + $0x37c] sm:$0xf]
        %v2366 = vpack.c.bf16 %v2332, %v2332
        %v2367 = vpack.c.bf16 %v2333, %v2333
        %v2368 = vld [vmem:[#allocation9 + $0x6] sm:$0x1]
        %v2370 = vlaneseq
        %v2371 = vshrl.u32 %v2370, 7
        %v2372 = vsub.s32 0, %v2371
        %v2373 = vrot.slane %v2368, %v2372
        %v2407 = vunpack.c.l.b16 %v2334
        %v2408 = vunpack.c.l.b16 %v2335
        %v2409 = vunpack.c.l.b16 %v2336
        %v2410 = vunpack.c.l.b16 %v2337
        %v2411 = vunpack.c.l.b16 %v2338
        %v2412 = vunpack.c.l.b16 %v2339
        %v2413 = vunpack.c.l.b16 %v2340
        %v2414 = vunpack.c.l.b16 %v2341
        %v2415 = vunpack.c.l.b16 %v2342
        %v2416 = vunpack.c.l.b16 %v2343
        %v2417 = vunpack.c.l.b16 %v2344
        %v2418 = vunpack.c.l.b16 %v2345
        %v2419 = vunpack.c.l.b16 %v2346
        %v2420 = vunpack.c.l.b16 %v2347
        %v2421 = vunpack.c.l.b16 %v2348
        %v2422 = vunpack.c.l.b16 %v2349
        %v2423 = vunpack.c.l.b16 %v2350
        %v2424 = vunpack.c.l.b16 %v2351
        %v2425 = vunpack.c.l.b16 %v2352
        %v2426 = vunpack.c.l.b16 %v2353
        %v2427 = vunpack.c.l.b16 %v2354
        %v2428 = vunpack.c.l.b16 %v2355
        %v2429 = vunpack.c.l.b16 %v2356
        %v2430 = vunpack.c.l.b16 %v2357
        %v2431 = vunpack.c.l.b16 %v2358
        %v2432 = vunpack.c.l.b16 %v2359
        %v2433 = vunpack.c.l.b16 %v2360
        %v2434 = vunpack.c.l.b16 %v2361
        %v2435 = vunpack.c.l.b16 %v2362
        %v2436 = vunpack.c.l.b16 %v2363
        %v2437 = vunpack.c.l.b16 %v2364
        %v2438 = vunpack.c.l.b16 %v2365
        %v2439 = vpack.c.b16 %v2408, %v2407
        %v2440 = vpack.c.b16 %v2410, %v2409
        %v2441 = vpack.c.b16 %v2412, %v2411
        %v2442 = vpack.c.b16 %v2414, %v2413
        %v2443 = vpack.c.b16 %v2416, %v2415
        %v2444 = vpack.c.b16 %v2418, %v2417
        %v2445 = vpack.c.b16 %v2420, %v2419
        %v2446 = vpack.c.b16 %v2422, %v2421
        %v2447 = vpack.c.b16 %v2424, %v2423
        %v2448 = vpack.c.b16 %v2426, %v2425
        %v2449 = vpack.c.b16 %v2428, %v2427
        %v2450 = vpack.c.b16 %v2430, %v2429
        %v2451 = vpack.c.b16 %v2432, %v2431
        %v2452 = vpack.c.b16 %v2434, %v2433
        %v2453 = vpack.c.b16 %v2436, %v2435
        %v2454 = vpack.c.b16 %v2438, %v2437
        %2471 = vmatprep.subr.bf16.mxu0 0
        %2472 = vmatpush1.bf16.msra.mxu0 %v2439
        %2473 = vmatprep.subr.bf16.mxu0 0
        %2474 = vmatpush1.bf16.msra.mxu0 %v2440
        %2475 = vmatprep.subr.bf16.mxu0 0
        %2476 = vmatpush1.bf16.msra.mxu0 %v2441
        %2477 = vmatprep.subr.bf16.mxu0 0
        %2478 = vmatpush1.bf16.msra.mxu0 %v2442
        %2479 = vmatprep.subr.bf16.mxu0 0
        %2480 = vmatpush1.bf16.msra.mxu0 %v2443
        %2481 = vmatprep.subr.bf16.mxu0 0
        %2482 = vmatpush1.bf16.msra.mxu0 %v2444
        %2483 = vmatprep.subr.bf16.mxu0 0
        %2484 = vmatpush1.bf16.msra.mxu0 %v2445
        %2485 = vmatprep.subr.bf16.mxu0 0
        %2486 = vmatpush1.bf16.msra.mxu0 %v2446
        %2487 = vmatprep.subr.bf16.mxu0 0
        %2488 = vmatpush1.bf16.msra.mxu0 %v2447
        %2489 = vmatprep.subr.bf16.mxu0 0
        %2490 = vmatpush1.bf16.msra.mxu0 %v2448
        %2491 = vmatprep.subr.bf16.mxu0 0
        %2492 = vmatpush1.bf16.msra.mxu0 %v2449
        %2493 = vmatprep.subr.bf16.mxu0 0
        %2494 = vmatpush1.bf16.msra.mxu0 %v2450
        %2495 = vmatprep.subr.bf16.mxu0 0
        %2496 = vmatpush1.bf16.msra.mxu0 %v2451
        %2497 = vmatprep.subr.bf16.mxu0 0
        %2498 = vmatpush1.bf16.msra.mxu0 %v2452
        %2499 = vmatprep.subr.bf16.mxu0 0
        %2500 = vmatpush1.bf16.msra.mxu0 %v2453
        %2501 = vmatprep.subr.bf16.mxu0 0
        %2502 = vmatpush1.bf16.msra.mxu0 %v2454
        %2503 = vmatprep.mubr.bf16.mxu0 %v2367
        %2504 = vmatmul.mubr.bf16.gmra.mrb[0].mxu0 %v2366
        %v2505 = vpop.f32.mrb[0].mxu0
        %v2506 = vadd.f32 %v2373, %v2505
        %v2507 = vpop.f32.mrb[0].mxu0
        %v2508 = vpop.f32.mrb[0].mxu0
        %v2509 = vpop.f32.mrb[0].mxu0
        %2510 = vdwg.mxu0
        %v2511 = vmax.f32 %v2506, 0.0
        %v2512 = vld [vmem:[#allocation8] sm:$0xf]
        %v2513 = vld [vmem:[#allocation8 + $0x4] sm:$0xf]
        %v2514 = vld [vmem:[#allocation8 + $0x8] sm:$0xf]
        %v2515 = vld [vmem:[#allocation8 + $0xc] sm:$0xf]
        %v2516 = vld [vmem:[#allocation8 + $0x10] sm:$0xf]
        %v2517 = vld [vmem:[#allocation8 + $0x14] sm:$0xf]
        %v2518 = vld [vmem:[#allocation8 + $0x18] sm:$0xf]
        %v2519 = vld [vmem:[#allocation8 + $0x1c] sm:$0xf]
        %v2520 = vld [vmem:[#allocation8 + $0x20] sm:$0xf]
        %v2521 = vld [vmem:[#allocation8 + $0x24] sm:$0xf]
        %v2522 = vld [vmem:[#allocation8 + $0x28] sm:$0xf]
        %v2523 = vld [vmem:[#allocation8 + $0x2c] sm:$0xf]
        %v2524 = vld [vmem:[#allocation8 + $0x30] sm:$0xf]
        %v2525 = vld [vmem:[#allocation8 + $0x34] sm:$0xf]
        %v2526 = vld [vmem:[#allocation8 + $0x38] sm:$0xf]
        %v2527 = vld [vmem:[#allocation8 + $0x3c] sm:$0xf]
        %v2528 = vpack.c.bf16 %v2511, %v2511
        %v2529 = vld [vmem:[#allocation9 + $0x13] sm:$0x1]
        %v2531 = vlaneseq
        %v2532 = vshrl.u32 %v2531, 7
        %v2533 = vsub.s32 0, %v2532
        %v2534 = vrot.slane %v2529, %v2533
        %v2552 = vunpack.c.l.b16 %v2512
        %v2553 = vunpack.c.l.b16 %v2513
        %v2554 = vunpack.c.l.b16 %v2514
        %v2555 = vunpack.c.l.b16 %v2515
        %v2556 = vunpack.c.l.b16 %v2516
        %v2557 = vunpack.c.l.b16 %v2517
        %v2558 = vunpack.c.l.b16 %v2518
        %v2559 = vunpack.c.l.b16 %v2519
        %v2560 = vunpack.c.l.b16 %v2520
        %v2561 = vunpack.c.l.b16 %v2521
        %v2562 = vunpack.c.l.b16 %v2522
        %v2563 = vunpack.c.l.b16 %v2523
        %v2564 = vunpack.c.l.b16 %v2524
        %v2565 = vunpack.c.l.b16 %v2525
        %v2566 = vunpack.c.l.b16 %v2526
        %v2567 = vunpack.c.l.b16 %v2527
        %v2568 = vpack.c.b16 %v2553, %v2552
        %v2569 = vpack.c.b16 %v2555, %v2554
        %v2570 = vpack.c.b16 %v2557, %v2556
        %v2571 = vpack.c.b16 %v2559, %v2558
        %v2572 = vpack.c.b16 %v2561, %v2560
        %v2573 = vpack.c.b16 %v2563, %v2562
        %v2574 = vpack.c.b16 %v2565, %v2564
        %v2575 = vpack.c.b16 %v2567, %v2566
        %2584 = vmatprep.subr.bf16.mxu0 0
        %2585 = vmatpush1.bf16.msra.mxu0 %v2568
        %2586 = vmatprep.subr.bf16.mxu0 0
        %2587 = vmatpush1.bf16.msra.mxu0 %v2569
        %2588 = vmatprep.subr.bf16.mxu0 0
        %2589 = vmatpush1.bf16.msra.mxu0 %v2570
        %2590 = vmatprep.subr.bf16.mxu0 0
        %2591 = vmatpush1.bf16.msra.mxu0 %v2571
        %2592 = vmatprep.subr.bf16.mxu0 0
        %2593 = vmatpush1.bf16.msra.mxu0 %v2572
        %2594 = vmatprep.subr.bf16.mxu0 0
        %2595 = vmatpush1.bf16.msra.mxu0 %v2573
        %2596 = vmatprep.subr.bf16.mxu0 0
        %2597 = vmatpush1.bf16.msra.mxu0 %v2574
        %2598 = vmatprep.subr.bf16.mxu0 0
        %2599 = vmatpush1.bf16.msra.mxu0 %v2575
        %2600 = vmatprep.subr.bf16.mxu0 0
        %2601 = vmatpush1.bf16.msra.mxu0 0
        %2602 = vmatprep.subr.bf16.mxu0 0
        %2603 = vmatpush1.bf16.msra.mxu0 0
        %2604 = vmatprep.subr.bf16.mxu0 0
        %2605 = vmatpush1.bf16.msra.mxu0 0
        %2606 = vmatprep.subr.bf16.mxu0 0
        %2607 = vmatpush1.bf16.msra.mxu0 0
        %2608 = vmatprep.subr.bf16.mxu0 0
        %2609 = vmatpush1.bf16.msra.mxu0 0
        %2610 = vmatprep.subr.bf16.mxu0 0
        %2611 = vmatpush1.bf16.msra.mxu0 0
        %2612 = vmatprep.subr.bf16.mxu0 0
        %2613 = vmatpush1.bf16.msra.mxu0 0
        %2614 = vmatprep.subr.bf16.mxu0 0
        %2615 = vmatpush1.bf16.msra.mxu0 0
        %2616 = vmatprep.mubr.bf16.mxu0 0
        %2617 = vmatmul.mubr.bf16.gmra.mrb[0].mxu0 %v2528
        %v2618 = vpop.f32.mrb[0].mxu0
        %v2619 = vadd.f32 %v2534, %v2618
        %v2620 = vpop.f32.mrb[0].mxu0
        %v2621 = vpop.f32.mrb[0].mxu0
        %v2622 = vpop.f32.mrb[0].mxu0
        %2623 = vdwg.mxu0
        %v2624 = vmax.f32 %v2619, 0.0
        %v2625 = vld [vmem:[%s382] sm:$0xf]
        %v2626 = vunpack.c.l.bf16 %v2625
        %v2627 = vld [vmem:[#allocation2] sm:$0xff]
        %v2628 = vld [vmem:[#allocation3] sm:$0xff]
        %v2629 = vld [vmem:[#allocation8 + $0x40] sm:$0xf]
        %v2630 = vld [vmem:[#allocation8 + $0x44] sm:$0xf]
        %v2631 = vld [vmem:[#allocation8 + $0x48] sm:$0xf]
        %v2632 = vld [vmem:[#allocation8 + $0x4c] sm:$0xf]
        %v2633 = vld [vmem:[#allocation8 + $0x50] sm:$0xf]
        %v2634 = vld [vmem:[#allocation8 + $0x54] sm:$0xf]
        %v2635 = vld [vmem:[#allocation8 + $0x58] sm:$0xf]
        %v2636 = vld [vmem:[#allocation8 + $0x5c] sm:$0xf]
        %v2637 = vld [vmem:[#allocation8 + $0x60] sm:$0xf]
        %v2638 = vld [vmem:[#allocation8 + $0x64] sm:$0xf]
        %v2639 = vld [vmem:[#allocation8 + $0x68] sm:$0xf]
        %v2640 = vld [vmem:[#allocation8 + $0x6c] sm:$0xf]
        %v2641 = vld [vmem:[#allocation8 + $0x70] sm:$0xf]
        %v2642 = vld [vmem:[#allocation8 + $0x74] sm:$0xf]
        %v2643 = vld [vmem:[#allocation8 + $0x78] sm:$0xf]
        %v2644 = vld [vmem:[#allocation8 + $0x7c] sm:$0xf]
        %v2645 = vld [vmem:[#allocation8 + $0x80] sm:$0xf]
        %v2646 = vld [vmem:[#allocation8 + $0x84] sm:$0xf]
        %v2647 = vld [vmem:[#allocation8 + $0x88] sm:$0xf]
        %v2648 = vld [vmem:[#allocation8 + $0x8c] sm:$0xf]
        %v2649 = vld [vmem:[#allocation8 + $0x90] sm:$0xf]
        %v2650 = vld [vmem:[#allocation8 + $0x94] sm:$0xf]
        %v2651 = vld [vmem:[#allocation8 + $0x98] sm:$0xf]
        %v2652 = vld [vmem:[#allocation8 + $0x9c] sm:$0xf]
        %v2653 = vld [vmem:[#allocation8 + $0xa0] sm:$0xf]
        %v2654 = vld [vmem:[#allocation8 + $0xa4] sm:$0xf]
        %v2655 = vld [vmem:[#allocation8 + $0xa8] sm:$0xf]
        %v2656 = vld [vmem:[#allocation8 + $0xac] sm:$0xf]
        %v2657 = vld [vmem:[#allocation8 + $0xb0] sm:$0xf]
        %v2658 = vld [vmem:[#allocation8 + $0xb4] sm:$0xf]
        %v2659 = vld [vmem:[#allocation8 + $0xb8] sm:$0xf]
        %v2660 = vld [vmem:[#allocation8 + $0xbc] sm:$0xf]
        %v2661 = vld [vmem:[#allocation8 + $0xc0] sm:$0xf]
        %v2662 = vld [vmem:[#allocation8 + $0xc4] sm:$0xf]
        %v2663 = vld [vmem:[#allocation8 + $0xc8] sm:$0xf]
        %v2664 = vld [vmem:[#allocation8 + $0xcc] sm:$0xf]
        %v2665 = vld [vmem:[#allocation8 + $0xd0] sm:$0xf]
        %v2666 = vld [vmem:[#allocation8 + $0xd4] sm:$0xf]
        %v2667 = vld [vmem:[#allocation8 + $0xd8] sm:$0xf]
        %v2668 = vld [vmem:[#allocation8 + $0xdc] sm:$0xf]
        %v2669 = vld [vmem:[#allocation8 + $0xe0] sm:$0xf]
        %v2670 = vld [vmem:[#allocation8 + $0xe4] sm:$0xf]
        %v2671 = vld [vmem:[#allocation8 + $0xe8] sm:$0xf]
        %v2672 = vld [vmem:[#allocation8 + $0xec] sm:$0xf]
        %v2673 = vld [vmem:[#allocation8 + $0xf0] sm:$0xf]
        %v2674 = vld [vmem:[#allocation8 + $0xf4] sm:$0xf]
        %v2675 = vld [vmem:[#allocation8 + $0xf8] sm:$0xf]
        %v2676 = vld [vmem:[#allocation8 + $0xfc] sm:$0xf]
        %v2677 = vpack.c.bf16 %v2624, %v2624
        %v2678 = vpack.c.bf16 %v2626, %v2626
        %v2679 = vpack.c.bf16 %v2627, %v2627
        %v2680 = vld [vmem:[#allocation9 + $0x14] sm:$0x1]
        %v2682 = vlaneseq
        %v2683 = vshrl.u32 %v2682, 7
        %v2684 = vsub.s32 0, %v2683
        %v2685 = vrot.slane %v2680, %v2684
        %v2735 = vunpack.c.l.b16 %v2629
        %v2736 = vunpack.c.l.b16 %v2630
        %v2737 = vunpack.c.l.b16 %v2631
        %v2738 = vunpack.c.l.b16 %v2632
        %v2739 = vunpack.c.l.b16 %v2633
        %v2740 = vunpack.c.l.b16 %v2634
        %v2741 = vunpack.c.l.b16 %v2635
        %v2742 = vunpack.c.l.b16 %v2636
        %v2743 = vunpack.c.l.b16 %v2637
        %v2744 = vunpack.c.l.b16 %v2638
        %v2745 = vunpack.c.l.b16 %v2639
        %v2746 = vunpack.c.l.b16 %v2640
        %v2747 = vunpack.c.l.b16 %v2641
        %v2748 = vunpack.c.l.b16 %v2642
        %v2749 = vunpack.c.l.b16 %v2643
        %v2750 = vunpack.c.l.b16 %v2644
        %v2751 = vunpack.c.l.b16 %v2645
        %v2752 = vunpack.c.l.b16 %v2646
        %v2753 = vunpack.c.l.b16 %v2647
        %v2754 = vunpack.c.l.b16 %v2648
        %v2755 = vunpack.c.l.b16 %v2649
        %v2756 = vunpack.c.l.b16 %v2650
        %v2757 = vunpack.c.l.b16 %v2651
        %v2758 = vunpack.c.l.b16 %v2652
        %v2759 = vunpack.c.l.b16 %v2653
        %v2760 = vunpack.c.l.b16 %v2654
        %v2761 = vunpack.c.l.b16 %v2655
        %v2762 = vunpack.c.l.b16 %v2656
        %v2763 = vunpack.c.l.b16 %v2657
        %v2764 = vunpack.c.l.b16 %v2658
        %v2765 = vunpack.c.l.b16 %v2659
        %v2766 = vunpack.c.l.b16 %v2660
        %v2767 = vunpack.c.l.b16 %v2661
        %v2768 = vunpack.c.l.b16 %v2662
        %v2769 = vunpack.c.l.b16 %v2663
        %v2770 = vunpack.c.l.b16 %v2664
        %v2771 = vunpack.c.l.b16 %v2665
        %v2772 = vunpack.c.l.b16 %v2666
        %v2773 = vunpack.c.l.b16 %v2667
        %v2774 = vunpack.c.l.b16 %v2668
        %v2775 = vunpack.c.l.b16 %v2669
        %v2776 = vunpack.c.l.b16 %v2670
        %v2777 = vunpack.c.l.b16 %v2671
        %v2778 = vunpack.c.l.b16 %v2672
        %v2779 = vunpack.c.l.b16 %v2673
        %v2780 = vunpack.c.l.b16 %v2674
        %v2781 = vunpack.c.l.b16 %v2675
        %v2782 = vunpack.c.l.b16 %v2676
        %v2783 = vpack.c.b16 %v2736, %v2735
        %v2784 = vpack.c.b16 %v2738, %v2737
        %v2785 = vpack.c.b16 %v2740, %v2739
        %v2786 = vpack.c.b16 %v2742, %v2741
        %v2787 = vpack.c.b16 %v2744, %v2743
        %v2788 = vpack.c.b16 %v2746, %v2745
        %v2789 = vpack.c.b16 %v2748, %v2747
        %v2790 = vpack.c.b16 %v2750, %v2749
        %v2791 = vpack.c.b16 %v2752, %v2751
        %v2792 = vpack.c.b16 %v2754, %v2753
        %v2793 = vpack.c.b16 %v2756, %v2755
        %v2794 = vpack.c.b16 %v2758, %v2757
        %v2795 = vpack.c.b16 %v2760, %v2759
        %v2796 = vpack.c.b16 %v2762, %v2761
        %v2797 = vpack.c.b16 %v2764, %v2763
        %v2798 = vpack.c.b16 %v2766, %v2765
        %v2799 = vpack.c.b16 %v2768, %v2767
        %v2800 = vpack.c.b16 %v2770, %v2769
        %v2801 = vpack.c.b16 %v2772, %v2771
        %v2802 = vpack.c.b16 %v2774, %v2773
        %v2803 = vpack.c.b16 %v2776, %v2775
        %v2804 = vpack.c.b16 %v2778, %v2777
        %v2805 = vpack.c.b16 %v2780, %v2779
        %v2806 = vpack.c.b16 %v2782, %v2781
        %2831 = vmatprep.subr.bf16.mxu0 0
        %2832 = vmatpush1.bf16.msra.mxu0 %v2783
        %2833 = vmatprep.subr.bf16.mxu0 0
        %2834 = vmatpush1.bf16.msra.mxu0 %v2784
        %2835 = vmatprep.subr.bf16.mxu0 0
        %2836 = vmatpush1.bf16.msra.mxu0 %v2785
        %2837 = vmatprep.subr.bf16.mxu0 0
        %2838 = vmatpush1.bf16.msra.mxu0 %v2786
        %2839 = vmatprep.subr.bf16.mxu0 0
        %2840 = vmatpush1.bf16.msra.mxu0 %v2787
        %2841 = vmatprep.subr.bf16.mxu0 0
        %2842 = vmatpush1.bf16.msra.mxu0 %v2788
        %2843 = vmatprep.subr.bf16.mxu0 0
        %2844 = vmatpush1.bf16.msra.mxu0 %v2789
        %2845 = vmatprep.subr.bf16.mxu0 0
        %2846 = vmatpush1.bf16.msra.mxu0 %v2790
        %2847 = vmatprep.subr.bf16.mxu0 0
        %2848 = vmatpush1.bf16.msra.mxu0 %v2791
        %2849 = vmatprep.subr.bf16.mxu0 0
        %2850 = vmatpush1.bf16.msra.mxu0 %v2792
        %2851 = vmatprep.subr.bf16.mxu0 0
        %2852 = vmatpush1.bf16.msra.mxu0 %v2793
        %2853 = vmatprep.subr.bf16.mxu0 0
        %2854 = vmatpush1.bf16.msra.mxu0 %v2794
        %2855 = vmatprep.subr.bf16.mxu0 0
        %2856 = vmatpush1.bf16.msra.mxu0 %v2795
        %2857 = vmatprep.subr.bf16.mxu0 0
        %2858 = vmatpush1.bf16.msra.mxu0 %v2796
        %2859 = vmatprep.subr.bf16.mxu0 0
        %2860 = vmatpush1.bf16.msra.mxu0 %v2797
        %2861 = vmatprep.subr.bf16.mxu0 0
        %2862 = vmatpush1.bf16.msra.mxu0 %v2798
        %2863 = vmatprep.mubr.bf16.mxu0 %v2678
        %2864 = vmatmul.mubr.bf16.gmra.mrb[0].mxu0 %v2677
        %v2865 = vpop.f32.mrb[0].mxu0
        %v2866 = vadd.f32 %v2685, %v2865
        %v2867 = vpop.f32.mrb[0].mxu0
        %v2868 = vpop.f32.mrb[0].mxu0
        %v2869 = vpop.f32.mrb[0].mxu0
        %2870 = vdwg.mxu0
        %2871 = vmatprep.subr.bf16.mxu0 0
        %2872 = vmatpush1.bf16.msra.mxu0 %v2799
        %2873 = vmatprep.subr.bf16.mxu0 0
        %2874 = vmatpush1.bf16.msra.mxu0 %v2800
        %2875 = vmatprep.subr.bf16.mxu0 0
        %2876 = vmatpush1.bf16.msra.mxu0 %v2801
        %2877 = vmatprep.subr.bf16.mxu0 0
        %2878 = vmatpush1.bf16.msra.mxu0 %v2802
        %2879 = vmatprep.subr.bf16.mxu0 0
        %2880 = vmatpush1.bf16.msra.mxu0 %v2803
        %2881 = vmatprep.subr.bf16.mxu0 0
        %2882 = vmatpush1.bf16.msra.mxu0 %v2804
        %2883 = vmatprep.subr.bf16.mxu0 0
        %2884 = vmatpush1.bf16.msra.mxu0 %v2805
        %2885 = vmatprep.subr.bf16.mxu0 0
        %2886 = vmatpush1.bf16.msra.mxu0 %v2806
        %2887 = vmatprep.subr.bf16.mxu0 0
        %2888 = vmatpush1.bf16.msra.mxu0 0
        %2889 = vmatprep.subr.bf16.mxu0 0
        %2890 = vmatpush1.bf16.msra.mxu0 0
        %2891 = vmatprep.subr.bf16.mxu0 0
        %2892 = vmatpush1.bf16.msra.mxu0 0
        %2893 = vmatprep.subr.bf16.mxu0 0
        %2894 = vmatpush1.bf16.msra.mxu0 0
        %2895 = vmatprep.subr.bf16.mxu0 0
        %2896 = vmatpush1.bf16.msra.mxu0 0
        %2897 = vmatprep.subr.bf16.mxu0 0
        %2898 = vmatpush1.bf16.msra.mxu0 0
        %2899 = vmatprep.subr.bf16.mxu0 0
        %2900 = vmatpush1.bf16.msra.mxu0 0
        %2901 = vmatprep.subr.bf16.mxu0 0
        %2902 = vmatpush1.bf16.msra.mxu0 0
        %2903 = vmatprep.mubr.bf16.mxu0 0
        %2904 = vmatmul.mubr.bf16.gmra.mrb[0].mxu0 %v2679
        %v2905 = vpop.f32.mrb[0].mxu0
        %v2906 = vadd.f32 %v2866, %v2905
        %v2907 = vpop.f32.mrb[0].mxu0
        %v2908 = vpop.f32.mrb[0].mxu0
        %v2909 = vpop.f32.mrb[0].mxu0
        %2910 = vdwg.mxu0
        %v2911 = vld [vmem:[#allocation9 + $0x18] sm:$0x1]
        %v2913 = vlaneseq
        %v2914 = vshrl.u32 %v2913, 7
        %v2915 = vsub.s32 0, %v2914
        %v2916 = vrot.slane %v2911, %v2915
        %v2918 = vmul.f32 %v2916, %v2628
        %v2919 = vsub.f32 1.0, %v2911
        %v2921 = vlaneseq
        %v2922 = vshrl.u32 %v2921, 7
        %v2923 = vsub.s32 0, %v2922
        %v2924 = vrot.slane %v2919, %v2923
        %v2926 = vmul.f32 %v2924, %v2906
        %v2927 = vadd.f32 %v2918, %v2926
        %v2928 = vtanh.pop %v2927
        %2929 = vst [vmem:[#allocation2] sm:$0xff] %v2928
        %2930 = vst [vmem:[#allocation3] sm:$0xff] %v2927
        %v2931 = vld [vmem:[#allocation8 + $0x100] sm:$0xf]
        %v2932 = vld [vmem:[#allocation8 + $0x104] sm:$0xf]
        %v2933 = vld [vmem:[#allocation8 + $0x108] sm:$0xf]
        %v2934 = vld [vmem:[#allocation8 + $0x10c] sm:$0xf]
        %v2935 = vld [vmem:[#allocation8 + $0x110] sm:$0xf]
        %v2936 = vld [vmem:[#allocation8 + $0x114] sm:$0xf]
        %v2937 = vld [vmem:[#allocation8 + $0x118] sm:$0xf]
        %v2938 = vld [vmem:[#allocation8 + $0x11c] sm:$0xf]
        %v2939 = vld [vmem:[#allocation8 + $0x120] sm:$0xf]
        %v2940 = vld [vmem:[#allocation8 + $0x124] sm:$0xf]
        %v2941 = vld [vmem:[#allocation8 + $0x128] sm:$0xf]
        %v2942 = vld [vmem:[#allocation8 + $0x12c] sm:$0xf]
        %v2943 = vld [vmem:[#allocation8 + $0x130] sm:$0xf]
        %v2944 = vld [vmem:[#allocation8 + $0x134] sm:$0xf]
        %v2945 = vld [vmem:[#allocation8 + $0x138] sm:$0xf]
        %v2946 = vld [vmem:[#allocation8 + $0x13c] sm:$0xf]
        %v2947 = vpack.c.bf16 %v2928, %v2928
        %v2948 = vld [vmem:[#allocation9 + $0x15] sm:$0x1]
        %v2950 = vlaneseq
        %v2951 = vshrl.u32 %v2950, 7
        %v2952 = vsub.s32 0, %v2951
        %v2953 = vrot.slane %v2948, %v2952
        %v2971 = vunpack.c.l.b16 %v2931
        %v2972 = vunpack.c.l.b16 %v2932
        %v2973 = vunpack.c.l.b16 %v2933
        %v2974 = vunpack.c.l.b16 %v2934
        %v2975 = vunpack.c.l.b16 %v2935
        %v2976 = vunpack.c.l.b16 %v2936
        %v2977 = vunpack.c.l.b16 %v2937
        %v2978 = vunpack.c.l.b16 %v2938
        %v2979 = vunpack.c.l.b16 %v2939
        %v2980 = vunpack.c.l.b16 %v2940
        %v2981 = vunpack.c.l.b16 %v2941
        %v2982 = vunpack.c.l.b16 %v2942
        %v2983 = vunpack.c.l.b16 %v2943
        %v2984 = vunpack.c.l.b16 %v2944
        %v2985 = vunpack.c.l.b16 %v2945
        %v2986 = vunpack.c.l.b16 %v2946
        %v2987 = vpack.c.b16 %v2972, %v2971
        %v2988 = vpack.c.b16 %v2974, %v2973
        %v2989 = vpack.c.b16 %v2976, %v2975
        %v2990 = vpack.c.b16 %v2978, %v2977
        %v2991 = vpack.c.b16 %v2980, %v2979
        %v2992 = vpack.c.b16 %v2982, %v2981
        %v2993 = vpack.c.b16 %v2984, %v2983
        %v2994 = vpack.c.b16 %v2986, %v2985
        %3003 = vmatprep.subr.bf16.mxu0 0
        %3004 = vmatpush1.bf16.msra.mxu0 %v2987
        %3005 = vmatprep.subr.bf16.mxu0 0
        %3006 = vmatpush1.bf16.msra.mxu0 %v2988
        %3007 = vmatprep.subr.bf16.mxu0 0
        %3008 = vmatpush1.bf16.msra.mxu0 %v2989
        %3009 = vmatprep.subr.bf16.mxu0 0
        %3010 = vmatpush1.bf16.msra.mxu0 %v2990
        %3011 = vmatprep.subr.bf16.mxu0 0
        %3012 = vmatpush1.bf16.msra.mxu0 %v2991
        %3013 = vmatprep.subr.bf16.mxu0 0
        %3014 = vmatpush1.bf16.msra.mxu0 %v2992
        %3015 = vmatprep.subr.bf16.mxu0 0
        %3016 = vmatpush1.bf16.msra.mxu0 %v2993
        %3017 = vmatprep.subr.bf16.mxu0 0
        %3018 = vmatpush1.bf16.msra.mxu0 %v2994
        %3019 = vmatprep.subr.bf16.mxu0 0
        %3020 = vmatpush1.bf16.msra.mxu0 0
        %3021 = vmatprep.subr.bf16.mxu0 0
        %3022 = vmatpush1.bf16.msra.mxu0 0
        %3023 = vmatprep.subr.bf16.mxu0 0
        %3024 = vmatpush1.bf16.msra.mxu0 0
        %3025 = vmatprep.subr.bf16.mxu0 0
        %3026 = vmatpush1.bf16.msra.mxu0 0
        %3027 = vmatprep.subr.bf16.mxu0 0
        %3028 = vmatpush1.bf16.msra.mxu0 0
        %3029 = vmatprep.subr.bf16.mxu0 0
        %3030 = vmatpush1.bf16.msra.mxu0 0
        %3031 = vmatprep.subr.bf16.mxu0 0
        %3032 = vmatpush1.bf16.msra.mxu0 0
        %3033 = vmatprep.subr.bf16.mxu0 0
        %3034 = vmatpush1.bf16.msra.mxu0 0
        %3035 = vmatprep.mubr.bf16.mxu0 0
        %3036 = vmatmul.mubr.bf16.gmra.mrb[0].mxu0 %v2947
        %v3037 = vpop.f32.mrb[0].mxu0
        %v3038 = vadd.f32 %v2953, %v3037
        %v3039 = vpop.f32.mrb[0].mxu0
        %v3040 = vpop.f32.mrb[0].mxu0
        %v3041 = vpop.f32.mrb[0].mxu0
        %3042 = vdwg.mxu0
        %v3043 = vtanh.pop %v3038
        %v3044 = vld [vmem:[#allocation8 + $0x140] sm:$0xf]
        %v3045 = vld [vmem:[#allocation8 + $0x144] sm:$0xf]
        %v3046 = vld [vmem:[#allocation8 + $0x148] sm:$0xf]
        %v3047 = vld [vmem:[#allocation8 + $0x14c] sm:$0xf]
        %v3048 = vld [vmem:[#allocation8 + $0x150] sm:$0xf]
        %v3049 = vld [vmem:[#allocation8 + $0x154] sm:$0xf]
        %v3050 = vld [vmem:[#allocation8 + $0x158] sm:$0xf]
        %v3051 = vld [vmem:[#allocation8 + $0x15c] sm:$0xf]
        %v3052 = vld [vmem:[#allocation8 + $0x160] sm:$0xf]
        %v3053 = vld [vmem:[#allocation8 + $0x164] sm:$0xf]
        %v3054 = vld [vmem:[#allocation8 + $0x168] sm:$0xf]
        %v3055 = vld [vmem:[#allocation8 + $0x16c] sm:$0xf]
        %v3056 = vld [vmem:[#allocation8 + $0x170] sm:$0xf]
        %v3057 = vld [vmem:[#allocation8 + $0x174] sm:$0xf]
        %v3058 = vld [vmem:[#allocation8 + $0x178] sm:$0xf]
        %v3059 = vld [vmem:[#allocation8 + $0x17c] sm:$0xf]
        %v3060 = vld [vmem:[#allocation8 + $0x180] sm:$0xf]
        %v3061 = vld [vmem:[#allocation8 + $0x184] sm:$0xf]
        %v3062 = vld [vmem:[#allocation8 + $0x188] sm:$0xf]
        %v3063 = vld [vmem:[#allocation8 + $0x18c] sm:$0xf]
        %v3064 = vld [vmem:[#allocation8 + $0x190] sm:$0xf]
        %v3065 = vld [vmem:[#allocation8 + $0x194] sm:$0xf]
        %v3066 = vld [vmem:[#allocation8 + $0x198] sm:$0xf]
        %v3067 = vld [vmem:[#allocation8 + $0x19c] sm:$0xf]
        %v3068 = vld [vmem:[#allocation8 + $0x1a0] sm:$0xf]
        %v3069 = vld [vmem:[#allocation8 + $0x1a4] sm:$0xf]
        %v3070 = vld [vmem:[#allocation8 + $0x1a8] sm:$0xf]
        %v3071 = vld [vmem:[#allocation8 + $0x1ac] sm:$0xf]
        %v3072 = vld [vmem:[#allocation8 + $0x1b0] sm:$0xf]
        %v3073 = vld [vmem:[#allocation8 + $0x1b4] sm:$0xf]
        %v3074 = vld [vmem:[#allocation8 + $0x1b8] sm:$0xf]
        %v3075 = vld [vmem:[#allocation8 + $0x1bc] sm:$0xf]
        %v3076 = vpack.c.bf16 %v3043, %v3043
        %v3077 = vld [vmem:[#allocation9 + $0x16] sm:$0x1]
        %v3079 = vlaneseq
        %v3080 = vshrl.u32 %v3079, 7
        %v3081 = vsub.s32 0, %v3080
        %v3082 = vrot.slane %v3077, %v3081
        %v3116 = vunpack.c.l.b16 %v3044
        %v3117 = vunpack.c.l.b16 %v3045
        %v3118 = vunpack.c.l.b16 %v3046
        %v3119 = vunpack.c.l.b16 %v3047
        %v3120 = vunpack.c.l.b16 %v3048
        %v3121 = vunpack.c.l.b16 %v3049
        %v3122 = vunpack.c.l.b16 %v3050
        %v3123 = vunpack.c.l.b16 %v3051
        %v3124 = vunpack.c.l.b16 %v3052
        %v3125 = vunpack.c.l.b16 %v3053
        %v3126 = vunpack.c.l.b16 %v3054
        %v3127 = vunpack.c.l.b16 %v3055
        %v3128 = vunpack.c.l.b16 %v3056
        %v3129 = vunpack.c.l.b16 %v3057
        %v3130 = vunpack.c.l.b16 %v3058
        %v3131 = vunpack.c.l.b16 %v3059
        %v3132 = vunpack.c.l.b16 %v3060
        %v3133 = vunpack.c.l.b16 %v3061
        %v3134 = vunpack.c.l.b16 %v3062
        %v3135 = vunpack.c.l.b16 %v3063
        %v3136 = vunpack.c.l.b16 %v3064
        %v3137 = vunpack.c.l.b16 %v3065
        %v3138 = vunpack.c.l.b16 %v3066
        %v3139 = vunpack.c.l.b16 %v3067
        %v3140 = vunpack.c.l.b16 %v3068
        %v3141 = vunpack.c.l.b16 %v3069
        %v3142 = vunpack.c.l.b16 %v3070
        %v3143 = vunpack.c.l.b16 %v3071
        %v3144 = vunpack.c.l.b16 %v3072
        %v3145 = vunpack.c.l.b16 %v3073
        %v3146 = vunpack.c.l.b16 %v3074
        %v3147 = vunpack.c.l.b16 %v3075
        %v3148 = vpack.c.b16 %v3117, %v3116
        %v3149 = vpack.c.b16 %v3119, %v3118
        %v3150 = vpack.c.b16 %v3121, %v3120
        %v3151 = vpack.c.b16 %v3123, %v3122
        %v3152 = vpack.c.b16 %v3125, %v3124
        %v3153 = vpack.c.b16 %v3127, %v3126
        %v3154 = vpack.c.b16 %v3129, %v3128
        %v3155 = vpack.c.b16 %v3131, %v3130
        %v3156 = vpack.c.b16 %v3133, %v3132
        %v3157 = vpack.c.b16 %v3135, %v3134
        %v3158 = vpack.c.b16 %v3137, %v3136
        %v3159 = vpack.c.b16 %v3139, %v3138
        %v3160 = vpack.c.b16 %v3141, %v3140
        %v3161 = vpack.c.b16 %v3143, %v3142
        %v3162 = vpack.c.b16 %v3145, %v3144
        %v3163 = vpack.c.b16 %v3147, %v3146
        %3180 = vmatprep.subr.bf16.mxu0 0
        %3181 = vmatpush1.bf16.msra.mxu0 %v3148
        %3182 = vmatprep.subr.bf16.mxu0 0
        %3183 = vmatpush1.bf16.msra.mxu0 %v3149
        %3184 = vmatprep.subr.bf16.mxu0 0
        %3185 = vmatpush1.bf16.msra.mxu0 %v3150
        %3186 = vmatprep.subr.bf16.mxu0 0
        %3187 = vmatpush1.bf16.msra.mxu0 %v3151
        %3188 = vmatprep.subr.bf16.mxu0 0
        %3189 = vmatpush1.bf16.msra.mxu0 %v3152
        %3190 = vmatprep.subr.bf16.mxu0 0
        %3191 = vmatpush1.bf16.msra.mxu0 %v3153
        %3192 = vmatprep.subr.bf16.mxu0 0
        %3193 = vmatpush1.bf16.msra.mxu0 %v3154
        %3194 = vmatprep.subr.bf16.mxu0 0
        %3195 = vmatpush1.bf16.msra.mxu0 %v3155
        %3196 = vmatprep.subr.bf16.mxu0 0
        %3197 = vmatpush1.bf16.msra.mxu0 %v3156
        %3198 = vmatprep.subr.bf16.mxu0 0
        %3199 = vmatpush1.bf16.msra.mxu0 %v3157
        %3200 = vmatprep.subr.bf16.mxu0 0
        %3201 = vmatpush1.bf16.msra.mxu0 %v3158
        %3202 = vmatprep.subr.bf16.mxu0 0
        %3203 = vmatpush1.bf16.msra.mxu0 %v3159
        %3204 = vmatprep.subr.bf16.mxu0 0
        %3205 = vmatpush1.bf16.msra.mxu0 %v3160
        %3206 = vmatprep.subr.bf16.mxu0 0
        %3207 = vmatpush1.bf16.msra.mxu0 %v3161
        %3208 = vmatprep.subr.bf16.mxu0 0
        %3209 = vmatpush1.bf16.msra.mxu0 %v3162
        %3210 = vmatprep.subr.bf16.mxu0 0
        %3211 = vmatpush1.bf16.msra.mxu0 %v3163
        %3212 = vmatprep.mubr.bf16.mxu0 %v3076
        %3213 = vmatmul.mubr.bf16.gmra.mrb[0].mxu0 %v2947
        %v3214 = vpop.f32.mrb[0].mxu0
        %v3215 = vadd.f32 %v3082, %v3214
        %v3216 = vpop.f32.mrb[0].mxu0
        %v3217 = vpop.f32.mrb[0].mxu0
        %v3218 = vpop.f32.mrb[0].mxu0
        %3219 = vdwg.mxu0
        %v3220 = vmax.f32 %v3215, 0.0
        %v3221 = vld [vmem:[#allocation8 + $0x1c0] sm:$0xf]
        %v3222 = vld [vmem:[#allocation8 + $0x1c4] sm:$0xf]
        %v3223 = vld [vmem:[#allocation8 + $0x1c8] sm:$0xf]
        %v3224 = vld [vmem:[#allocation8 + $0x1cc] sm:$0xf]
        %v3225 = vld [vmem:[#allocation8 + $0x1d0] sm:$0xf]
        %v3226 = vld [vmem:[#allocation8 + $0x1d4] sm:$0xf]
        %v3227 = vld [vmem:[#allocation8 + $0x1d8] sm:$0xf]
        %v3228 = vld [vmem:[#allocation8 + $0x1dc] sm:$0xf]
        %v3229 = vld [vmem:[#allocation8 + $0x1e0] sm:$0xf]
        %v3230 = vld [vmem:[#allocation8 + $0x1e4] sm:$0xf]
        %v3231 = vld [vmem:[#allocation8 + $0x1e8] sm:$0xf]
        %v3232 = vld [vmem:[#allocation8 + $0x1ec] sm:$0xf]
        %v3233 = vld [vmem:[#allocation8 + $0x1f0] sm:$0xf]
        %v3234 = vld [vmem:[#allocation8 + $0x1f4] sm:$0xf]
        %v3235 = vld [vmem:[#allocation8 + $0x1f8] sm:$0xf]
        %v3236 = vld [vmem:[#allocation8 + $0x1fc] sm:$0xf]
        %v3237 = vpack.c.bf16 %v3220, %v3220
        %v3238 = vld [vmem:[#allocation9 + $0x17] sm:$0x1]
        %v3240 = vlaneseq
        %v3241 = vshrl.u32 %v3240, 7
        %v3242 = vsub.s32 0, %v3241
        %v3243 = vrot.slane %v3238, %v3242
        %v3261 = vunpack.c.l.b16 %v3221
        %v3262 = vunpack.c.l.b16 %v3222
        %v3263 = vunpack.c.l.b16 %v3223
        %v3264 = vunpack.c.l.b16 %v3224
        %v3265 = vunpack.c.l.b16 %v3225
        %v3266 = vunpack.c.l.b16 %v3226
        %v3267 = vunpack.c.l.b16 %v3227
        %v3268 = vunpack.c.l.b16 %v3228
        %v3269 = vunpack.c.l.b16 %v3229
        %v3270 = vunpack.c.l.b16 %v3230
        %v3271 = vunpack.c.l.b16 %v3231
        %v3272 = vunpack.c.l.b16 %v3232
        %v3273 = vunpack.c.l.b16 %v3233
        %v3274 = vunpack.c.l.b16 %v3234
        %v3275 = vunpack.c.l.b16 %v3235
        %v3276 = vunpack.c.l.b16 %v3236
        %v3277 = vpack.c.b16 %v3262, %v3261
        %v3278 = vpack.c.b16 %v3264, %v3263
        %v3279 = vpack.c.b16 %v3266, %v3265
        %v3280 = vpack.c.b16 %v3268, %v3267
        %v3281 = vpack.c.b16 %v3270, %v3269
        %v3282 = vpack.c.b16 %v3272, %v3271
        %v3283 = vpack.c.b16 %v3274, %v3273
        %v3284 = vpack.c.b16 %v3276, %v3275
        %3293 = vmatprep.subr.bf16.mxu0 0
        %3294 = vmatpush1.bf16.msra.mxu0 %v3277
        %3295 = vmatprep.subr.bf16.mxu0 0
        %3296 = vmatpush1.bf16.msra.mxu0 %v3278
        %3297 = vmatprep.subr.bf16.mxu0 0
        %3298 = vmatpush1.bf16.msra.mxu0 %v3279
        %3299 = vmatprep.subr.bf16.mxu0 0
        %3300 = vmatpush1.bf16.msra.mxu0 %v3280
        %3301 = vmatprep.subr.bf16.mxu0 0
        %3302 = vmatpush1.bf16.msra.mxu0 %v3281
        %3303 = vmatprep.subr.bf16.mxu0 0
        %3304 = vmatpush1.bf16.msra.mxu0 %v3282
        %3305 = vmatprep.subr.bf16.mxu0 0
        %3306 = vmatpush1.bf16.msra.mxu0 %v3283
        %3307 = vmatprep.subr.bf16.mxu0 0
        %3308 = vmatpush1.bf16.msra.mxu0 %v3284
        %3309 = vmatprep.subr.bf16.mxu0 0
        %3310 = vmatpush1.bf16.msra.mxu0 0
        %3311 = vmatprep.subr.bf16.mxu0 0
        %3312 = vmatpush1.bf16.msra.mxu0 0
        %3313 = vmatprep.subr.bf16.mxu0 0
        %3314 = vmatpush1.bf16.msra.mxu0 0
        %3315 = vmatprep.subr.bf16.mxu0 0
        %3316 = vmatpush1.bf16.msra.mxu0 0
        %3317 = vmatprep.subr.bf16.mxu0 0
        %3318 = vmatpush1.bf16.msra.mxu0 0
        %3319 = vmatprep.subr.bf16.mxu0 0
        %3320 = vmatpush1.bf16.msra.mxu0 0
        %3321 = vmatprep.subr.bf16.mxu0 0
        %3322 = vmatpush1.bf16.msra.mxu0 0
        %3323 = vmatprep.subr.bf16.mxu0 0
        %3324 = vmatpush1.bf16.msra.mxu0 0
        %3325 = vmatprep.mubr.bf16.mxu0 0
        %3326 = vmatmul.mubr.bf16.gmra.mrb[0].mxu0 %v3237
        %v3327 = vpop.f32.mrb[0].mxu0
        %v3328 = vadd.f32 %v3243, %v3327
        %v3329 = vpop.f32.mrb[0].mxu0
        %v3330 = vpop.f32.mrb[0].mxu0
        %v3331 = vpop.f32.mrb[0].mxu0
        %3332 = vdwg.mxu0
        %v3333 = vmax.f32 %v3328, 0.0
        %v3334 = vld [vmem:[#allocation6] sm:$0xff]
        %v3335 = vld [vmem:[#allocation6 + $0x30] sm:$0xff]
        %v3336 = vld [vmem:[#allocation6 + $0x60] sm:$0xff]
        %v3337 = vld [vmem:[#allocation6 + $0x90] sm:$0xff]
        %v3338 = vld [vmem:[#allocation6 + $0xc0] sm:$0xff]
        %v3339 = vld [vmem:[#allocation6 + $0xf0] sm:$0xff]
        %v3340 = vld [vmem:[#allocation6 + $0x120] sm:$0xff]
        %v3341 = vld [vmem:[#allocation6 + $0x150] sm:$0xff]
        %v3342 = vld [vmem:[#allocation6 + $0x180] sm:$0xff]
        %v3343 = vld [vmem:[#allocation6 + $0x1b0] sm:$0xff]
        %v3344 = vld [vmem:[#allocation6 + $0x1e0] sm:$0xff]
        %v3345 = vld [vmem:[#allocation6 + $0x210] sm:$0xff]
        %v3346 = vld [vmem:[#allocation6 + $0x240] sm:$0xff]
        %v3347 = vld [vmem:[#allocation6 + $0x270] sm:$0xff]
        %v3348 = vld [vmem:[#allocation6 + $0x2a0] sm:$0xff]
        %v3349 = vld [vmem:[#allocation6 + $0x2d0] sm:$0xff]
        %v3350 = vpack.c.bf16 %v3333, %v3333
        %v3351 = vld [vmem:[#allocation9 + $0x7] sm:$0x3]
        %v3353 = vlaneseq
        %v3354 = vshrl.u32 %v3353, 7
        %v3355 = vsub.s32 0, %v3354
        %v3356 = vrot.slane %v3351, %v3355
        %v3357 = vlaneseq
        %v3358 = vshrl.u32 %v3357, 7
        %v3359 = vsub.s32 1, %v3358
        %v3360 = vrot.slane %v3351, %v3359
        %v3379 = vunpack.c.l.b16 %v3334
        %v3380 = vunpack.c.h.b16 %v3334
        %v3381 = vunpack.c.l.b16 %v3335
        %v3382 = vunpack.c.h.b16 %v3335
        %v3383 = vunpack.c.l.b16 %v3336
        %v3384 = vunpack.c.h.b16 %v3336
        %v3385 = vunpack.c.l.b16 %v3337
        %v3386 = vunpack.c.h.b16 %v3337
        %v3387 = vunpack.c.l.b16 %v3338
        %v3388 = vunpack.c.h.b16 %v3338
        %v3389 = vunpack.c.l.b16 %v3339
        %v3390 = vunpack.c.h.b16 %v3339
        %v3391 = vunpack.c.l.b16 %v3340
        %v3392 = vunpack.c.h.b16 %v3340
        %v3393 = vunpack.c.l.b16 %v3341
        %v3394 = vunpack.c.h.b16 %v3341
        %v3395 = vunpack.c.l.b16 %v3342
        %v3396 = vunpack.c.h.b16 %v3342
        %v3397 = vunpack.c.l.b16 %v3343
        %v3398 = vunpack.c.h.b16 %v3343
        %v3399 = vunpack.c.l.b16 %v3344
        %v3400 = vunpack.c.h.b16 %v3344
        %v3401 = vunpack.c.l.b16 %v3345
        %v3402 = vunpack.c.h.b16 %v3345
        %v3403 = vunpack.c.l.b16 %v3346
        %v3404 = vunpack.c.h.b16 %v3346
        %v3405 = vunpack.c.l.b16 %v3347
        %v3406 = vunpack.c.h.b16 %v3347
        %v3407 = vunpack.c.l.b16 %v3348
        %v3408 = vunpack.c.h.b16 %v3348
        %v3409 = vunpack.c.l.b16 %v3349
        %v3410 = vunpack.c.h.b16 %v3349
        %v3411 = vpack.c.b16 %v3381, %v3379
        %v3412 = vpack.c.b16 %v3382, %v3380
        %v3413 = vpack.c.b16 %v3385, %v3383
        %v3414 = vpack.c.b16 %v3386, %v3384
        %v3415 = vpack.c.b16 %v3389, %v3387
        %v3416 = vpack.c.b16 %v3390, %v3388
        %v3417 = vpack.c.b16 %v3393, %v3391
        %v3418 = vpack.c.b16 %v3394, %v3392
        %v3419 = vpack.c.b16 %v3397, %v3395
        %v3420 = vpack.c.b16 %v3398, %v3396
        %v3421 = vpack.c.b16 %v3401, %v3399
        %v3422 = vpack.c.b16 %v3402, %v3400
        %v3423 = vpack.c.b16 %v3405, %v3403
        %v3424 = vpack.c.b16 %v3406, %v3404
        %v3425 = vpack.c.b16 %v3409, %v3407
        %v3426 = vpack.c.b16 %v3410, %v3408
        %3443 = vmatprep.subr.bf16.mxu0 %v3412
        %3444 = vmatpush1.bf16.msra.mxu0 %v3411
        %3445 = vmatprep.subr.bf16.mxu0 %v3414
        %3446 = vmatpush1.bf16.msra.mxu0 %v3413
        %3447 = vmatprep.subr.bf16.mxu0 %v3416
        %3448 = vmatpush1.bf16.msra.mxu0 %v3415
        %3449 = vmatprep.subr.bf16.mxu0 %v3418
        %3450 = vmatpush1.bf16.msra.mxu0 %v3417
        %3451 = vmatprep.subr.bf16.mxu0 %v3420
        %3452 = vmatpush1.bf16.msra.mxu0 %v3419
        %3453 = vmatprep.subr.bf16.mxu0 %v3422
        %3454 = vmatpush1.bf16.msra.mxu0 %v3421
        %3455 = vmatprep.subr.bf16.mxu0 %v3424
        %3456 = vmatpush1.bf16.msra.mxu0 %v3423
        %3457 = vmatprep.subr.bf16.mxu0 %v3426
        %3458 = vmatpush1.bf16.msra.mxu0 %v3425
        %3459 = vmatprep.subr.bf16.mxu0 0
        %3460 = vmatpush1.bf16.msra.mxu0 0
        %3461 = vmatprep.subr.bf16.mxu0 0
        %3462 = vmatpush1.bf16.msra.mxu0 0
        %3463 = vmatprep.subr.bf16.mxu0 0
        %3464 = vmatpush1.bf16.msra.mxu0 0
        %3465 = vmatprep.subr.bf16.mxu0 0
        %3466 = vmatpush1.bf16.msra.mxu0 0
        %3467 = vmatprep.subr.bf16.mxu0 0
        %3468 = vmatpush1.bf16.msra.mxu0 0
        %3469 = vmatprep.subr.bf16.mxu0 0
        %3470 = vmatpush1.bf16.msra.mxu0 0
        %3471 = vmatprep.subr.bf16.mxu0 0
        %3472 = vmatpush1.bf16.msra.mxu0 0
        %3473 = vmatprep.subr.bf16.mxu0 0
        %3474 = vmatpush1.bf16.msra.mxu0 0
        %3475 = vmatprep.mubr.bf16.mxu0 0
        %3476 = vmatmul.mubr.bf16.gmra.mrb[0].mxu0 %v3350
        %v3477 = vpop.f32.mrb[0].mxu0
        %v3478 = vadd.f32 %v3356, %v3477
        %v3479 = vpop.f32.mrb[0].mxu0
        %v3480 = vadd.f32 %v3360, %v3479
        %v3481 = vpop.f32.mrb[0].mxu0
        %v3482 = vpop.f32.mrb[0].mxu0
        %3483 = vdwg.mxu0
        %v3484 = vmax.f32 %v3478, 0.0
        %v3485 = vmax.f32 %v3480, 0.0
        %v3486 = vld [vmem:[#allocation6 + $0x8] sm:$0xff]
        %v3487 = vld [vmem:[#allocation6 + $0x10] sm:$0xff]
        %v3488 = vld [vmem:[#allocation6 + $0x38] sm:$0xff]
        %v3489 = vld [vmem:[#allocation6 + $0x40] sm:$0xff]
        %v3490 = vld [vmem:[#allocation6 + $0x68] sm:$0xff]
        %v3491 = vld [vmem:[#allocation6 + $0x70] sm:$0xff]
        %v3492 = vld [vmem:[#allocation6 + $0x98] sm:$0xff]
        %v3493 = vld [vmem:[#allocation6 + $0xa0] sm:$0xff]
        %v3494 = vld [vmem:[#allocation6 + $0xc8] sm:$0xff]
        %v3495 = vld [vmem:[#allocation6 + $0xd0] sm:$0xff]
        %v3496 = vld [vmem:[#allocation6 + $0xf8] sm:$0xff]
        %v3497 = vld [vmem:[#allocation6 + $0x100] sm:$0xff]
        %v3498 = vld [vmem:[#allocation6 + $0x128] sm:$0xff]
        %v3499 = vld [vmem:[#allocation6 + $0x130] sm:$0xff]
        %v3500 = vld [vmem:[#allocation6 + $0x158] sm:$0xff]
        %v3501 = vld [vmem:[#allocation6 + $0x160] sm:$0xff]
        %v3502 = vld [vmem:[#allocation6 + $0x188] sm:$0xff]
        %v3503 = vld [vmem:[#allocation6 + $0x190] sm:$0xff]
        %v3504 = vld [vmem:[#allocation6 + $0x1b8] sm:$0xff]
        %v3505 = vld [vmem:[#allocation6 + $0x1c0] sm:$0xff]
        %v3506 = vld [vmem:[#allocation6 + $0x1e8] sm:$0xff]
        %v3507 = vld [vmem:[#allocation6 + $0x1f0] sm:$0xff]
        %v3508 = vld [vmem:[#allocation6 + $0x218] sm:$0xff]
        %v3509 = vld [vmem:[#allocation6 + $0x220] sm:$0xff]
        %v3510 = vld [vmem:[#allocation6 + $0x248] sm:$0xff]
        %v3511 = vld [vmem:[#allocation6 + $0x250] sm:$0xff]
        %v3512 = vld [vmem:[#allocation6 + $0x278] sm:$0xff]
        %v3513 = vld [vmem:[#allocation6 + $0x280] sm:$0xff]
        %v3514 = vld [vmem:[#allocation6 + $0x2a8] sm:$0xff]
        %v3515 = vld [vmem:[#allocation6 + $0x2b0] sm:$0xff]
        %v3516 = vld [vmem:[#allocation6 + $0x2d8] sm:$0xff]
        %v3517 = vld [vmem:[#allocation6 + $0x2e0] sm:$0xff]
        %v3518 = vld [vmem:[#allocation6 + $0x308] sm:$0xff]
        %v3519 = vld [vmem:[#allocation6 + $0x310] sm:$0xff]
        %v3520 = vld [vmem:[#allocation6 + $0x338] sm:$0xff]
        %v3521 = vld [vmem:[#allocation6 + $0x340] sm:$0xff]
        %v3522 = vld [vmem:[#allocation6 + $0x368] sm:$0xff]
        %v3523 = vld [vmem:[#allocation6 + $0x370] sm:$0xff]
        %v3524 = vld [vmem:[#allocation6 + $0x398] sm:$0xff]
        %v3525 = vld [vmem:[#allocation6 + $0x3a0] sm:$0xff]
        %v3526 = vld [vmem:[#allocation6 + $0x3c8] sm:$0xff]
        %v3527 = vld [vmem:[#allocation6 + $0x3d0] sm:$0xff]
        %v3528 = vld [vmem:[#allocation6 + $0x3f8] sm:$0xff]
        %v3529 = vld [vmem:[#allocation6 + $0x400] sm:$0xff]
        %v3530 = vld [vmem:[#allocation6 + $0x428] sm:$0xff]
        %v3531 = vld [vmem:[#allocation6 + $0x430] sm:$0xff]
        %v3532 = vld [vmem:[#allocation6 + $0x458] sm:$0xff]
        %v3533 = vld [vmem:[#allocation6 + $0x460] sm:$0xff]
        %v3534 = vld [vmem:[#allocation6 + $0x488] sm:$0xff]
        %v3535 = vld [vmem:[#allocation6 + $0x490] sm:$0xff]
        %v3536 = vld [vmem:[#allocation6 + $0x4b8] sm:$0xff]
        %v3537 = vld [vmem:[#allocation6 + $0x4c0] sm:$0xff]
        %v3538 = vld [vmem:[#allocation6 + $0x4e8] sm:$0xff]
        %v3539 = vld [vmem:[#allocation6 + $0x4f0] sm:$0xff]
        %v3540 = vld [vmem:[#allocation6 + $0x518] sm:$0xff]
        %v3541 = vld [vmem:[#allocation6 + $0x520] sm:$0xff]
        %v3542 = vld [vmem:[#allocation6 + $0x548] sm:$0xff]
        %v3543 = vld [vmem:[#allocation6 + $0x550] sm:$0xff]
        %v3544 = vld [vmem:[#allocation6 + $0x578] sm:$0xff]
        %v3545 = vld [vmem:[#allocation6 + $0x580] sm:$0xff]
        %v3546 = vld [vmem:[#allocation6 + $0x5a8] sm:$0xff]
        %v3547 = vld [vmem:[#allocation6 + $0x5b0] sm:$0xff]
        %v3548 = vld [vmem:[#allocation6 + $0x5d8] sm:$0xff]
        %v3549 = vld [vmem:[#allocation6 + $0x5e0] sm:$0xff]
        %v3550 = vpack.c.bf16 %v3484, %v3484
        %v3551 = vpack.c.bf16 %v3485, %v3485
        %v3552 = vld [vmem:[#allocation9 + $0x9] sm:$0xf]
        %v3554 = vlaneseq
        %v3555 = vshrl.u32 %v3554, 7
        %v3556 = vsub.s32 0, %v3555
        %v3557 = vrot.slane %v3552, %v3556
        %v3558 = vlaneseq
        %v3559 = vshrl.u32 %v3558, 7
        %v3560 = vsub.s32 1, %v3559
        %v3561 = vrot.slane %v3552, %v3560
        %v3562 = vlaneseq
        %v3563 = vshrl.u32 %v3562, 7
        %v3564 = vsub.s32 2, %v3563
        %v3565 = vrot.slane %v3552, %v3564
        %v3566 = vlaneseq
        %v3567 = vshrl.u32 %v3566, 7
        %v3568 = vsub.s32 3, %v3567
        %v3569 = vrot.slane %v3552, %v3568
        %v3638 = vunpack.c.l.b16 %v3486
        %v3639 = vunpack.c.h.b16 %v3486
        %v3640 = vunpack.c.l.b16 %v3487
        %v3641 = vunpack.c.h.b16 %v3487
        %v3642 = vunpack.c.l.b16 %v3488
        %v3643 = vunpack.c.h.b16 %v3488
        %v3644 = vunpack.c.l.b16 %v3489
        %v3645 = vunpack.c.h.b16 %v3489
        %v3646 = vunpack.c.l.b16 %v3490
        %v3647 = vunpack.c.h.b16 %v3490
        %v3648 = vunpack.c.l.b16 %v3491
        %v3649 = vunpack.c.h.b16 %v3491
        %v3650 = vunpack.c.l.b16 %v3492
        %v3651 = vunpack.c.h.b16 %v3492
        %v3652 = vunpack.c.l.b16 %v3493
        %v3653 = vunpack.c.h.b16 %v3493
        %v3654 = vunpack.c.l.b16 %v3494
        %v3655 = vunpack.c.h.b16 %v3494
        %v3656 = vunpack.c.l.b16 %v3495
        %v3657 = vunpack.c.h.b16 %v3495
        %v3658 = vunpack.c.l.b16 %v3496
        %v3659 = vunpack.c.h.b16 %v3496
        %v3660 = vunpack.c.l.b16 %v3497
        %v3661 = vunpack.c.h.b16 %v3497
        %v3662 = vunpack.c.l.b16 %v3498
        %v3663 = vunpack.c.h.b16 %v3498
        %v3664 = vunpack.c.l.b16 %v3499
        %v3665 = vunpack.c.h.b16 %v3499
        %v3666 = vunpack.c.l.b16 %v3500
        %v3667 = vunpack.c.h.b16 %v3500
        %v3668 = vunpack.c.l.b16 %v3501
        %v3669 = vunpack.c.h.b16 %v3501
        %v3670 = vunpack.c.l.b16 %v3502
        %v3671 = vunpack.c.h.b16 %v3502
        %v3672 = vunpack.c.l.b16 %v3503
        %v3673 = vunpack.c.h.b16 %v3503
        %v3674 = vunpack.c.l.b16 %v3504
        %v3675 = vunpack.c.h.b16 %v3504
        %v3676 = vunpack.c.l.b16 %v3505
        %v3677 = vunpack.c.h.b16 %v3505
        %v3678 = vunpack.c.l.b16 %v3506
        %v3679 = vunpack.c.h.b16 %v3506
        %v3680 = vunpack.c.l.b16 %v3507
        %v3681 = vunpack.c.h.b16 %v3507
        %v3682 = vunpack.c.l.b16 %v3508
        %v3683 = vunpack.c.h.b16 %v3508
        %v3684 = vunpack.c.l.b16 %v3509
        %v3685 = vunpack.c.h.b16 %v3509
        %v3686 = vunpack.c.l.b16 %v3510
        %v3687 = vunpack.c.h.b16 %v3510
        %v3688 = vunpack.c.l.b16 %v3511
        %v3689 = vunpack.c.h.b16 %v3511
        %v3690 = vunpack.c.l.b16 %v3512
        %v3691 = vunpack.c.h.b16 %v3512
        %v3692 = vunpack.c.l.b16 %v3513
        %v3693 = vunpack.c.h.b16 %v3513
        %v3694 = vunpack.c.l.b16 %v3514
        %v3695 = vunpack.c.h.b16 %v3514
        %v3696 = vunpack.c.l.b16 %v3515
        %v3697 = vunpack.c.h.b16 %v3515
        %v3698 = vunpack.c.l.b16 %v3516
        %v3699 = vunpack.c.h.b16 %v3516
        %v3700 = vunpack.c.l.b16 %v3517
        %v3701 = vunpack.c.h.b16 %v3517
        %v3702 = vunpack.c.l.b16 %v3518
        %v3703 = vunpack.c.h.b16 %v3518
        %v3704 = vunpack.c.l.b16 %v3519
        %v3705 = vunpack.c.h.b16 %v3519
        %v3706 = vunpack.c.l.b16 %v3520
        %v3707 = vunpack.c.h.b16 %v3520
        %v3708 = vunpack.c.l.b16 %v3521
        %v3709 = vunpack.c.h.b16 %v3521
        %v3710 = vunpack.c.l.b16 %v3522
        %v3711 = vunpack.c.h.b16 %v3522
        %v3712 = vunpack.c.l.b16 %v3523
        %v3713 = vunpack.c.h.b16 %v3523
        %v3714 = vunpack.c.l.b16 %v3524
        %v3715 = vunpack.c.h.b16 %v3524
        %v3716 = vunpack.c.l.b16 %v3525
        %v3717 = vunpack.c.h.b16 %v3525
        %v3718 = vunpack.c.l.b16 %v3526
        %v3719 = vunpack.c.h.b16 %v3526
        %v3720 = vunpack.c.l.b16 %v3527
        %v3721 = vunpack.c.h.b16 %v3527
        %v3722 = vunpack.c.l.b16 %v3528
        %v3723 = vunpack.c.h.b16 %v3528
        %v3724 = vunpack.c.l.b16 %v3529
        %v3725 = vunpack.c.h.b16 %v3529
        %v3726 = vunpack.c.l.b16 %v3530
        %v3727 = vunpack.c.h.b16 %v3530
        %v3728 = vunpack.c.l.b16 %v3531
        %v3729 = vunpack.c.h.b16 %v3531
        %v3730 = vunpack.c.l.b16 %v3532
        %v3731 = vunpack.c.h.b16 %v3532
        %v3732 = vunpack.c.l.b16 %v3533
        %v3733 = vunpack.c.h.b16 %v3533
        %v3734 = vunpack.c.l.b16 %v3534
        %v3735 = vunpack.c.h.b16 %v3534
        %v3736 = vunpack.c.l.b16 %v3535
        %v3737 = vunpack.c.h.b16 %v3535
        %v3738 = vunpack.c.l.b16 %v3536
        %v3739 = vunpack.c.h.b16 %v3536
        %v3740 = vunpack.c.l.b16 %v3537
        %v3741 = vunpack.c.h.b16 %v3537
        %v3742 = vunpack.c.l.b16 %v3538
        %v3743 = vunpack.c.h.b16 %v3538
        %v3744 = vunpack.c.l.b16 %v3539
        %v3745 = vunpack.c.h.b16 %v3539
        %v3746 = vunpack.c.l.b16 %v3540
        %v3747 = vunpack.c.h.b16 %v3540
        %v3748 = vunpack.c.l.b16 %v3541
        %v3749 = vunpack.c.h.b16 %v3541
        %v3750 = vunpack.c.l.b16 %v3542
        %v3751 = vunpack.c.h.b16 %v3542
        %v3752 = vunpack.c.l.b16 %v3543
        %v3753 = vunpack.c.h.b16 %v3543
        %v3754 = vunpack.c.l.b16 %v3544
        %v3755 = vunpack.c.h.b16 %v3544
        %v3756 = vunpack.c.l.b16 %v3545
        %v3757 = vunpack.c.h.b16 %v3545
        %v3758 = vunpack.c.l.b16 %v3546
        %v3759 = vunpack.c.h.b16 %v3546
        %v3760 = vunpack.c.l.b16 %v3547
        %v3761 = vunpack.c.h.b16 %v3547
        %v3762 = vunpack.c.l.b16 %v3548
        %v3763 = vunpack.c.h.b16 %v3548
        %v3764 = vunpack.c.l.b16 %v3549
        %v3765 = vunpack.c.h.b16 %v3549
        %v3766 = vpack.c.b16 %v3642, %v3638
        %v3767 = vpack.c.b16 %v3643, %v3639
        %v3768 = vpack.c.b16 %v3644, %v3640
        %v3769 = vpack.c.b16 %v3645, %v3641
        %v3770 = vpack.c.b16 %v3650, %v3646
        %v3771 = vpack.c.b16 %v3651, %v3647
        %v3772 = vpack.c.b16 %v3652, %v3648
        %v3773 = vpack.c.b16 %v3653, %v3649
        %v3774 = vpack.c.b16 %v3658, %v3654
        %v3775 = vpack.c.b16 %v3659, %v3655
        %v3776 = vpack.c.b16 %v3660, %v3656
        %v3777 = vpack.c.b16 %v3661, %v3657
        %v3778 = vpack.c.b16 %v3666, %v3662
        %v3779 = vpack.c.b16 %v3667, %v3663
        %v3780 = vpack.c.b16 %v3668, %v3664
        %v3781 = vpack.c.b16 %v3669, %v3665
        %v3782 = vpack.c.b16 %v3674, %v3670
        %v3783 = vpack.c.b16 %v3675, %v3671
        %v3784 = vpack.c.b16 %v3676, %v3672
        %v3785 = vpack.c.b16 %v3677, %v3673
        %v3786 = vpack.c.b16 %v3682, %v3678
        %v3787 = vpack.c.b16 %v3683, %v3679
        %v3788 = vpack.c.b16 %v3684, %v3680
        %v3789 = vpack.c.b16 %v3685, %v3681
        %v3790 = vpack.c.b16 %v3690, %v3686
        %v3791 = vpack.c.b16 %v3691, %v3687
        %v3792 = vpack.c.b16 %v3692, %v3688
        %v3793 = vpack.c.b16 %v3693, %v3689
        %v3794 = vpack.c.b16 %v3698, %v3694
        %v3795 = vpack.c.b16 %v3699, %v3695
        %v3796 = vpack.c.b16 %v3700, %v3696
        %v3797 = vpack.c.b16 %v3701, %v3697
        %v3798 = vpack.c.b16 %v3706, %v3702
        %v3799 = vpack.c.b16 %v3707, %v3703
        %v3800 = vpack.c.b16 %v3708, %v3704
        %v3801 = vpack.c.b16 %v3709, %v3705
        %v3802 = vpack.c.b16 %v3714, %v3710
        %v3803 = vpack.c.b16 %v3715, %v3711
        %v3804 = vpack.c.b16 %v3716, %v3712
        %v3805 = vpack.c.b16 %v3717, %v3713
        %v3806 = vpack.c.b16 %v3722, %v3718
        %v3807 = vpack.c.b16 %v3723, %v3719
        %v3808 = vpack.c.b16 %v3724, %v3720
        %v3809 = vpack.c.b16 %v3725, %v3721
        %v3810 = vpack.c.b16 %v3730, %v3726
        %v3811 = vpack.c.b16 %v3731, %v3727
        %v3812 = vpack.c.b16 %v3732, %v3728
        %v3813 = vpack.c.b16 %v3733, %v3729
        %v3814 = vpack.c.b16 %v3738, %v3734
        %v3815 = vpack.c.b16 %v3739, %v3735
        %v3816 = vpack.c.b16 %v3740, %v3736
        %v3817 = vpack.c.b16 %v3741, %v3737
        %v3818 = vpack.c.b16 %v3746, %v3742
        %v3819 = vpack.c.b16 %v3747, %v3743
        %v3820 = vpack.c.b16 %v3748, %v3744
        %v3821 = vpack.c.b16 %v3749, %v3745
        %v3822 = vpack.c.b16 %v3754, %v3750
        %v3823 = vpack.c.b16 %v3755, %v3751
        %v3824 = vpack.c.b16 %v3756, %v3752
        %v3825 = vpack.c.b16 %v3757, %v3753
        %v3826 = vpack.c.b16 %v3762, %v3758
        %v3827 = vpack.c.b16 %v3763, %v3759
        %v3828 = vpack.c.b16 %v3764, %v3760
        %v3829 = vpack.c.b16 %v3765, %v3761
        %3894 = vmatprep.subr.bf16.mxu0 %v3767
        %3895 = vmatpush1.bf16.msra.mxu0 %v3766
        %3896 = vmatprep.subr.bf16.mxu0 %v3771
        %3897 = vmatpush1.bf16.msra.mxu0 %v3770
        %3898 = vmatprep.subr.bf16.mxu0 %v3775
        %3899 = vmatpush1.bf16.msra.mxu0 %v3774
        %3900 = vmatprep.subr.bf16.mxu0 %v3779
        %3901 = vmatpush1.bf16.msra.mxu0 %v3778
        %3902 = vmatprep.subr.bf16.mxu0 %v3783
        %3903 = vmatpush1.bf16.msra.mxu0 %v3782
        %3904 = vmatprep.subr.bf16.mxu0 %v3787
        %3905 = vmatpush1.bf16.msra.mxu0 %v3786
        %3906 = vmatprep.subr.bf16.mxu0 %v3791
        %3907 = vmatpush1.bf16.msra.mxu0 %v3790
        %3908 = vmatprep.subr.bf16.mxu0 %v3795
        %3909 = vmatpush1.bf16.msra.mxu0 %v3794
        %3910 = vmatprep.subr.bf16.mxu0 %v3799
        %3911 = vmatpush1.bf16.msra.mxu0 %v3798
        %3912 = vmatprep.subr.bf16.mxu0 %v3803
        %3913 = vmatpush1.bf16.msra.mxu0 %v3802
        %3914 = vmatprep.subr.bf16.mxu0 %v3807
        %3915 = vmatpush1.bf16.msra.mxu0 %v3806
        %3916 = vmatprep.subr.bf16.mxu0 %v3811
        %3917 = vmatpush1.bf16.msra.mxu0 %v3810
        %3918 = vmatprep.subr.bf16.mxu0 %v3815
        %3919 = vmatpush1.bf16.msra.mxu0 %v3814
        %3920 = vmatprep.subr.bf16.mxu0 %v3819
        %3921 = vmatpush1.bf16.msra.mxu0 %v3818
        %3922 = vmatprep.subr.bf16.mxu0 %v3823
        %3923 = vmatpush1.bf16.msra.mxu0 %v3822
        %3924 = vmatprep.subr.bf16.mxu0 %v3827
        %3925 = vmatpush1.bf16.msra.mxu0 %v3826
        %3926 = vmatprep.mubr.bf16.mxu0 %v3551
        %3927 = vmatmul.mubr.bf16.gmra.mrb[0].mxu0 %v3550
        %v3928 = vpop.f32.mrb[0].mxu0
        %v3929 = vadd.f32 %v3557, %v3928
        %v3930 = vpop.f32.mrb[0].mxu0
        %v3931 = vadd.f32 %v3561, %v3930
        %v3932 = vpop.f32.mrb[0].mxu0
        %v3933 = vpop.f32.mrb[0].mxu0
        %3934 = vdwg.mxu0
        %3935 = vmatprep.subr.bf16.mxu0 %v3769
        %3936 = vmatpush1.bf16.msra.mxu0 %v3768
        %3937 = vmatprep.subr.bf16.mxu0 %v3773
        %3938 = vmatpush1.bf16.msra.mxu0 %v3772
        %3939 = vmatprep.subr.bf16.mxu0 %v3777
        %3940 = vmatpush1.bf16.msra.mxu0 %v3776
        %3941 = vmatprep.subr.bf16.mxu0 %v3781
        %3942 = vmatpush1.bf16.msra.mxu0 %v3780
        %3943 = vmatprep.subr.bf16.mxu0 %v3785
        %3944 = vmatpush1.bf16.msra.mxu0 %v3784
        %3945 = vmatprep.subr.bf16.mxu0 %v3789
        %3946 = vmatpush1.bf16.msra.mxu0 %v3788
        %3947 = vmatprep.subr.bf16.mxu0 %v3793
        %3948 = vmatpush1.bf16.msra.mxu0 %v3792
        %3949 = vmatprep.subr.bf16.mxu0 %v3797
        %3950 = vmatpush1.bf16.msra.mxu0 %v3796
        %3951 = vmatprep.subr.bf16.mxu0 %v3801
        %3952 = vmatpush1.bf16.msra.mxu0 %v3800
        %3953 = vmatprep.subr.bf16.mxu0 %v3805
        %3954 = vmatpush1.bf16.msra.mxu0 %v3804
        %3955 = vmatprep.subr.bf16.mxu0 %v3809
        %3956 = vmatpush1.bf16.msra.mxu0 %v3808
        %3957 = vmatprep.subr.bf16.mxu0 %v3813
        %3958 = vmatpush1.bf16.msra.mxu0 %v3812
        %3959 = vmatprep.subr.bf16.mxu0 %v3817
        %3960 = vmatpush1.bf16.msra.mxu0 %v3816
        %3961 = vmatprep.subr.bf16.mxu0 %v3821
        %3962 = vmatpush1.bf16.msra.mxu0 %v3820
        %3963 = vmatprep.subr.bf16.mxu0 %v3825
        %3964 = vmatpush1.bf16.msra.mxu0 %v3824
        %3965 = vmatprep.subr.bf16.mxu0 %v3829
        %3966 = vmatpush1.bf16.msra.mxu0 %v3828
        %3967 = vmatprep.mubr.bf16.mxu0 %v3551
        %3968 = vmatmul.mubr.bf16.gmra.mrb[0].mxu0 %v3550
        %v3969 = vpop.f32.mrb[0].mxu0
        %v3970 = vadd.f32 %v3565, %v3969
        %v3971 = vpop.f32.mrb[0].mxu0
        %v3972 = vadd.f32 %v3569, %v3971
        %v3973 = vpop.f32.mrb[0].mxu0
        %v3974 = vpop.f32.mrb[0].mxu0
        %3975 = vdwg.mxu0
        %v3976 = vmax.f32 %v3929, 0.0
        %v3977 = vmax.f32 %v3931, 0.0
        %v3978 = vmax.f32 %v3970, 0.0
        %v3979 = vmax.f32 %v3972, 0.0
        %v3980 = vld [vmem:[#allocation6 + $0x18] sm:$0xff]
        %v3981 = vld [vmem:[#allocation6 + $0x20] sm:$0xff]
        %v3982 = vld [vmem:[#allocation6 + $0x28] sm:$0xff]
        %v3983 = vld [vmem:[#allocation6 + $0x48] sm:$0xff]
        %v3984 = vld [vmem:[#allocation6 + $0x50] sm:$0xff]
        %v3985 = vld [vmem:[#allocation6 + $0x58] sm:$0xff]
        %v3986 = vld [vmem:[#allocation6 + $0x78] sm:$0xff]
        %v3987 = vld [vmem:[#allocation6 + $0x80] sm:$0xff]
        %v3988 = vld [vmem:[#allocation6 + $0x88] sm:$0xff]
        %v3989 = vld [vmem:[#allocation6 + $0xa8] sm:$0xff]
        %v3990 = vld [vmem:[#allocation6 + $0xb0] sm:$0xff]
        %v3991 = vld [vmem:[#allocation6 + $0xb8] sm:$0xff]
        %v3992 = vld [vmem:[#allocation6 + $0xd8] sm:$0xff]
        %v3993 = vld [vmem:[#allocation6 + $0xe0] sm:$0xff]
        %v3994 = vld [vmem:[#allocation6 + $0xe8] sm:$0xff]
        %v3995 = vld [vmem:[#allocation6 + $0x108] sm:$0xff]
        %v3996 = vld [vmem:[#allocation6 + $0x110] sm:$0xff]
        %v3997 = vld [vmem:[#allocation6 + $0x118] sm:$0xff]
        %v3998 = vld [vmem:[#allocation6 + $0x138] sm:$0xff]
        %v3999 = vld [vmem:[#allocation6 + $0x140] sm:$0xff]
        %v4000 = vld [vmem:[#allocation6 + $0x148] sm:$0xff]
        %v4001 = vld [vmem:[#allocation6 + $0x168] sm:$0xff]
        %v4002 = vld [vmem:[#allocation6 + $0x170] sm:$0xff]
        %v4003 = vld [vmem:[#allocation6 + $0x178] sm:$0xff]
        %v4004 = vld [vmem:[#allocation6 + $0x198] sm:$0xff]
        %v4005 = vld [vmem:[#allocation6 + $0x1a0] sm:$0xff]
        %v4006 = vld [vmem:[#allocation6 + $0x1a8] sm:$0xff]
        %v4007 = vld [vmem:[#allocation6 + $0x1c8] sm:$0xff]
        %v4008 = vld [vmem:[#allocation6 + $0x1d0] sm:$0xff]
        %v4009 = vld [vmem:[#allocation6 + $0x1d8] sm:$0xff]
        %v4010 = vld [vmem:[#allocation6 + $0x1f8] sm:$0xff]
        %v4011 = vld [vmem:[#allocation6 + $0x200] sm:$0xff]
        %v4012 = vld [vmem:[#allocation6 + $0x208] sm:$0xff]
        %v4013 = vld [vmem:[#allocation6 + $0x228] sm:$0xff]
        %v4014 = vld [vmem:[#allocation6 + $0x230] sm:$0xff]
        %v4015 = vld [vmem:[#allocation6 + $0x238] sm:$0xff]
        %v4016 = vld [vmem:[#allocation6 + $0x258] sm:$0xff]
        %v4017 = vld [vmem:[#allocation6 + $0x260] sm:$0xff]
        %v4018 = vld [vmem:[#allocation6 + $0x268] sm:$0xff]
        %v4019 = vld [vmem:[#allocation6 + $0x288] sm:$0xff]
        %v4020 = vld [vmem:[#allocation6 + $0x290] sm:$0xff]
        %v4021 = vld [vmem:[#allocation6 + $0x298] sm:$0xff]
        %v4022 = vld [vmem:[#allocation6 + $0x2b8] sm:$0xff]
        %v4023 = vld [vmem:[#allocation6 + $0x2c0] sm:$0xff]
        %v4024 = vld [vmem:[#allocation6 + $0x2c8] sm:$0xff]
        %v4025 = vld [vmem:[#allocation6 + $0x2e8] sm:$0xff]
        %v4026 = vld [vmem:[#allocation6 + $0x2f0] sm:$0xff]
        %v4027 = vld [vmem:[#allocation6 + $0x2f8] sm:$0xff]
        %v4028 = vld [vmem:[#allocation6 + $0x318] sm:$0xff]
        %v4029 = vld [vmem:[#allocation6 + $0x320] sm:$0xff]
        %v4030 = vld [vmem:[#allocation6 + $0x328] sm:$0xff]
        %v4031 = vld [vmem:[#allocation6 + $0x348] sm:$0xff]
        %v4032 = vld [vmem:[#allocation6 + $0x350] sm:$0xff]
        %v4033 = vld [vmem:[#allocation6 + $0x358] sm:$0xff]
        %v4034 = vld [vmem:[#allocation6 + $0x378] sm:$0xff]
        %v4035 = vld [vmem:[#allocation6 + $0x380] sm:$0xff]
        %v4036 = vld [vmem:[#allocation6 + $0x388] sm:$0xff]
        %v4037 = vld [vmem:[#allocation6 + $0x3a8] sm:$0xff]
        %v4038 = vld [vmem:[#allocation6 + $0x3b0] sm:$0xff]
        %v4039 = vld [vmem:[#allocation6 + $0x3b8] sm:$0xff]
        %v4040 = vld [vmem:[#allocation6 + $0x3d8] sm:$0xff]
        %v4041 = vld [vmem:[#allocation6 + $0x3e0] sm:$0xff]
        %v4042 = vld [vmem:[#allocation6 + $0x3e8] sm:$0xff]
        %v4043 = vld [vmem:[#allocation6 + $0x408] sm:$0xff]
        %v4044 = vld [vmem:[#allocation6 + $0x410] sm:$0xff]
        %v4045 = vld [vmem:[#allocation6 + $0x418] sm:$0xff]
        %v4046 = vld [vmem:[#allocation6 + $0x438] sm:$0xff]
        %v4047 = vld [vmem:[#allocation6 + $0x440] sm:$0xff]
        %v4048 = vld [vmem:[#allocation6 + $0x448] sm:$0xff]
        %v4049 = vld [vmem:[#allocation6 + $0x468] sm:$0xff]
        %v4050 = vld [vmem:[#allocation6 + $0x470] sm:$0xff]
        %v4051 = vld [vmem:[#allocation6 + $0x478] sm:$0xff]
        %v4052 = vld [vmem:[#allocation6 + $0x498] sm:$0xff]
        %v4053 = vld [vmem:[#allocation6 + $0x4a0] sm:$0xff]
        %v4054 = vld [vmem:[#allocation6 + $0x4a8] sm:$0xff]
        %v4055 = vld [vmem:[#allocation6 + $0x4c8] sm:$0xff]
        %v4056 = vld [vmem:[#allocation6 + $0x4d0] sm:$0xff]
        %v4057 = vld [vmem:[#allocation6 + $0x4d8] sm:$0xff]
        %v4058 = vld [vmem:[#allocation6 + $0x4f8] sm:$0xff]
        %v4059 = vld [vmem:[#allocation6 + $0x500] sm:$0xff]
        %v4060 = vld [vmem:[#allocation6 + $0x508] sm:$0xff]
        %v4061 = vld [vmem:[#allocation6 + $0x528] sm:$0xff]
        %v4062 = vld [vmem:[#allocation6 + $0x530] sm:$0xff]
        %v4063 = vld [vmem:[#allocation6 + $0x538] sm:$0xff]
        %v4064 = vld [vmem:[#allocation6 + $0x558] sm:$0xff]
        %v4065 = vld [vmem:[#allocation6 + $0x560] sm:$0xff]
        %v4066 = vld [vmem:[#allocation6 + $0x568] sm:$0xff]
        %v4067 = vld [vmem:[#allocation6 + $0x588] sm:$0xff]
        %v4068 = vld [vmem:[#allocation6 + $0x590] sm:$0xff]
        %v4069 = vld [vmem:[#allocation6 + $0x598] sm:$0xff]
        %v4070 = vld [vmem:[#allocation6 + $0x5b8] sm:$0xff]
        %v4071 = vld [vmem:[#allocation6 + $0x5c0] sm:$0xff]
        %v4072 = vld [vmem:[#allocation6 + $0x5c8] sm:$0xff]
        %v4073 = vld [vmem:[#allocation6 + $0x5e8] sm:$0xff]
        %v4074 = vld [vmem:[#allocation6 + $0x5f0] sm:$0xff]
        %v4075 = vld [vmem:[#allocation6 + $0x5f8] sm:$0xff]
        %v4076 = vld [vmem:[#allocation6 + $0x618] sm:$0xff]
        %v4077 = vld [vmem:[#allocation6 + $0x620] sm:$0xff]
        %v4078 = vld [vmem:[#allocation6 + $0x628] sm:$0xff]
        %v4079 = vld [vmem:[#allocation6 + $0x648] sm:$0xff]
        %v4080 = vld [vmem:[#allocation6 + $0x650] sm:$0xff]
        %v4081 = vld [vmem:[#allocation6 + $0x658] sm:$0xff]
        %v4082 = vld [vmem:[#allocation6 + $0x678] sm:$0xff]
        %v4083 = vld [vmem:[#allocation6 + $0x680] sm:$0xff]
        %v4084 = vld [vmem:[#allocation6 + $0x688] sm:$0xff]
        %v4085 = vld [vmem:[#allocation6 + $0x6a8] sm:$0xff]
        %v4086 = vld [vmem:[#allocation6 + $0x6b0] sm:$0xff]
        %v4087 = vld [vmem:[#allocation6 + $0x6b8] sm:$0xff]
        %v4088 = vld [vmem:[#allocation6 + $0x6d8] sm:$0xff]
        %v4089 = vld [vmem:[#allocation6 + $0x6e0] sm:$0xff]
        %v4090 = vld [vmem:[#allocation6 + $0x6e8] sm:$0xff]
        %v4091 = vld [vmem:[#allocation6 + $0x708] sm:$0xff]
        %v4092 = vld [vmem:[#allocation6 + $0x710] sm:$0xff]
        %v4093 = vld [vmem:[#allocation6 + $0x718] sm:$0xff]
        %v4094 = vld [vmem:[#allocation6 + $0x738] sm:$0xff]
        %v4095 = vld [vmem:[#allocation6 + $0x740] sm:$0xff]
        %v4096 = vld [vmem:[#allocation6 + $0x748] sm:$0xff]
        %v4097 = vld [vmem:[#allocation6 + $0x768] sm:$0xff]
        %v4098 = vld [vmem:[#allocation6 + $0x770] sm:$0xff]
        %v4099 = vld [vmem:[#allocation6 + $0x778] sm:$0xff]
        %v4100 = vld [vmem:[#allocation6 + $0x798] sm:$0xff]
        %v4101 = vld [vmem:[#allocation6 + $0x7a0] sm:$0xff]
        %v4102 = vld [vmem:[#allocation6 + $0x7a8] sm:$0xff]
        %v4103 = vld [vmem:[#allocation6 + $0x7c8] sm:$0xff]
        %v4104 = vld [vmem:[#allocation6 + $0x7d0] sm:$0xff]
        %v4105 = vld [vmem:[#allocation6 + $0x7d8] sm:$0xff]
        %v4106 = vld [vmem:[#allocation6 + $0x7f8] sm:$0xff]
        %v4107 = vld [vmem:[#allocation6 + $0x800] sm:$0xff]
        %v4108 = vld [vmem:[#allocation6 + $0x808] sm:$0xff]
        %v4109 = vld [vmem:[#allocation6 + $0x828] sm:$0xff]
        %v4110 = vld [vmem:[#allocation6 + $0x830] sm:$0xff]
        %v4111 = vld [vmem:[#allocation6 + $0x838] sm:$0xff]
        %v4112 = vld [vmem:[#allocation6 + $0x858] sm:$0xff]
        %v4113 = vld [vmem:[#allocation6 + $0x860] sm:$0xff]
        %v4114 = vld [vmem:[#allocation6 + $0x868] sm:$0xff]
        %v4115 = vld [vmem:[#allocation6 + $0x888] sm:$0xff]
        %v4116 = vld [vmem:[#allocation6 + $0x890] sm:$0xff]
        %v4117 = vld [vmem:[#allocation6 + $0x898] sm:$0xff]
        %v4118 = vld [vmem:[#allocation6 + $0x8b8] sm:$0xff]
        %v4119 = vld [vmem:[#allocation6 + $0x8c0] sm:$0xff]
        %v4120 = vld [vmem:[#allocation6 + $0x8c8] sm:$0xff]
        %v4121 = vld [vmem:[#allocation6 + $0x8e8] sm:$0xff]
        %v4122 = vld [vmem:[#allocation6 + $0x8f0] sm:$0xff]
        %v4123 = vld [vmem:[#allocation6 + $0x8f8] sm:$0xff]
        %v4124 = vld [vmem:[#allocation6 + $0x918] sm:$0xff]
        %v4125 = vld [vmem:[#allocation6 + $0x920] sm:$0xff]
        %v4126 = vld [vmem:[#allocation6 + $0x928] sm:$0xff]
        %v4127 = vld [vmem:[#allocation6 + $0x948] sm:$0xff]
        %v4128 = vld [vmem:[#allocation6 + $0x950] sm:$0xff]
        %v4129 = vld [vmem:[#allocation6 + $0x958] sm:$0xff]
        %v4130 = vld [vmem:[#allocation6 + $0x978] sm:$0xff]
        %v4131 = vld [vmem:[#allocation6 + $0x980] sm:$0xff]
        %v4132 = vld [vmem:[#allocation6 + $0x988] sm:$0xff]
        %v4133 = vld [vmem:[#allocation6 + $0x9a8] sm:$0xff]
        %v4134 = vld [vmem:[#allocation6 + $0x9b0] sm:$0xff]
        %v4135 = vld [vmem:[#allocation6 + $0x9b8] sm:$0xff]
        %v4136 = vld [vmem:[#allocation6 + $0x9d8] sm:$0xff]
        %v4137 = vld [vmem:[#allocation6 + $0x9e0] sm:$0xff]
        %v4138 = vld [vmem:[#allocation6 + $0x9e8] sm:$0xff]
        %v4139 = vld [vmem:[#allocation6 + $0xa08] sm:$0xff]
        %v4140 = vld [vmem:[#allocation6 + $0xa10] sm:$0xff]
        %v4141 = vld [vmem:[#allocation6 + $0xa18] sm:$0xff]
        %v4142 = vld [vmem:[#allocation6 + $0xa38] sm:$0xff]
        %v4143 = vld [vmem:[#allocation6 + $0xa40] sm:$0xff]
        %v4144 = vld [vmem:[#allocation6 + $0xa48] sm:$0xff]
        %v4145 = vld [vmem:[#allocation6 + $0xa68] sm:$0xff]
        %v4146 = vld [vmem:[#allocation6 + $0xa70] sm:$0xff]
        %v4147 = vld [vmem:[#allocation6 + $0xa78] sm:$0xff]
        %v4148 = vld [vmem:[#allocation6 + $0xa98] sm:$0xff]
        %v4149 = vld [vmem:[#allocation6 + $0xaa0] sm:$0xff]
        %v4150 = vld [vmem:[#allocation6 + $0xaa8] sm:$0xff]
        %v4151 = vld [vmem:[#allocation6 + $0xac8] sm:$0xff]
        %v4152 = vld [vmem:[#allocation6 + $0xad0] sm:$0xff]
        %v4153 = vld [vmem:[#allocation6 + $0xad8] sm:$0xff]
        %v4154 = vld [vmem:[#allocation6 + $0xaf8] sm:$0xff]
        %v4155 = vld [vmem:[#allocation6 + $0xb00] sm:$0xff]
        %v4156 = vld [vmem:[#allocation6 + $0xb08] sm:$0xff]
        %v4157 = vld [vmem:[#allocation6 + $0xb28] sm:$0xff]
        %v4158 = vld [vmem:[#allocation6 + $0xb30] sm:$0xff]
        %v4159 = vld [vmem:[#allocation6 + $0xb38] sm:$0xff]
        %v4160 = vld [vmem:[#allocation6 + $0xb58] sm:$0xff]
        %v4161 = vld [vmem:[#allocation6 + $0xb60] sm:$0xff]
        %v4162 = vld [vmem:[#allocation6 + $0xb68] sm:$0xff]
        %v4163 = vld [vmem:[#allocation6 + $0xb88] sm:$0xff]
        %v4164 = vld [vmem:[#allocation6 + $0xb90] sm:$0xff]
        %v4165 = vld [vmem:[#allocation6 + $0xb98] sm:$0xff]
        %v4166 = vld [vmem:[#allocation6 + $0xbb8] sm:$0xff]
        %v4167 = vld [vmem:[#allocation6 + $0xbc0] sm:$0xff]
        %v4168 = vld [vmem:[#allocation6 + $0xbc8] sm:$0xff]
        %v4169 = vld [vmem:[#allocation6 + $0xbe8] sm:$0xff]
        %v4170 = vld [vmem:[#allocation6 + $0xbf0] sm:$0xff]
        %v4171 = vld [vmem:[#allocation6 + $0xbf8] sm:$0xff]
        %v4172 = vpack.c.bf16 %v3976, %v3976
        %v4173 = vpack.c.bf16 %v3977, %v3977
        %v4174 = vpack.c.bf16 %v3978, %v3978
        %v4175 = vpack.c.bf16 %v3979, %v3979
        %v4176 = vld [vmem:[#allocation9 + $0xd] sm:$0x3f]
        %v4178 = vlaneseq
        %v4179 = vshrl.u32 %v4178, 7
        %v4180 = vsub.s32 0, %v4179
        %v4181 = vrot.slane %v4176, %v4180
        %v4182 = vlaneseq
        %v4183 = vshrl.u32 %v4182, 7
        %v4184 = vsub.s32 1, %v4183
        %v4185 = vrot.slane %v4176, %v4184
        %v4186 = vlaneseq
        %v4187 = vshrl.u32 %v4186, 7
        %v4188 = vsub.s32 2, %v4187
        %v4189 = vrot.slane %v4176, %v4188
        %v4190 = vlaneseq
        %v4191 = vshrl.u32 %v4190, 7
        %v4192 = vsub.s32 3, %v4191
        %v4193 = vrot.slane %v4176, %v4192
        %v4194 = vlaneseq
        %v4195 = vshrl.u32 %v4194, 7
        %v4196 = vsub.s32 4, %v4195
        %v4197 = vrot.slane %v4176, %v4196
        %v4198 = vlaneseq
        %v4199 = vshrl.u32 %v4198, 7
        %v4200 = vsub.s32 5, %v4199
        %v4201 = vrot.slane %v4176, %v4200
        %v4400 = vunpack.c.l.b16 %v3980
        %v4401 = vunpack.c.h.b16 %v3980
        %v4402 = vunpack.c.l.b16 %v3981
        %v4403 = vunpack.c.h.b16 %v3981
        %v4404 = vunpack.c.l.b16 %v3982
        %v4405 = vunpack.c.h.b16 %v3982
        %v4406 = vunpack.c.l.b16 %v3983
        %v4407 = vunpack.c.h.b16 %v3983
        %v4408 = vunpack.c.l.b16 %v3984
        %v4409 = vunpack.c.h.b16 %v3984
        %v4410 = vunpack.c.l.b16 %v3985
        %v4411 = vunpack.c.h.b16 %v3985
        %v4412 = vunpack.c.l.b16 %v3986
        %v4413 = vunpack.c.h.b16 %v3986
        %v4414 = vunpack.c.l.b16 %v3987
        %v4415 = vunpack.c.h.b16 %v3987
        %v4416 = vunpack.c.l.b16 %v3988
        %v4417 = vunpack.c.h.b16 %v3988
        %v4418 = vunpack.c.l.b16 %v3989
        %v4419 = vunpack.c.h.b16 %v3989
        %v4420 = vunpack.c.l.b16 %v3990
        %v4421 = vunpack.c.h.b16 %v3990
        %v4422 = vunpack.c.l.b16 %v3991
        %v4423 = vunpack.c.h.b16 %v3991
        %v4424 = vunpack.c.l.b16 %v3992
        %v4425 = vunpack.c.h.b16 %v3992
        %v4426 = vunpack.c.l.b16 %v3993
        %v4427 = vunpack.c.h.b16 %v3993
        %v4428 = vunpack.c.l.b16 %v3994
        %v4429 = vunpack.c.h.b16 %v3994
        %v4430 = vunpack.c.l.b16 %v3995
        %v4431 = vunpack.c.h.b16 %v3995
        %v4432 = vunpack.c.l.b16 %v3996
        %v4433 = vunpack.c.h.b16 %v3996
        %v4434 = vunpack.c.l.b16 %v3997
        %v4435 = vunpack.c.h.b16 %v3997
        %v4436 = vunpack.c.l.b16 %v3998
        %v4437 = vunpack.c.h.b16 %v3998
        %v4438 = vunpack.c.l.b16 %v3999
        %v4439 = vunpack.c.h.b16 %v3999
        %v4440 = vunpack.c.l.b16 %v4000
        %v4441 = vunpack.c.h.b16 %v4000
        %v4442 = vunpack.c.l.b16 %v4001
        %v4443 = vunpack.c.h.b16 %v4001
        %v4444 = vunpack.c.l.b16 %v4002
        %v4445 = vunpack.c.h.b16 %v4002
        %v4446 = vunpack.c.l.b16 %v4003
        %v4447 = vunpack.c.h.b16 %v4003
        %v4448 = vunpack.c.l.b16 %v4004
        %v4449 = vunpack.c.h.b16 %v4004
        %v4450 = vunpack.c.l.b16 %v4005
        %v4451 = vunpack.c.h.b16 %v4005
        %v4452 = vunpack.c.l.b16 %v4006
        %v4453 = vunpack.c.h.b16 %v4006
        %v4454 = vunpack.c.l.b16 %v4007
        %v4455 = vunpack.c.h.b16 %v4007
        %v4456 = vunpack.c.l.b16 %v4008
        %v4457 = vunpack.c.h.b16 %v4008
        %v4458 = vunpack.c.l.b16 %v4009
        %v4459 = vunpack.c.h.b16 %v4009
        %v4460 = vunpack.c.l.b16 %v4010
        %v4461 = vunpack.c.h.b16 %v4010
        %v4462 = vunpack.c.l.b16 %v4011
        %v4463 = vunpack.c.h.b16 %v4011
        %v4464 = vunpack.c.l.b16 %v4012
        %v4465 = vunpack.c.h.b16 %v4012
        %v4466 = vunpack.c.l.b16 %v4013
        %v4467 = vunpack.c.h.b16 %v4013
        %v4468 = vunpack.c.l.b16 %v4014
        %v4469 = vunpack.c.h.b16 %v4014
        %v4470 = vunpack.c.l.b16 %v4015
        %v4471 = vunpack.c.h.b16 %v4015
        %v4472 = vunpack.c.l.b16 %v4016
        %v4473 = vunpack.c.h.b16 %v4016
        %v4474 = vunpack.c.l.b16 %v4017
        %v4475 = vunpack.c.h.b16 %v4017
        %v4476 = vunpack.c.l.b16 %v4018
        %v4477 = vunpack.c.h.b16 %v4018
        %v4478 = vunpack.c.l.b16 %v4019
        %v4479 = vunpack.c.h.b16 %v4019
        %v4480 = vunpack.c.l.b16 %v4020
        %v4481 = vunpack.c.h.b16 %v4020
        %v4482 = vunpack.c.l.b16 %v4021
        %v4483 = vunpack.c.h.b16 %v4021
        %v4484 = vunpack.c.l.b16 %v4022
        %v4485 = vunpack.c.h.b16 %v4022
        %v4486 = vunpack.c.l.b16 %v4023
        %v4487 = vunpack.c.h.b16 %v4023
        %v4488 = vunpack.c.l.b16 %v4024
        %v4489 = vunpack.c.h.b16 %v4024
        %v4490 = vunpack.c.l.b16 %v4025
        %v4491 = vunpack.c.h.b16 %v4025
        %v4492 = vunpack.c.l.b16 %v4026
        %v4493 = vunpack.c.h.b16 %v4026
        %v4494 = vunpack.c.l.b16 %v4027
        %v4495 = vunpack.c.h.b16 %v4027
        %v4496 = vunpack.c.l.b16 %v4028
        %v4497 = vunpack.c.h.b16 %v4028
        %v4498 = vunpack.c.l.b16 %v4029
        %v4499 = vunpack.c.h.b16 %v4029
        %v4500 = vunpack.c.l.b16 %v4030
        %v4501 = vunpack.c.h.b16 %v4030
        %v4502 = vunpack.c.l.b16 %v4031
        %v4503 = vunpack.c.h.b16 %v4031
        %v4504 = vunpack.c.l.b16 %v4032
        %v4505 = vunpack.c.h.b16 %v4032
        %v4506 = vunpack.c.l.b16 %v4033
        %v4507 = vunpack.c.h.b16 %v4033
        %v4508 = vunpack.c.l.b16 %v4034
        %v4509 = vunpack.c.h.b16 %v4034
        %v4510 = vunpack.c.l.b16 %v4035
        %v4511 = vunpack.c.h.b16 %v4035
        %v4512 = vunpack.c.l.b16 %v4036
        %v4513 = vunpack.c.h.b16 %v4036
        %v4514 = vunpack.c.l.b16 %v4037
        %v4515 = vunpack.c.h.b16 %v4037
        %v4516 = vunpack.c.l.b16 %v4038
        %v4517 = vunpack.c.h.b16 %v4038
        %v4518 = vunpack.c.l.b16 %v4039
        %v4519 = vunpack.c.h.b16 %v4039
        %v4520 = vunpack.c.l.b16 %v4040
        %v4521 = vunpack.c.h.b16 %v4040
        %v4522 = vunpack.c.l.b16 %v4041
        %v4523 = vunpack.c.h.b16 %v4041
        %v4524 = vunpack.c.l.b16 %v4042
        %v4525 = vunpack.c.h.b16 %v4042
        %v4526 = vunpack.c.l.b16 %v4043
        %v4527 = vunpack.c.h.b16 %v4043
        %v4528 = vunpack.c.l.b16 %v4044
        %v4529 = vunpack.c.h.b16 %v4044
        %v4530 = vunpack.c.l.b16 %v4045
        %v4531 = vunpack.c.h.b16 %v4045
        %v4532 = vunpack.c.l.b16 %v4046
        %v4533 = vunpack.c.h.b16 %v4046
        %v4534 = vunpack.c.l.b16 %v4047
        %v4535 = vunpack.c.h.b16 %v4047
        %v4536 = vunpack.c.l.b16 %v4048
        %v4537 = vunpack.c.h.b16 %v4048
        %v4538 = vunpack.c.l.b16 %v4049
        %v4539 = vunpack.c.h.b16 %v4049
        %v4540 = vunpack.c.l.b16 %v4050
        %v4541 = vunpack.c.h.b16 %v4050
        %v4542 = vunpack.c.l.b16 %v4051
        %v4543 = vunpack.c.h.b16 %v4051
        %v4544 = vunpack.c.l.b16 %v4052
        %v4545 = vunpack.c.h.b16 %v4052
        %v4546 = vunpack.c.l.b16 %v4053
        %v4547 = vunpack.c.h.b16 %v4053
        %v4548 = vunpack.c.l.b16 %v4054
        %v4549 = vunpack.c.h.b16 %v4054
        %v4550 = vunpack.c.l.b16 %v4055
        %v4551 = vunpack.c.h.b16 %v4055
        %v4552 = vunpack.c.l.b16 %v4056
        %v4553 = vunpack.c.h.b16 %v4056
        %v4554 = vunpack.c.l.b16 %v4057
        %v4555 = vunpack.c.h.b16 %v4057
        %v4556 = vunpack.c.l.b16 %v4058
        %v4557 = vunpack.c.h.b16 %v4058
        %v4558 = vunpack.c.l.b16 %v4059
        %v4559 = vunpack.c.h.b16 %v4059
        %v4560 = vunpack.c.l.b16 %v4060
        %v4561 = vunpack.c.h.b16 %v4060
        %v4562 = vunpack.c.l.b16 %v4061
        %v4563 = vunpack.c.h.b16 %v4061
        %v4564 = vunpack.c.l.b16 %v4062
        %v4565 = vunpack.c.h.b16 %v4062
        %v4566 = vunpack.c.l.b16 %v4063
        %v4567 = vunpack.c.h.b16 %v4063
        %v4568 = vunpack.c.l.b16 %v4064
        %v4569 = vunpack.c.h.b16 %v4064
        %v4570 = vunpack.c.l.b16 %v4065
        %v4571 = vunpack.c.h.b16 %v4065
        %v4572 = vunpack.c.l.b16 %v4066
        %v4573 = vunpack.c.h.b16 %v4066
        %v4574 = vunpack.c.l.b16 %v4067
        %v4575 = vunpack.c.h.b16 %v4067
        %v4576 = vunpack.c.l.b16 %v4068
        %v4577 = vunpack.c.h.b16 %v4068
        %v4578 = vunpack.c.l.b16 %v4069
        %v4579 = vunpack.c.h.b16 %v4069
        %v4580 = vunpack.c.l.b16 %v4070
        %v4581 = vunpack.c.h.b16 %v4070
        %v4582 = vunpack.c.l.b16 %v4071
        %v4583 = vunpack.c.h.b16 %v4071
        %v4584 = vunpack.c.l.b16 %v4072
        %v4585 = vunpack.c.h.b16 %v4072
        %v4586 = vunpack.c.l.b16 %v4073
        %v4587 = vunpack.c.h.b16 %v4073
        %v4588 = vunpack.c.l.b16 %v4074
        %v4589 = vunpack.c.h.b16 %v4074
        %v4590 = vunpack.c.l.b16 %v4075
        %v4591 = vunpack.c.h.b16 %v4075
        %v4592 = vunpack.c.l.b16 %v4076
        %v4593 = vunpack.c.h.b16 %v4076
        %v4594 = vunpack.c.l.b16 %v4077
        %v4595 = vunpack.c.h.b16 %v4077
        %v4596 = vunpack.c.l.b16 %v4078
        %v4597 = vunpack.c.h.b16 %v4078
        %v4598 = vunpack.c.l.b16 %v4079
        %v4599 = vunpack.c.h.b16 %v4079
        %v4600 = vunpack.c.l.b16 %v4080
        %v4601 = vunpack.c.h.b16 %v4080
        %v4602 = vunpack.c.l.b16 %v4081
        %v4603 = vunpack.c.h.b16 %v4081
        %v4604 = vunpack.c.l.b16 %v4082
        %v4605 = vunpack.c.h.b16 %v4082
        %v4606 = vunpack.c.l.b16 %v4083
        %v4607 = vunpack.c.h.b16 %v4083
        %v4608 = vunpack.c.l.b16 %v4084
        %v4609 = vunpack.c.h.b16 %v4084
        %v4610 = vunpack.c.l.b16 %v4085
        %v4611 = vunpack.c.h.b16 %v4085
        %v4612 = vunpack.c.l.b16 %v4086
        %v4613 = vunpack.c.h.b16 %v4086
        %v4614 = vunpack.c.l.b16 %v4087
        %v4615 = vunpack.c.h.b16 %v4087
        %v4616 = vunpack.c.l.b16 %v4088
        %v4617 = vunpack.c.h.b16 %v4088
        %v4618 = vunpack.c.l.b16 %v4089
        %v4619 = vunpack.c.h.b16 %v4089
        %v4620 = vunpack.c.l.b16 %v4090
        %v4621 = vunpack.c.h.b16 %v4090
        %v4622 = vunpack.c.l.b16 %v4091
        %v4623 = vunpack.c.h.b16 %v4091
        %v4624 = vunpack.c.l.b16 %v4092
        %v4625 = vunpack.c.h.b16 %v4092
        %v4626 = vunpack.c.l.b16 %v4093
        %v4627 = vunpack.c.h.b16 %v4093
        %v4628 = vunpack.c.l.b16 %v4094
        %v4629 = vunpack.c.h.b16 %v4094
        %v4630 = vunpack.c.l.b16 %v4095
        %v4631 = vunpack.c.h.b16 %v4095
        %v4632 = vunpack.c.l.b16 %v4096
        %v4633 = vunpack.c.h.b16 %v4096
        %v4634 = vunpack.c.l.b16 %v4097
        %v4635 = vunpack.c.h.b16 %v4097
        %v4636 = vunpack.c.l.b16 %v4098
        %v4637 = vunpack.c.h.b16 %v4098
        %v4638 = vunpack.c.l.b16 %v4099
        %v4639 = vunpack.c.h.b16 %v4099
        %v4640 = vunpack.c.l.b16 %v4100
        %v4641 = vunpack.c.h.b16 %v4100
        %v4642 = vunpack.c.l.b16 %v4101
        %v4643 = vunpack.c.h.b16 %v4101
        %v4644 = vunpack.c.l.b16 %v4102
        %v4645 = vunpack.c.h.b16 %v4102
        %v4646 = vunpack.c.l.b16 %v4103
        %v4647 = vunpack.c.h.b16 %v4103
        %v4648 = vunpack.c.l.b16 %v4104
        %v4649 = vunpack.c.h.b16 %v4104
        %v4650 = vunpack.c.l.b16 %v4105
        %v4651 = vunpack.c.h.b16 %v4105
        %v4652 = vunpack.c.l.b16 %v4106
        %v4653 = vunpack.c.h.b16 %v4106
        %v4654 = vunpack.c.l.b16 %v4107
        %v4655 = vunpack.c.h.b16 %v4107
        %v4656 = vunpack.c.l.b16 %v4108
        %v4657 = vunpack.c.h.b16 %v4108
        %v4658 = vunpack.c.l.b16 %v4109
        %v4659 = vunpack.c.h.b16 %v4109
        %v4660 = vunpack.c.l.b16 %v4110
        %v4661 = vunpack.c.h.b16 %v4110
        %v4662 = vunpack.c.l.b16 %v4111
        %v4663 = vunpack.c.h.b16 %v4111
        %v4664 = vunpack.c.l.b16 %v4112
        %v4665 = vunpack.c.h.b16 %v4112
        %v4666 = vunpack.c.l.b16 %v4113
        %v4667 = vunpack.c.h.b16 %v4113
        %v4668 = vunpack.c.l.b16 %v4114
        %v4669 = vunpack.c.h.b16 %v4114
        %v4670 = vunpack.c.l.b16 %v4115
        %v4671 = vunpack.c.h.b16 %v4115
        %v4672 = vunpack.c.l.b16 %v4116
        %v4673 = vunpack.c.h.b16 %v4116
        %v4674 = vunpack.c.l.b16 %v4117
        %v4675 = vunpack.c.h.b16 %v4117
        %v4676 = vunpack.c.l.b16 %v4118
        %v4677 = vunpack.c.h.b16 %v4118
        %v4678 = vunpack.c.l.b16 %v4119
        %v4679 = vunpack.c.h.b16 %v4119
        %v4680 = vunpack.c.l.b16 %v4120
        %v4681 = vunpack.c.h.b16 %v4120
        %v4682 = vunpack.c.l.b16 %v4121
        %v4683 = vunpack.c.h.b16 %v4121
        %v4684 = vunpack.c.l.b16 %v4122
        %v4685 = vunpack.c.h.b16 %v4122
        %v4686 = vunpack.c.l.b16 %v4123
        %v4687 = vunpack.c.h.b16 %v4123
        %v4688 = vunpack.c.l.b16 %v4124
        %v4689 = vunpack.c.h.b16 %v4124
        %v4690 = vunpack.c.l.b16 %v4125
        %v4691 = vunpack.c.h.b16 %v4125
        %v4692 = vunpack.c.l.b16 %v4126
        %v4693 = vunpack.c.h.b16 %v4126
        %v4694 = vunpack.c.l.b16 %v4127
        %v4695 = vunpack.c.h.b16 %v4127
        %v4696 = vunpack.c.l.b16 %v4128
        %v4697 = vunpack.c.h.b16 %v4128
        %v4698 = vunpack.c.l.b16 %v4129
        %v4699 = vunpack.c.h.b16 %v4129
        %v4700 = vunpack.c.l.b16 %v4130
        %v4701 = vunpack.c.h.b16 %v4130
        %v4702 = vunpack.c.l.b16 %v4131
        %v4703 = vunpack.c.h.b16 %v4131
        %v4704 = vunpack.c.l.b16 %v4132
        %v4705 = vunpack.c.h.b16 %v4132
        %v4706 = vunpack.c.l.b16 %v4133
        %v4707 = vunpack.c.h.b16 %v4133
        %v4708 = vunpack.c.l.b16 %v4134
        %v4709 = vunpack.c.h.b16 %v4134
        %v4710 = vunpack.c.l.b16 %v4135
        %v4711 = vunpack.c.h.b16 %v4135
        %v4712 = vunpack.c.l.b16 %v4136
        %v4713 = vunpack.c.h.b16 %v4136
        %v4714 = vunpack.c.l.b16 %v4137
        %v4715 = vunpack.c.h.b16 %v4137
        %v4716 = vunpack.c.l.b16 %v4138
        %v4717 = vunpack.c.h.b16 %v4138
        %v4718 = vunpack.c.l.b16 %v4139
        %v4719 = vunpack.c.h.b16 %v4139
        %v4720 = vunpack.c.l.b16 %v4140
        %v4721 = vunpack.c.h.b16 %v4140
        %v4722 = vunpack.c.l.b16 %v4141
        %v4723 = vunpack.c.h.b16 %v4141
        %v4724 = vunpack.c.l.b16 %v4142
        %v4725 = vunpack.c.h.b16 %v4142
        %v4726 = vunpack.c.l.b16 %v4143
        %v4727 = vunpack.c.h.b16 %v4143
        %v4728 = vunpack.c.l.b16 %v4144
        %v4729 = vunpack.c.h.b16 %v4144
        %v4730 = vunpack.c.l.b16 %v4145
        %v4731 = vunpack.c.h.b16 %v4145
        %v4732 = vunpack.c.l.b16 %v4146
        %v4733 = vunpack.c.h.b16 %v4146
        %v4734 = vunpack.c.l.b16 %v4147
        %v4735 = vunpack.c.h.b16 %v4147
        %v4736 = vunpack.c.l.b16 %v4148
        %v4737 = vunpack.c.h.b16 %v4148
        %v4738 = vunpack.c.l.b16 %v4149
        %v4739 = vunpack.c.h.b16 %v4149
        %v4740 = vunpack.c.l.b16 %v4150
        %v4741 = vunpack.c.h.b16 %v4150
        %v4742 = vunpack.c.l.b16 %v4151
        %v4743 = vunpack.c.h.b16 %v4151
        %v4744 = vunpack.c.l.b16 %v4152
        %v4745 = vunpack.c.h.b16 %v4152
        %v4746 = vunpack.c.l.b16 %v4153
        %v4747 = vunpack.c.h.b16 %v4153
        %v4748 = vunpack.c.l.b16 %v4154
        %v4749 = vunpack.c.h.b16 %v4154
        %v4750 = vunpack.c.l.b16 %v4155
        %v4751 = vunpack.c.h.b16 %v4155
        %v4752 = vunpack.c.l.b16 %v4156
        %v4753 = vunpack.c.h.b16 %v4156
        %v4754 = vunpack.c.l.b16 %v4157
        %v4755 = vunpack.c.h.b16 %v4157
        %v4756 = vunpack.c.l.b16 %v4158
        %v4757 = vunpack.c.h.b16 %v4158
        %v4758 = vunpack.c.l.b16 %v4159
        %v4759 = vunpack.c.h.b16 %v4159
        %v4760 = vunpack.c.l.b16 %v4160
        %v4761 = vunpack.c.h.b16 %v4160
        %v4762 = vunpack.c.l.b16 %v4161
        %v4763 = vunpack.c.h.b16 %v4161
        %v4764 = vunpack.c.l.b16 %v4162
        %v4765 = vunpack.c.h.b16 %v4162
        %v4766 = vunpack.c.l.b16 %v4163
        %v4767 = vunpack.c.h.b16 %v4163
        %v4768 = vunpack.c.l.b16 %v4164
        %v4769 = vunpack.c.h.b16 %v4164
        %v4770 = vunpack.c.l.b16 %v4165
        %v4771 = vunpack.c.h.b16 %v4165
        %v4772 = vunpack.c.l.b16 %v4166
        %v4773 = vunpack.c.h.b16 %v4166
        %v4774 = vunpack.c.l.b16 %v4167
        %v4775 = vunpack.c.h.b16 %v4167
        %v4776 = vunpack.c.l.b16 %v4168
        %v4777 = vunpack.c.h.b16 %v4168
        %v4778 = vunpack.c.l.b16 %v4169
        %v4779 = vunpack.c.h.b16 %v4169
        %v4780 = vunpack.c.l.b16 %v4170
        %v4781 = vunpack.c.h.b16 %v4170
        %v4782 = vunpack.c.l.b16 %v4171
        %v4783 = vunpack.c.h.b16 %v4171
        %v4784 = vpack.c.b16 %v4406, %v4400
        %v4785 = vpack.c.b16 %v4407, %v4401
        %v4786 = vpack.c.b16 %v4408, %v4402
        %v4787 = vpack.c.b16 %v4409, %v4403
        %v4788 = vpack.c.b16 %v4410, %v4404
        %v4789 = vpack.c.b16 %v4411, %v4405
        %v4790 = vpack.c.b16 %v4418, %v4412
        %v4791 = vpack.c.b16 %v4419, %v4413
        %v4792 = vpack.c.b16 %v4420, %v4414
        %v4793 = vpack.c.b16 %v4421, %v4415
        %v4794 = vpack.c.b16 %v4422, %v4416
        %v4795 = vpack.c.b16 %v4423, %v4417
        %v4796 = vpack.c.b16 %v4430, %v4424
        %v4797 = vpack.c.b16 %v4431, %v4425
        %v4798 = vpack.c.b16 %v4432, %v4426
        %v4799 = vpack.c.b16 %v4433, %v4427
        %v4800 = vpack.c.b16 %v4434, %v4428
        %v4801 = vpack.c.b16 %v4435, %v4429
        %v4802 = vpack.c.b16 %v4442, %v4436
        %v4803 = vpack.c.b16 %v4443, %v4437
        %v4804 = vpack.c.b16 %v4444, %v4438
        %v4805 = vpack.c.b16 %v4445, %v4439
        %v4806 = vpack.c.b16 %v4446, %v4440
        %v4807 = vpack.c.b16 %v4447, %v4441
        %v4808 = vpack.c.b16 %v4454, %v4448
        %v4809 = vpack.c.b16 %v4455, %v4449
        %v4810 = vpack.c.b16 %v4456, %v4450
        %v4811 = vpack.c.b16 %v4457, %v4451
        %v4812 = vpack.c.b16 %v4458, %v4452
        %v4813 = vpack.c.b16 %v4459, %v4453
        %v4814 = vpack.c.b16 %v4466, %v4460
        %v4815 = vpack.c.b16 %v4467, %v4461
        %v4816 = vpack.c.b16 %v4468, %v4462
        %v4817 = vpack.c.b16 %v4469, %v4463
        %v4818 = vpack.c.b16 %v4470, %v4464
        %v4819 = vpack.c.b16 %v4471, %v4465
        %v4820 = vpack.c.b16 %v4478, %v4472
        %v4821 = vpack.c.b16 %v4479, %v4473
        %v4822 = vpack.c.b16 %v4480, %v4474
        %v4823 = vpack.c.b16 %v4481, %v4475
        %v4824 = vpack.c.b16 %v4482, %v4476
        %v4825 = vpack.c.b16 %v4483, %v4477
        %v4826 = vpack.c.b16 %v4490, %v4484
        %v4827 = vpack.c.b16 %v4491, %v4485
        %v4828 = vpack.c.b16 %v4492, %v4486
        %v4829 = vpack.c.b16 %v4493, %v4487
        %v4830 = vpack.c.b16 %v4494, %v4488
        %v4831 = vpack.c.b16 %v4495, %v4489
        %v4832 = vpack.c.b16 %v4502, %v4496
        %v4833 = vpack.c.b16 %v4503, %v4497
        %v4834 = vpack.c.b16 %v4504, %v4498
        %v4835 = vpack.c.b16 %v4505, %v4499
        %v4836 = vpack.c.b16 %v4506, %v4500
        %v4837 = vpack.c.b16 %v4507, %v4501
        %v4838 = vpack.c.b16 %v4514, %v4508
        %v4839 = vpack.c.b16 %v4515, %v4509
        %v4840 = vpack.c.b16 %v4516, %v4510
        %v4841 = vpack.c.b16 %v4517, %v4511
        %v4842 = vpack.c.b16 %v4518, %v4512
        %v4843 = vpack.c.b16 %v4519, %v4513
        %v4844 = vpack.c.b16 %v4526, %v4520
        %v4845 = vpack.c.b16 %v4527, %v4521
        %v4846 = vpack.c.b16 %v4528, %v4522
        %v4847 = vpack.c.b16 %v4529, %v4523
        %v4848 = vpack.c.b16 %v4530, %v4524
        %v4849 = vpack.c.b16 %v4531, %v4525
        %v4850 = vpack.c.b16 %v4538, %v4532
        %v4851 = vpack.c.b16 %v4539, %v4533
        %v4852 = vpack.c.b16 %v4540, %v4534
        %v4853 = vpack.c.b16 %v4541, %v4535
        %v4854 = vpack.c.b16 %v4542, %v4536
        %v4855 = vpack.c.b16 %v4543, %v4537
        %v4856 = vpack.c.b16 %v4550, %v4544
        %v4857 = vpack.c.b16 %v4551, %v4545
        %v4858 = vpack.c.b16 %v4552, %v4546
        %v4859 = vpack.c.b16 %v4553, %v4547
        %v4860 = vpack.c.b16 %v4554, %v4548
        %v4861 = vpack.c.b16 %v4555, %v4549
        %v4862 = vpack.c.b16 %v4562, %v4556
        %v4863 = vpack.c.b16 %v4563, %v4557
        %v4864 = vpack.c.b16 %v4564, %v4558
        %v4865 = vpack.c.b16 %v4565, %v4559
        %v4866 = vpack.c.b16 %v4566, %v4560
        %v4867 = vpack.c.b16 %v4567, %v4561
        %v4868 = vpack.c.b16 %v4574, %v4568
        %v4869 = vpack.c.b16 %v4575, %v4569
        %v4870 = vpack.c.b16 %v4576, %v4570
        %v4871 = vpack.c.b16 %v4577, %v4571
        %v4872 = vpack.c.b16 %v4578, %v4572
        %v4873 = vpack.c.b16 %v4579, %v4573
        %v4874 = vpack.c.b16 %v4586, %v4580
        %v4875 = vpack.c.b16 %v4587, %v4581
        %v4876 = vpack.c.b16 %v4588, %v4582
        %v4877 = vpack.c.b16 %v4589, %v4583
        %v4878 = vpack.c.b16 %v4590, %v4584
        %v4879 = vpack.c.b16 %v4591, %v4585
        %v4880 = vpack.c.b16 %v4598, %v4592
        %v4881 = vpack.c.b16 %v4599, %v4593
        %v4882 = vpack.c.b16 %v4600, %v4594
        %v4883 = vpack.c.b16 %v4601, %v4595
        %v4884 = vpack.c.b16 %v4602, %v4596
        %v4885 = vpack.c.b16 %v4603, %v4597
        %v4886 = vpack.c.b16 %v4610, %v4604
        %v4887 = vpack.c.b16 %v4611, %v4605
        %v4888 = vpack.c.b16 %v4612, %v4606
        %v4889 = vpack.c.b16 %v4613, %v4607
        %v4890 = vpack.c.b16 %v4614, %v4608
        %v4891 = vpack.c.b16 %v4615, %v4609
        %v4892 = vpack.c.b16 %v4622, %v4616
        %v4893 = vpack.c.b16 %v4623, %v4617
        %v4894 = vpack.c.b16 %v4624, %v4618
        %v4895 = vpack.c.b16 %v4625, %v4619
        %v4896 = vpack.c.b16 %v4626, %v4620
        %v4897 = vpack.c.b16 %v4627, %v4621
        %v4898 = vpack.c.b16 %v4634, %v4628
        %v4899 = vpack.c.b16 %v4635, %v4629
        %v4900 = vpack.c.b16 %v4636, %v4630
        %v4901 = vpack.c.b16 %v4637, %v4631
        %v4902 = vpack.c.b16 %v4638, %v4632
        %v4903 = vpack.c.b16 %v4639, %v4633
        %v4904 = vpack.c.b16 %v4646, %v4640
        %v4905 = vpack.c.b16 %v4647, %v4641
        %v4906 = vpack.c.b16 %v4648, %v4642
        %v4907 = vpack.c.b16 %v4649, %v4643
        %v4908 = vpack.c.b16 %v4650, %v4644
        %v4909 = vpack.c.b16 %v4651, %v4645
        %v4910 = vpack.c.b16 %v4658, %v4652
        %v4911 = vpack.c.b16 %v4659, %v4653
        %v4912 = vpack.c.b16 %v4660, %v4654
        %v4913 = vpack.c.b16 %v4661, %v4655
        %v4914 = vpack.c.b16 %v4662, %v4656
        %v4915 = vpack.c.b16 %v4663, %v4657
        %v4916 = vpack.c.b16 %v4670, %v4664
        %v4917 = vpack.c.b16 %v4671, %v4665
        %v4918 = vpack.c.b16 %v4672, %v4666
        %v4919 = vpack.c.b16 %v4673, %v4667
        %v4920 = vpack.c.b16 %v4674, %v4668
        %v4921 = vpack.c.b16 %v4675, %v4669
        %v4922 = vpack.c.b16 %v4682, %v4676
        %v4923 = vpack.c.b16 %v4683, %v4677
        %v4924 = vpack.c.b16 %v4684, %v4678
        %v4925 = vpack.c.b16 %v4685, %v4679
        %v4926 = vpack.c.b16 %v4686, %v4680
        %v4927 = vpack.c.b16 %v4687, %v4681
        %v4928 = vpack.c.b16 %v4694, %v4688
        %v4929 = vpack.c.b16 %v4695, %v4689
        %v4930 = vpack.c.b16 %v4696, %v4690
        %v4931 = vpack.c.b16 %v4697, %v4691
        %v4932 = vpack.c.b16 %v4698, %v4692
        %v4933 = vpack.c.b16 %v4699, %v4693
        %v4934 = vpack.c.b16 %v4706, %v4700
        %v4935 = vpack.c.b16 %v4707, %v4701
        %v4936 = vpack.c.b16 %v4708, %v4702
        %v4937 = vpack.c.b16 %v4709, %v4703
        %v4938 = vpack.c.b16 %v4710, %v4704
        %v4939 = vpack.c.b16 %v4711, %v4705
        %v4940 = vpack.c.b16 %v4718, %v4712
        %v4941 = vpack.c.b16 %v4719, %v4713
        %v4942 = vpack.c.b16 %v4720, %v4714
        %v4943 = vpack.c.b16 %v4721, %v4715
        %v4944 = vpack.c.b16 %v4722, %v4716
        %v4945 = vpack.c.b16 %v4723, %v4717
        %v4946 = vpack.c.b16 %v4730, %v4724
        %v4947 = vpack.c.b16 %v4731, %v4725
        %v4948 = vpack.c.b16 %v4732, %v4726
        %v4949 = vpack.c.b16 %v4733, %v4727
        %v4950 = vpack.c.b16 %v4734, %v4728
        %v4951 = vpack.c.b16 %v4735, %v4729
        %v4952 = vpack.c.b16 %v4742, %v4736
        %v4953 = vpack.c.b16 %v4743, %v4737
        %v4954 = vpack.c.b16 %v4744, %v4738
        %v4955 = vpack.c.b16 %v4745, %v4739
        %v4956 = vpack.c.b16 %v4746, %v4740
        %v4957 = vpack.c.b16 %v4747, %v4741
        %v4958 = vpack.c.b16 %v4754, %v4748
        %v4959 = vpack.c.b16 %v4755, %v4749
        %v4960 = vpack.c.b16 %v4756, %v4750
        %v4961 = vpack.c.b16 %v4757, %v4751
        %v4962 = vpack.c.b16 %v4758, %v4752
        %v4963 = vpack.c.b16 %v4759, %v4753
        %v4964 = vpack.c.b16 %v4766, %v4760
        %v4965 = vpack.c.b16 %v4767, %v4761
        %v4966 = vpack.c.b16 %v4768, %v4762
        %v4967 = vpack.c.b16 %v4769, %v4763
        %v4968 = vpack.c.b16 %v4770, %v4764
        %v4969 = vpack.c.b16 %v4771, %v4765
        %v4970 = vpack.c.b16 %v4778, %v4772
        %v4971 = vpack.c.b16 %v4779, %v4773
        %v4972 = vpack.c.b16 %v4780, %v4774
        %v4973 = vpack.c.b16 %v4781, %v4775
        %v4974 = vpack.c.b16 %v4782, %v4776
        %v4975 = vpack.c.b16 %v4783, %v4777
        %5168 = vmatprep.subr.bf16.mxu0 %v4785
        %5169 = vmatpush1.bf16.msra.mxu0 %v4784
        %5170 = vmatprep.subr.bf16.mxu0 %v4791
        %5171 = vmatpush1.bf16.msra.mxu0 %v4790
        %5172 = vmatprep.subr.bf16.mxu0 %v4797
        %5173 = vmatpush1.bf16.msra.mxu0 %v4796
        %5174 = vmatprep.subr.bf16.mxu0 %v4803
        %5175 = vmatpush1.bf16.msra.mxu0 %v4802
        %5176 = vmatprep.subr.bf16.mxu0 %v4809
        %5177 = vmatpush1.bf16.msra.mxu0 %v4808
        %5178 = vmatprep.subr.bf16.mxu0 %v4815
        %5179 = vmatpush1.bf16.msra.mxu0 %v4814
        %5180 = vmatprep.subr.bf16.mxu0 %v4821
        %5181 = vmatpush1.bf16.msra.mxu0 %v4820
        %5182 = vmatprep.subr.bf16.mxu0 %v4827
        %5183 = vmatpush1.bf16.msra.mxu0 %v4826
        %5184 = vmatprep.subr.bf16.mxu0 %v4833
        %5185 = vmatpush1.bf16.msra.mxu0 %v4832
        %5186 = vmatprep.subr.bf16.mxu0 %v4839
        %5187 = vmatpush1.bf16.msra.mxu0 %v4838
        %5188 = vmatprep.subr.bf16.mxu0 %v4845
        %5189 = vmatpush1.bf16.msra.mxu0 %v4844
        %5190 = vmatprep.subr.bf16.mxu0 %v4851
        %5191 = vmatpush1.bf16.msra.mxu0 %v4850
        %5192 = vmatprep.subr.bf16.mxu0 %v4857
        %5193 = vmatpush1.bf16.msra.mxu0 %v4856
        %5194 = vmatprep.subr.bf16.mxu0 %v4863
        %5195 = vmatpush1.bf16.msra.mxu0 %v4862
        %5196 = vmatprep.subr.bf16.mxu0 %v4869
        %5197 = vmatpush1.bf16.msra.mxu0 %v4868
        %5198 = vmatprep.subr.bf16.mxu0 %v4875
        %5199 = vmatpush1.bf16.msra.mxu0 %v4874
        %5200 = vmatprep.mubr.bf16.mxu0 %v4173
        %5201 = vmatmul.mubr.bf16.gmra.mrb[0].mxu0 %v4172
        %v5202 = vpop.f32.mrb[0].mxu0
        %v5203 = vadd.f32 %v4181, %v5202
        %v5204 = vpop.f32.mrb[0].mxu0
        %v5205 = vadd.f32 %v4185, %v5204
        %v5206 = vpop.f32.mrb[0].mxu0
        %v5207 = vpop.f32.mrb[0].mxu0
        %5208 = vdwg.mxu0
        %5209 = vmatprep.subr.bf16.mxu0 %v4881
        %5210 = vmatpush1.bf16.msra.mxu0 %v4880
        %5211 = vmatprep.subr.bf16.mxu0 %v4887
        %5212 = vmatpush1.bf16.msra.mxu0 %v4886
        %5213 = vmatprep.subr.bf16.mxu0 %v4893
        %5214 = vmatpush1.bf16.msra.mxu0 %v4892
        %5215 = vmatprep.subr.bf16.mxu0 %v4899
        %5216 = vmatpush1.bf16.msra.mxu0 %v4898
        %5217 = vmatprep.subr.bf16.mxu0 %v4905
        %5218 = vmatpush1.bf16.msra.mxu0 %v4904
        %5219 = vmatprep.subr.bf16.mxu0 %v4911
        %5220 = vmatpush1.bf16.msra.mxu0 %v4910
        %5221 = vmatprep.subr.bf16.mxu0 %v4917
        %5222 = vmatpush1.bf16.msra.mxu0 %v4916
        %5223 = vmatprep.subr.bf16.mxu0 %v4923
        %5224 = vmatpush1.bf16.msra.mxu0 %v4922
        %5225 = vmatprep.subr.bf16.mxu0 %v4929
        %5226 = vmatpush1.bf16.msra.mxu0 %v4928
        %5227 = vmatprep.subr.bf16.mxu0 %v4935
        %5228 = vmatpush1.bf16.msra.mxu0 %v4934
        %5229 = vmatprep.subr.bf16.mxu0 %v4941
        %5230 = vmatpush1.bf16.msra.mxu0 %v4940
        %5231 = vmatprep.subr.bf16.mxu0 %v4947
        %5232 = vmatpush1.bf16.msra.mxu0 %v4946
        %5233 = vmatprep.subr.bf16.mxu0 %v4953
        %5234 = vmatpush1.bf16.msra.mxu0 %v4952
        %5235 = vmatprep.subr.bf16.mxu0 %v4959
        %5236 = vmatpush1.bf16.msra.mxu0 %v4958
        %5237 = vmatprep.subr.bf16.mxu0 %v4965
        %5238 = vmatpush1.bf16.msra.mxu0 %v4964
        %5239 = vmatprep.subr.bf16.mxu0 %v4971
        %5240 = vmatpush1.bf16.msra.mxu0 %v4970
        %5241 = vmatprep.mubr.bf16.mxu0 %v4175
        %5242 = vmatmul.mubr.bf16.gmra.mrb[0].mxu0 %v4174
        %v5243 = vpop.f32.mrb[0].mxu0
        %v5244 = vadd.f32 %v5203, %v5243
        %v5245 = vpop.f32.mrb[0].mxu0
        %v5246 = vadd.f32 %v5205, %v5245
        %v5247 = vpop.f32.mrb[0].mxu0
        %v5248 = vpop.f32.mrb[0].mxu0
        %5249 = vdwg.mxu0
        %5250 = vmatprep.subr.bf16.mxu0 %v4787
        %5251 = vmatpush1.bf16.msra.mxu0 %v4786
        %5252 = vmatprep.subr.bf16.mxu0 %v4793
        %5253 = vmatpush1.bf16.msra.mxu0 %v4792
        %5254 = vmatprep.subr.bf16.mxu0 %v4799
        %5255 = vmatpush1.bf16.msra.mxu0 %v4798
        %5256 = vmatprep.subr.bf16.mxu0 %v4805
        %5257 = vmatpush1.bf16.msra.mxu0 %v4804
        %5258 = vmatprep.subr.bf16.mxu0 %v4811
        %5259 = vmatpush1.bf16.msra.mxu0 %v4810
        %5260 = vmatprep.subr.bf16.mxu0 %v4817
        %5261 = vmatpush1.bf16.msra.mxu0 %v4816
        %5262 = vmatprep.subr.bf16.mxu0 %v4823
        %5263 = vmatpush1.bf16.msra.mxu0 %v4822
        %5264 = vmatprep.subr.bf16.mxu0 %v4829
        %5265 = vmatpush1.bf16.msra.mxu0 %v4828
        %5266 = vmatprep.subr.bf16.mxu0 %v4835
        %5267 = vmatpush1.bf16.msra.mxu0 %v4834
        %5268 = vmatprep.subr.bf16.mxu0 %v4841
        %5269 = vmatpush1.bf16.msra.mxu0 %v4840
        %5270 = vmatprep.subr.bf16.mxu0 %v4847
        %5271 = vmatpush1.bf16.msra.mxu0 %v4846
        %5272 = vmatprep.subr.bf16.mxu0 %v4853
        %5273 = vmatpush1.bf16.msra.mxu0 %v4852
        %5274 = vmatprep.subr.bf16.mxu0 %v4859
        %5275 = vmatpush1.bf16.msra.mxu0 %v4858
        %5276 = vmatprep.subr.bf16.mxu0 %v4865
        %5277 = vmatpush1.bf16.msra.mxu0 %v4864
        %5278 = vmatprep.subr.bf16.mxu0 %v4871
        %5279 = vmatpush1.bf16.msra.mxu0 %v4870
        %5280 = vmatprep.subr.bf16.mxu0 %v4877
        %5281 = vmatpush1.bf16.msra.mxu0 %v4876
        %5282 = vmatprep.mubr.bf16.mxu0 %v4173
        %5283 = vmatmul.mubr.bf16.gmra.mrb[0].mxu0 %v4172
        %v5284 = vpop.f32.mrb[0].mxu0
        %v5285 = vadd.f32 %v4189, %v5284
        %v5286 = vpop.f32.mrb[0].mxu0
        %v5287 = vadd.f32 %v4193, %v5286
        %v5288 = vpop.f32.mrb[0].mxu0
        %v5289 = vpop.f32.mrb[0].mxu0
        %5290 = vdwg.mxu0
        %5291 = vmatprep.subr.bf16.mxu0 %v4883
        %5292 = vmatpush1.bf16.msra.mxu0 %v4882
        %5293 = vmatprep.subr.bf16.mxu0 %v4889
        %5294 = vmatpush1.bf16.msra.mxu0 %v4888
        %5295 = vmatprep.subr.bf16.mxu0 %v4895
        %5296 = vmatpush1.bf16.msra.mxu0 %v4894
        %5297 = vmatprep.subr.bf16.mxu0 %v4901
        %5298 = vmatpush1.bf16.msra.mxu0 %v4900
        %5299 = vmatprep.subr.bf16.mxu0 %v4907
        %5300 = vmatpush1.bf16.msra.mxu0 %v4906
        %5301 = vmatprep.subr.bf16.mxu0 %v4913
        %5302 = vmatpush1.bf16.msra.mxu0 %v4912
        %5303 = vmatprep.subr.bf16.mxu0 %v4919
        %5304 = vmatpush1.bf16.msra.mxu0 %v4918
        %5305 = vmatprep.subr.bf16.mxu0 %v4925
        %5306 = vmatpush1.bf16.msra.mxu0 %v4924
        %5307 = vmatprep.subr.bf16.mxu0 %v4931
        %5308 = vmatpush1.bf16.msra.mxu0 %v4930
        %5309 = vmatprep.subr.bf16.mxu0 %v4937
        %5310 = vmatpush1.bf16.msra.mxu0 %v4936
        %5311 = vmatprep.subr.bf16.mxu0 %v4943
        %5312 = vmatpush1.bf16.msra.mxu0 %v4942
        %5313 = vmatprep.subr.bf16.mxu0 %v4949
        %5314 = vmatpush1.bf16.msra.mxu0 %v4948
        %5315 = vmatprep.subr.bf16.mxu0 %v4955
        %5316 = vmatpush1.bf16.msra.mxu0 %v4954
        %5317 = vmatprep.subr.bf16.mxu0 %v4961
        %5318 = vmatpush1.bf16.msra.mxu0 %v4960
        %5319 = vmatprep.subr.bf16.mxu0 %v4967
        %5320 = vmatpush1.bf16.msra.mxu0 %v4966
        %5321 = vmatprep.subr.bf16.mxu0 %v4973
        %5322 = vmatpush1.bf16.msra.mxu0 %v4972
        %5323 = vmatprep.mubr.bf16.mxu0 %v4175
        %5324 = vmatmul.mubr.bf16.gmra.mrb[0].mxu0 %v4174
        %v5325 = vpop.f32.mrb[0].mxu0
        %v5326 = vadd.f32 %v5285, %v5325
        %v5327 = vpop.f32.mrb[0].mxu0
        %v5328 = vadd.f32 %v5287, %v5327
        %v5329 = vpop.f32.mrb[0].mxu0
        %v5330 = vpop.f32.mrb[0].mxu0
        %5331 = vdwg.mxu0
        %5332 = vmatprep.subr.bf16.mxu0 %v4789
        %5333 = vmatpush1.bf16.msra.mxu0 %v4788
        %5334 = vmatprep.subr.bf16.mxu0 %v4795
        %5335 = vmatpush1.bf16.msra.mxu0 %v4794
        %5336 = vmatprep.subr.bf16.mxu0 %v4801
        %5337 = vmatpush1.bf16.msra.mxu0 %v4800
        %5338 = vmatprep.subr.bf16.mxu0 %v4807
        %5339 = vmatpush1.bf16.msra.mxu0 %v4806
        %5340 = vmatprep.subr.bf16.mxu0 %v4813
        %5341 = vmatpush1.bf16.msra.mxu0 %v4812
        %5342 = vmatprep.subr.bf16.mxu0 %v4819
        %5343 = vmatpush1.bf16.msra.mxu0 %v4818
        %5344 = vmatprep.subr.bf16.mxu0 %v4825
        %5345 = vmatpush1.bf16.msra.mxu0 %v4824
        %5346 = vmatprep.subr.bf16.mxu0 %v4831
        %5347 = vmatpush1.bf16.msra.mxu0 %v4830
        %5348 = vmatprep.subr.bf16.mxu0 %v4837
        %5349 = vmatpush1.bf16.msra.mxu0 %v4836
        %5350 = vmatprep.subr.bf16.mxu0 %v4843
        %5351 = vmatpush1.bf16.msra.mxu0 %v4842
        %5352 = vmatprep.subr.bf16.mxu0 %v4849
        %5353 = vmatpush1.bf16.msra.mxu0 %v4848
        %5354 = vmatprep.subr.bf16.mxu0 %v4855
        %5355 = vmatpush1.bf16.msra.mxu0 %v4854
        %5356 = vmatprep.subr.bf16.mxu0 %v4861
        %5357 = vmatpush1.bf16.msra.mxu0 %v4860
        %5358 = vmatprep.subr.bf16.mxu0 %v4867
        %5359 = vmatpush1.bf16.msra.mxu0 %v4866
        %5360 = vmatprep.subr.bf16.mxu0 %v4873
        %5361 = vmatpush1.bf16.msra.mxu0 %v4872
        %5362 = vmatprep.subr.bf16.mxu0 %v4879
        %5363 = vmatpush1.bf16.msra.mxu0 %v4878
        %5364 = vmatprep.mubr.bf16.mxu0 %v4173
        %5365 = vmatmul.mubr.bf16.gmra.mrb[0].mxu0 %v4172
        %v5366 = vpop.f32.mrb[0].mxu0
        %v5367 = vadd.f32 %v4197, %v5366
        %v5368 = vpop.f32.mrb[0].mxu0
        %v5369 = vadd.f32 %v4201, %v5368
        %v5370 = vpop.f32.mrb[0].mxu0
        %v5371 = vpop.f32.mrb[0].mxu0
        %5372 = vdwg.mxu0
        %5373 = vmatprep.subr.bf16.mxu0 %v4885
        %5374 = vmatpush1.bf16.msra.mxu0 %v4884
        %5375 = vmatprep.subr.bf16.mxu0 %v4891
        %5376 = vmatpush1.bf16.msra.mxu0 %v4890
        %5377 = vmatprep.subr.bf16.mxu0 %v4897
        %5378 = vmatpush1.bf16.msra.mxu0 %v4896
        %5379 = vmatprep.subr.bf16.mxu0 %v4903
        %5380 = vmatpush1.bf16.msra.mxu0 %v4902
        %5381 = vmatprep.subr.bf16.mxu0 %v4909
        %5382 = vmatpush1.bf16.msra.mxu0 %v4908
        %5383 = vmatprep.subr.bf16.mxu0 %v4915
        %5384 = vmatpush1.bf16.msra.mxu0 %v4914
        %5385 = vmatprep.subr.bf16.mxu0 %v4921
        %5386 = vmatpush1.bf16.msra.mxu0 %v4920
        %5387 = vmatprep.subr.bf16.mxu0 %v4927
        %5388 = vmatpush1.bf16.msra.mxu0 %v4926
        %5389 = vmatprep.subr.bf16.mxu0 %v4933
        %5390 = vmatpush1.bf16.msra.mxu0 %v4932
        %5391 = vmatprep.subr.bf16.mxu0 %v4939
        %5392 = vmatpush1.bf16.msra.mxu0 %v4938
        %5393 = vmatprep.subr.bf16.mxu0 %v4945
        %5394 = vmatpush1.bf16.msra.mxu0 %v4944
        %5395 = vmatprep.subr.bf16.mxu0 %v4951
        %5396 = vmatpush1.bf16.msra.mxu0 %v4950
        %5397 = vmatprep.subr.bf16.mxu0 %v4957
        %5398 = vmatpush1.bf16.msra.mxu0 %v4956
        %5399 = vmatprep.subr.bf16.mxu0 %v4963
        %5400 = vmatpush1.bf16.msra.mxu0 %v4962
        %5401 = vmatprep.subr.bf16.mxu0 %v4969
        %5402 = vmatpush1.bf16.msra.mxu0 %v4968
        %5403 = vmatprep.subr.bf16.mxu0 %v4975
        %5404 = vmatpush1.bf16.msra.mxu0 %v4974
        %5405 = vmatprep.mubr.bf16.mxu0 %v4175
        %5406 = vmatmul.mubr.bf16.gmra.mrb[0].mxu0 %v4174
        %v5407 = vpop.f32.mrb[0].mxu0
        %v5408 = vadd.f32 %v5367, %v5407
        %v5409 = vpop.f32.mrb[0].mxu0
        %v5410 = vadd.f32 %v5369, %v5409
        %v5411 = vpop.f32.mrb[0].mxu0
        %v5412 = vpop.f32.mrb[0].mxu0
        %5413 = vdwg.mxu0
        %v5414 = vmul.f32 %v5244, 0.5
        %v5415 = vmul.f32 %v5246, 0.5
        %v5416 = vmul.f32 %v5326, 0.5
        %v5417 = vmul.f32 %v5328, 0.5
        %v5418 = vmul.f32 %v5408, 0.5
        %v5419 = vmul.f32 %v5410, 0.5
        %v5420 = vtanh.pop %v5414
        %v5421 = vtanh.pop %v5415
        %v5422 = vtanh.pop %v5416
        %v5423 = vtanh.pop %v5417
        %v5424 = vtanh.pop %v5418
        %v5425 = vtanh.pop %v5419
        %v5426 = vmul.f32 %v5420, 0.5
        %v5427 = vmul.f32 %v5421, 0.5
        %v5428 = vmul.f32 %v5422, 0.5
        %v5429 = vmul.f32 %v5423, 0.5
        %v5430 = vmul.f32 %v5424, 0.5
        %v5431 = vmul.f32 %v5425, 0.5
        %v5432 = vadd.f32 %v5426, 0.5
        %v5433 = vadd.f32 %v5427, 0.5
        %v5434 = vadd.f32 %v5428, 0.5
        %v5435 = vadd.f32 %v5429, 0.5
        %v5436 = vadd.f32 %v5430, 0.5
        %v5437 = vadd.f32 %v5431, 0.5
        %5438 = vst [vmem:[%s387] sm:$0xff] %v5432
        %5439 = vst [vmem:[%s387 + $0x8] sm:$0xff] %v5433
        %5440 = vst [vmem:[%s387 + $0x10] sm:$0xff] %v5434
        %5441 = vst [vmem:[%s387 + $0x18] sm:$0xff] %v5435
        %5442 = vst [vmem:[%s387 + $0x20] sm:$0xff] %v5436
        %5443 = vst [vmem:[%s387 + $0x28] sm:$0xff] %v5437
        %5444 = vst [vmem:[%s392] sm:$0xff] %v3043
        %5445 = vst [vmem:[%s392 + $0x8] sm:$0xff] %v2928
        %5446 = vst [vmem:[%s392 + $0x10] sm:$0xff] %v2927
        %p5447 = scmp.lt.s32.totalorder %s23, 7
        %s5448 = scalar_select %p5447, %s23, 7
        %s5449 = smul.addr %s5448, 6
        %s5450 = smul.addr %s5449, 8
        %s5451 = scalar_lea.vmem %s7, %s5450
        %p5452 = scmp.lt.s32.totalorder %s23, 7
        %s5453 = scalar_select %p5452, %s23, 7
        %s5454 = smul.addr %s5453, 3
        %s5455 = smul.addr %s5454, 8
        %s5456 = scalar_lea.vmem %s8, %s5455
        // Predicated region
        $region69: #{aemtrnn_rollout.1} parent=47 // pred_check
          %p5457 = pneg %p198
        $region70: #{aemtrnn_rollout.1} parent=47 // pred_check_branch
          %5459 = sbr.rel (%p5457) target = $region72
        $region71: #{aemtrnn_rollout.1} parent=47 // pred_region
          _
        $region72: #{aemtrnn_rollout.1} parent=47 // pred_fallthru
          _
        // Predicated region
        $region73: #{aemtrnn_rollout.1} parent=47 // pred_check
          %p5460 = pneg %p224
        $region74: #{aemtrnn_rollout.1} parent=47 // pred_check_branch
          %5462 = sbr.rel (%p5460) target = $region76
        $region75: #{aemtrnn_rollout.1} parent=47 // pred_region
          _
        $region76: #{aemtrnn_rollout.1} parent=47 // pred_fallthru
          _
      $region48: #{aemtrnn_rollout.1} parent=5 // pred_fallthru
        _
      %p5463 = scmp.le.s32.totalorder 2, %s18
      // Predicated region
      $region77: #{aemtrnn_rollout.1} parent=5 // pred_check
        %p5464 = pneg %p5463
      $region78: #{aemtrnn_rollout.1} parent=5 // pred_check_branch
        %5466 = sbr.rel (%p5464) target = $region80
      $region79: #{aemtrnn_rollout.1} parent=5 // pred_region
        %s5467 = ssub.s32 %s18, 2
        // Predicated region
        $region81: #{aemtrnn_rollout.1} parent=79 // pred_check
          %p5468 = pneg %p204
        $region82: #{aemtrnn_rollout.1} parent=79 // pred_check_branch
          %5470 = sbr.rel (%p5468) target = $region84
        $region83: #{aemtrnn_rollout.1} parent=79 // pred_region
          %p5471 = scmp.lt.s32.totalorder %s24, 7
          %s5472 = scalar_select %p5471, %s24, 7
          %s5473 = smul.addr %s5472, 6
          %s5474 = smul.addr %s5473, 8
          %s5475 = scalar_lea.vmem %s7, %s5474
        $region84: #{aemtrnn_rollout.1} parent=79 // pred_fallthru
          _
        // Predicated region
        $region85: #{aemtrnn_rollout.1} parent=79 // pred_check
          %p5476 = pneg %p230
        $region86: #{aemtrnn_rollout.1} parent=79 // pred_check_branch
          %5478 = sbr.rel (%p5476) target = $region88
        $region87: #{aemtrnn_rollout.1} parent=79 // pred_region
          %p5479 = scmp.lt.s32.totalorder %s24, 7
          %s5480 = scalar_select %p5479, %s24, 7
          %s5481 = smul.addr %s5480, 3
          %s5482 = smul.addr %s5481, 8
          %s5483 = scalar_lea.vmem %s8, %s5482
        $region88: #{aemtrnn_rollout.1} parent=79 // pred_fallthru
          _
      $region80: #{aemtrnn_rollout.1} parent=5 // pred_fallthru
        _
    $region6: #{aemtrnn_rollout.1} parent=1 // loop_footer
      %s22 = sadd.s32 1, %s18
    $region7: #{aemtrnn_rollout.1} parent=1 // loop_footer_branch
      %17 = sbr.rel target = $region3
    $region8: #{aemtrnn_rollout.1} parent=1 // loop_exit
      _
    %5484 = vsyncpa [#allocation5], 1
    %s5485 = scalar_lea.sflag [#allocation5], 1
    %5486 = vsyncpa %s5485, 1
    %5487 = vsyncpa [#allocation7], 1
    %5488 = vsyncpa [#allocation10], 1

</llo_original>
